<compile_context>
chip_gen: v6e
topology: v6e:2x2x1
jax: 0.10.0
libtpu: 0.0.40
codegen_flags: <defaults>
</compile_context>

<pallas_src>
import functools

import jax
import jax.numpy as jnp
import numpy as np
from jax.experimental import pallas as pl
from jax.experimental.pallas import tpu as pltpu


_COMPILER_PARAMS = pltpu.CompilerParams(
    dimension_semantics=("parallel", "arbitrary"),
    vmem_limit_bytes=48 * 1024 * 1024,
)


# ----------------------------------------------------------------------------
# In-kernel helpers (traced inside Pallas kernel bodies)
# ----------------------------------------------------------------------------

def _layer_norm(z, g, b, eps=1e-5):
    mean = jnp.mean(z, axis=-1, keepdims=True)
    zc = z - mean
    var = jnp.mean(zc * zc, axis=-1, keepdims=True)
    return zc * jax.lax.rsqrt(var + eps) * g + b


def _band_bias(sq, sk, half_window):
    """Additive sliding-window mask, built in-kernel (no (S,S) HBM bias)."""
    row = jax.lax.broadcasted_iota(jnp.int32, (sq, sk), 0)
    col = jax.lax.broadcasted_iota(jnp.int32, (sq, sk), 1)
    return jnp.where(jnp.abs(row - col) <= half_window, 0.0, -1e9).astype(jnp.float32)


def _heads_attention(q, k, v, *, num_heads, bias):
    """Scaled-dot-product attention over heads.

    q: (Sq, D) f32 (scale already folded in), k/v: (Sk, D) f32.
    Heads are split with static lane slices and concatenated back in registers
    (lane-dense output, no VMEM scratch).
    """
    _, d = q.shape
    dh = d // num_heads
    heads = []
    # TODO(synk): for num_heads >= 8 switch to lax.fori_loop to bound live ranges.
    for h in range(num_heads):
        qh = q[:, h * dh:(h + 1) * dh].astype(jnp.bfloat16)
        kh = k[:, h * dh:(h + 1) * dh].astype(jnp.bfloat16)
        vh = v[:, h * dh:(h + 1) * dh].astype(jnp.bfloat16)
        s = jax.lax.dot_general(qh, kh, (((1,), (1,)), ((), ())),
                                preferred_element_type=jnp.float32)
        if bias is not None:
            s = s + bias
        s = s - jnp.max(s, axis=-1, keepdims=True)
        p = jnp.exp(s)
        p = p * pl.reciprocal(jnp.sum(p, axis=-1, keepdims=True), approx=False)
        heads.append(jnp.dot(p.astype(jnp.bfloat16), vh,
                             preferred_element_type=jnp.float32))
    return jnp.concatenate(heads, axis=-1)                  # (Sq, D)


# ----------------------------------------------------------------------------
# Pallas kernels — one fused kernel per encoder STACK (grid = (batch, layer))
# ----------------------------------------------------------------------------

def _local_stack_kernel(x_ref, wqkv, bqkv, g, b, o_ref, *, num_heads, half_window):
    """o <- LN(o + LocalSelfAttn(o)), with o initialized from x at layer 0."""
    l = pl.program_id(1)

    @pl.when(l == 0)
    def _():
        o_ref[...] = x_ref[...]

    x = o_ref[0]                                              # (S, D), VMEM-resident
    d = x.shape[-1]
    qkv = jnp.dot(x.astype(jnp.bfloat16), wqkv[0],
                  preferred_element_type=jnp.float32) + bqkv[0]
    bias = _band_bias(x.shape[0], x.shape[0], half_window)
    # TODO(synk): LocalSelfAttention source not provided; identity out-projection
    # and symmetric |i-j| <= window//2 band are assumed.
    attn = _heads_attention(qkv[:, :d], qkv[:, d:2 * d], qkv[:, 2 * d:],
                            num_heads=num_heads, bias=bias)
    o_ref[0] = _layer_norm(x + attn, g[0], b[0]).astype(o_ref.dtype)


def _full_stack_kernel(x_ref, wqkv, bqkv, wo, bo, g, b, o_ref, *, num_heads):
    """o <- LN(o + MHA(o, o, o)), with o initialized from x at layer 0."""
    l = pl.program_id(1)

    @pl.when(l == 0)
    def _():
        o_ref[...] = x_ref[...]

    x = o_ref[0]                                              # (St, D)
    d = x.shape[-1]
    qkv = jnp.dot(x.astype(jnp.bfloat16), wqkv[0],
                  preferred_element_type=jnp.float32) + bqkv[0]
    heads = _heads_attention(qkv[:, :d], qkv[:, d:2 * d], qkv[:, 2 * d:],
                             num_heads=num_heads, bias=None)
    attn = jnp.dot(heads.astype(jnp.bfloat16), wo[0],
                   preferred_element_type=jnp.float32) + bo[0]
    o_ref[0] = _layer_norm(x + attn, g[0], b[0]).astype(o_ref.dtype)


def _topdown_stack_kernel(y_ref, top_ref,
                          lwqkv, lbqkv,
                          cwq, cbq, cwkv, cbkv, cwo, cbo,
                          g, b, w1, b1, w2, b2, fg, fb,
                          o_ref, *, num_heads, half_window):
    """Fused TopDownEncoderSubBlock stack:
       token_self = LocalAttn(o); cross = MHA(token_self, top, top);
       z = token_self + LN(cross); o <- LN(FFN(z))."""
    l = pl.program_id(1)

    @pl.when(l == 0)
    def _():
        o_ref[...] = y_ref[...]

    y = o_ref[0]                                              # (S, D)
    top = top_ref[0]                                          # (St, D)
    d = y.shape[-1]

    # --- local self-attention (identity out-projection) ---
    qkv = jnp.dot(y.astype(jnp.bfloat16), lwqkv[0],
                  preferred_element_type=jnp.float32) + lbqkv[0]
    bias = _band_bias(y.shape[0], y.shape[0], half_window)
    token_self = _heads_attention(qkv[:, :d], qkv[:, d:2 * d], qkv[:, 2 * d:],
                                  num_heads=num_heads, bias=bias)

    # --- cross attention: queries from token_self, keys/values from top tokens ---
    q = jnp.dot(token_self.astype(jnp.bfloat16), cwq[0],
                preferred_element_type=jnp.float32) + cbq[0]
    kv = jnp.dot(top.astype(jnp.bfloat16), cwkv[0],
                 preferred_element_type=jnp.float32) + cbkv[0]
    heads = _heads_attention(q, kv[:, :d], kv[:, d:],
                             num_heads=num_heads, bias=None)
    cross = jnp.dot(heads.astype(jnp.bfloat16), cwo[0],
                    preferred_element_type=jnp.float32) + cbo[0]

    # NOTE: reference is token_self + LN(cross), then LN(FFN(.)) with no FFN residual.
    z = token_self + _layer_norm(cross, g[0], b[0])

    h1 = jnp.dot(z.astype(jnp.bfloat16), w1[0],
                 preferred_element_type=jnp.float32) + b1[0]
    h1 = jnp.maximum(h1, 0.0)
    ff = jnp.dot(h1.astype(jnp.bfloat16), w2[0],
                 preferred_element_type=jnp.float32) + b2[0]
    o_ref[0] = _layer_norm(ff, fg[0], fb[0]).astype(o_ref.dtype)


# ----------------------------------------------------------------------------
# pallas_call wrappers
# ----------------------------------------------------------------------------

def _act_spec(s, d):
    # activation block: per-batch, constant across the layer axis
    return pl.BlockSpec((1, s, d), lambda batch, layer: (batch, 0, 0))


def _layer_spec(shape):
    # per-layer stacked weight/bias: index along the leading layer axis
    nd = len(shape)
    return pl.BlockSpec((1,) + tuple(shape[1:]),
                        lambda batch, layer: (layer,) + (0,) * (nd - 1))


def local_attn_stack(x, p, *, num_heads, half_window):
    B, S, D = x.shape
    L = p["wqkv"].shape[0]
    kern = functools.partial(_local_stack_kernel, num_heads=num_heads,
                             half_window=half_window)
    return pl.pallas_call(
        kern,
        out_shape=jax.ShapeDtypeStruct((B, S, D), jnp.float32),
        grid=(B, L),
        in_specs=[_act_spec(S, D),
                  _layer_spec(p["wqkv"].shape), _layer_spec(p["bqkv"].shape),
                  _layer_spec(p["ln_g"].shape), _layer_spec(p["ln_b"].shape)],
        out_specs=_act_spec(S, D),
        compiler_params=_COMPILER_PARAMS,
    )(x, p["wqkv"], p["bqkv"], p["ln_g"], p["ln_b"])


def full_attn_stack(x, p, *, num_heads):
    B, S, D = x.shape
    L = p["wqkv"].shape[0]
    kern = functools.partial(_full_stack_kernel, num_heads=num_heads)
    return pl.pallas_call(
        kern,
        out_shape=jax.ShapeDtypeStruct((B, S, D), jnp.float32),
        grid=(B, L),
        in_specs=[_act_spec(S, D),
                  _layer_spec(p["wqkv"].shape), _layer_spec(p["bqkv"].shape),
                  _layer_spec(p["wo"].shape), _layer_spec(p["bo"].shape),
                  _layer_spec(p["ln_g"].shape), _layer_spec(p["ln_b"].shape)],
        out_specs=_act_spec(S, D),
        compiler_params=_COMPILER_PARAMS,
    )(x, p["wqkv"], p["bqkv"], p["wo"], p["bo"], p["ln_g"], p["ln_b"])


def topdown_stack(y, top, p, *, num_heads, half_window):
    B, S, D = y.shape
    St = top.shape[1]
    L = p["lwqkv"].shape[0]
    kern = functools.partial(_topdown_stack_kernel, num_heads=num_heads,
                             half_window=half_window)
    names = ("lwqkv", "lbqkv", "cwq", "cbq", "cwkv", "cbkv", "cwo", "cbo",
             "ln_g", "ln_b", "w1", "b1", "w2", "b2", "fln_g", "fln_b")
    return pl.pallas_call(
        kern,
        out_shape=jax.ShapeDtypeStruct((B, S, D), jnp.float32),
        grid=(B, L),
        in_specs=[_act_spec(S, D), _act_spec(St, D)]
                 + [_layer_spec(p[n].shape) for n in names],
        out_specs=_act_spec(S, D),
        compiler_params=_COMPILER_PARAMS,
    )(y, top, *[p[n] for n in names])


# ----------------------------------------------------------------------------
# Parameter init (deterministic synthetic params; fused-QKV, layer-stacked, bf16)
# ----------------------------------------------------------------------------

def _init_params(key, D, F, num_heads, n_local, n_full, n_topdown):
    dh = D // num_heads
    scale = 1.0 / float(np.sqrt(dh))
    keys = iter(jax.random.split(key, 1024))

    def w(shape, s=0.05):
        return jax.random.normal(next(keys), shape, jnp.float32) * s

    def qkv_fused():
        wq, wk, wv = w((D, D)), w((D, D)), w((D, D))
        bq, bk, bv = w((1, D)), w((1, D)), w((1, D))
        # softmax scale folded into the query columns
        wqkv = jnp.concatenate([wq * scale, wk, wv], axis=1).astype(jnp.bfloat16)
        bqkv = jnp.concatenate([bq * scale, bk, bv], axis=1)
        return wqkv, bqkv

    def ln_pair():
        return (1.0 + 0.01 * jax.random.normal(next(keys), (1, D), jnp.float32),
                0.01 * jax.random.normal(next(keys), (1, D), jnp.float32))

    # ---- local self-attention stack ----
    acc = {k: [] for k in ("wqkv", "bqkv", "ln_g", "ln_b")}
    for _ in range(n_local):
        a, bvec = qkv_fused()
        g_, b_ = ln_pair()
        acc["wqkv"].append(a); acc["bqkv"].append(bvec)
        acc["ln_g"].append(g_); acc["ln_b"].append(b_)
    local = {k: jnp.stack(v) for k, v in acc.items()}

    # ---- full self-attention stack ----
    acc = {k: [] for k in ("wqkv", "bqkv", "wo", "bo", "ln_g", "ln_b")}
    for _ in range(n_full):
        a, bvec = qkv_fused()
        g_, b_ = ln_pair()
        acc["wqkv"].append(a); acc["bqkv"].append(bvec)
        acc["wo"].append(w((D, D)).astype(jnp.bfloat16)); acc["bo"].append(w((1, D)))
        acc["ln_g"].append(g_); acc["ln_b"].append(b_)
    full = {k: jnp.stack(v) for k, v in acc.items()}

    # ---- top-down sub-block stack ----
    names = ("lwqkv", "lbqkv", "cwq", "cbq", "cwkv", "cbkv", "cwo", "cbo",
             "ln_g", "ln_b", "w1", "b1", "w2", "b2", "fln_g", "fln_b")
    acc = {k: [] for k in names}
    for _ in range(n_topdown):
        a, bvec = qkv_fused()
        acc["lwqkv"].append(a); acc["lbqkv"].append(bvec)
        acc["cwq"].append((w((D, D)) * scale).astype(jnp.bfloat16))
        acc["cbq"].append(w((1, D)) * scale)
        acc["cwkv"].append(jnp.concatenate([w((D, D)), w((D, D))], 1).astype(jnp.bfloat16))
        acc["cbkv"].append(jnp.concatenate([w((1, D)), w((1, D))], 1))
        acc["cwo"].append(w((D, D)).astype(jnp.bfloat16)); acc["cbo"].append(w((1, D)))
        g_, b_ = ln_pair(); acc["ln_g"].append(g_); acc["ln_b"].append(b_)
        acc["w1"].append(w((D, F)).astype(jnp.bfloat16)); acc["b1"].append(w((1, F)))
        acc["w2"].append(w((F, D)).astype(jnp.bfloat16)); acc["b2"].append(w((1, D)))
        g2, b2 = ln_pair(); acc["fln_g"].append(g2); acc["fln_b"].append(b2)
    topdown = {k: jnp.stack(v) for k, v in acc.items()}

    return dict(local=local, full=full, topdown=topdown)


def _make_pool_matrix(S, kernel, stride):
    S_out = (S - kernel) // stride + 1
    P = np.zeros((S_out, S), np.float32)
    for i in range(S_out):
        P[i, i * stride:i * stride + kernel] = 1.0 / kernel
    return jnp.asarray(P)


# ----------------------------------------------------------------------------
# Full forward pass (inference: dropout is identity; src_key_padding_mask=None)
# ----------------------------------------------------------------------------

def bottom_up_top_down_encoder(val_sbd, params, *, num_heads, window,
                               pool_kernel, pool_stride):
    """val_sbd: (S, B, D) seq-first, like the PyTorch module."""
    x = jnp.transpose(val_sbd, (1, 0, 2)).astype(jnp.float32)     # (B, S, D)
    half_window = max(window // 2, 1)

    # ---- BottomUpEncoderBlock: local self-attention stack (one pallas_call) ----
    bottom = local_attn_stack(x, params["local"], num_heads=num_heads,
                              half_window=half_window)

    # ---- AvgPool1d over sequence to build top-level tokens (plain XLA einsum) --
    pool_mat = _make_pool_matrix(x.shape[1], pool_kernel, pool_stride)
    top = jnp.einsum("os,bsd->bod", pool_mat, bottom)             # (B, S_top, D)
    # TODO(synk): key_padding_mask / mask max-pool path not implemented; the
    # reference is exercised with src_key_padding_mask=None (top mask is None).

    # ---- full self-attention on top-level tokens (one pallas_call) -------------
    top = full_attn_stack(top, params["full"], num_heads=num_heads)

    # ---- TopDownEncoderBlock (one pallas_call over all sub-blocks) -------------
    y = topdown_stack(bottom, top, params["topdown"], num_heads=num_heads,
                      half_window=half_window)

    return jnp.transpose(y, (1, 0, 2))                            # (S, B, D)


# ----------------------------------------------------------------------------
# Demo
# ----------------------------------------------------------------------------

if __name__ == "__main__":
    # small config consistent with the module's constructor
    S, B, D = 16, 2, 32
    NUM_HEADS = 4
    WINDOW = 8
    FFN_DIM = 64
    N_LOCAL, N_FULL, N_TOPDOWN = 2, 1, 2
    POOL_K, POOL_S = 8, 4

    key = jax.random.PRNGKey(0)
    k_param, k_input = jax.random.split(key)
    params = _init_params(k_param, D, FFN_DIM, NUM_HEADS,
                          N_LOCAL, N_FULL, N_TOPDOWN)
    val = jax.random.normal(k_input, (S, B, D), jnp.float32)      # seq-first

    fwd = jax.jit(functools.partial(
        bottom_up_top_down_encoder,
        num_heads=NUM_HEADS, window=WINDOW,
        pool_kernel=POOL_K, pool_stride=POOL_S))

    out = fwd(val, params)
    jax.block_until_ready(out)
    assert out.shape == (S, B, D)
    assert bool(jnp.all(jnp.isfinite(out)))
    print("KERNEL_OK")
</pallas_src>

<mosaic_0001>
module attributes {stable_mosaic.version = 11 : i64} {
  func.func @_full_stack_kernel(%arg0: i32, %arg1: i32, %arg2: memref<1x3x32xf32, #tpu.memory_space<vmem>>, %arg3: memref<1x32x96xbf16, #tpu.memory_space<vmem>>, %arg4: memref<1x1x96xf32, #tpu.memory_space<vmem>>, %arg5: memref<1x32x32xbf16, #tpu.memory_space<vmem>>, %arg6: memref<1x1x32xf32, #tpu.memory_space<vmem>>, %arg7: memref<1x1x32xf32, #tpu.memory_space<vmem>>, %arg8: memref<1x1x32xf32, #tpu.memory_space<vmem>>, %arg9: memref<1x3x32xf32, #tpu.memory_space<vmem>>) attributes {dimension_semantics = [#tpu.dimension_semantics<parallel>, #tpu.dimension_semantics<arbitrary>], iteration_bounds = array<i64: 2, 1>, scalar_prefetch = 0 : i64, scratch_operands = 0 : i64, tpu.core_type = #tpu.core_type<tc>, window_params = [{transform_indices = @transform_0, window_bounds = array<i64: 1, 3, 32>}, {transform_indices = @transform_1, window_bounds = array<i64: 1, 32, 96>}, {transform_indices = @transform_2, window_bounds = array<i64: 1, 1, 96>}, {transform_indices = @transform_3, window_bounds = array<i64: 1, 32, 32>}, {transform_indices = @transform_4, window_bounds = array<i64: 1, 1, 32>}, {transform_indices = @transform_5, window_bounds = array<i64: 1, 1, 32>}, {transform_indices = @transform_6, window_bounds = array<i64: 1, 1, 32>}, {transform_indices = @transform_7, window_bounds = array<i64: 1, 3, 32>}]} {
    %c0_i32 = arith.constant 0 : i32
    %0 = arith.cmpi eq, %arg1, %c0_i32 : i32
    %1 = arith.extui %0 : i1 to i32
    %c0_i32_0 = arith.constant 0 : i32
    %2 = arith.cmpi ne, %1, %c0_i32_0 : i32
    scf.if %2 {
      %c0_46 = arith.constant 0 : index
      %c0_47 = arith.constant 0 : index
      %c0_48 = arith.constant 0 : index
      %129 = vector.load %arg2[%c0_46, %c0_47, %c0_48] : memref<1x3x32xf32, #tpu.memory_space<vmem>>, vector<1x3x32xf32>
      %c0_49 = arith.constant 0 : index
      %c0_50 = arith.constant 0 : index
      %c0_51 = arith.constant 0 : index
      %130 = vector.load %arg9[%c0_49, %c0_50, %c0_51] : memref<1x3x32xf32, #tpu.memory_space<vmem>>, vector<1x3x32xf32>
      tpu.vector_store %arg9[%c0_49, %c0_50, %c0_51], %129 {strides = array<i32>} : memref<1x3x32xf32, #tpu.memory_space<vmem>>, vector<1x3x32xf32>,
    } else {
    }
    %c0 = arith.constant 0 : index
    %c0_1 = arith.constant 0 : index
    %c0_2 = arith.constant 0 : index
    %3 = vector.load %arg9[%c0, %c0_1, %c0_2] : memref<1x3x32xf32, #tpu.memory_space<vmem>>, vector<1x3x32xf32>
    %4 = vector.shape_cast %3 : vector<1x3x32xf32> to vector<3x32xf32>
    %5 = arith.truncf %4 : vector<3x32xf32> to vector<3x32xbf16>
    %c0_3 = arith.constant 0 : index
    %c0_4 = arith.constant 0 : index
    %c0_5 = arith.constant 0 : index
    %6 = vector.load %arg3[%c0_3, %c0_4, %c0_5] : memref<1x32x96xbf16, #tpu.memory_space<vmem>>, vector<1x32x96xbf16>
    %7 = vector.shape_cast %6 : vector<1x32x96xbf16> to vector<32x96xbf16>
    %cst = arith.constant dense<0.000000e+00> : vector<3x96xf32>
    %8 = tpu.matmul %5, %7, %cst {dimension_numbers = #tpu.dot_dimension_numbers<[1], [0], [0], [1], [0, 0, 1, 1], [], []>} : vector<3x32xbf16>, vector<32x96xbf16>, vector<3x96xf32> -> vector<3x96xf32>
    %c0_6 = arith.constant 0 : index
    %c0_7 = arith.constant 0 : index
    %c0_8 = arith.constant 0 : index
    %9 = vector.load %arg4[%c0_6, %c0_7, %c0_8] : memref<1x1x96xf32, #tpu.memory_space<vmem>>, vector<1x1x96xf32>
    %10 = vector.shape_cast %9 : vector<1x1x96xf32> to vector<1x96xf32>
    %11 = vector.broadcast %10 : vector<1x96xf32> to vector<3x96xf32>
    %12 = arith.addf %8, %11 : vector<3x96xf32>
    %13 = vector.extract_strided_slice %12 {offsets = [0, 0], sizes = [3, 32], strides = [1, 1]} : vector<3x96xf32> to vector<3x32xf32>
    %14 = vector.extract_strided_slice %12 {offsets = [0, 32], sizes = [3, 32], strides = [1, 1]} : vector<3x96xf32> to vector<3x32xf32>
    %15 = vector.extract_strided_slice %12 {offsets = [0, 64], sizes = [3, 32], strides = [1, 1]} : vector<3x96xf32> to vector<3x32xf32>
    %16 = vector.extract_strided_slice %13 {offsets = [0, 0], sizes = [3, 8], strides = [1, 1]} : vector<3x32xf32> to vector<3x8xf32>
    %17 = arith.truncf %16 : vector<3x8xf32> to vector<3x8xbf16>
    %18 = vector.extract_strided_slice %14 {offsets = [0, 0], sizes = [3, 8], strides = [1, 1]} : vector<3x32xf32> to vector<3x8xf32>
    %19 = arith.truncf %18 : vector<3x8xf32> to vector<3x8xbf16>
    %20 = vector.extract_strided_slice %15 {offsets = [0, 0], sizes = [3, 8], strides = [1, 1]} : vector<3x32xf32> to vector<3x8xf32>
    %21 = arith.truncf %20 : vector<3x8xf32> to vector<3x8xbf16>
    %cst_9 = arith.constant dense<0.000000e+00> : vector<3x3xf32>
    %22 = tpu.matmul %17, %19, %cst_9 {dimension_numbers = #tpu.dot_dimension_numbers<[1], [1], [0], [0], [0, 0, 1, 0], [], []>} : vector<3x8xbf16>, vector<3x8xbf16>, vector<3x3xf32> -> vector<3x3xf32>
    %cst_10 = arith.constant dense<0xFF800000> : vector<3xf32>
    %23 = vector.multi_reduction <maximumf>, %22, %cst_10 [1] : vector<3x3xf32> to vector<3xf32>
    %24 = vector.shape_cast %23 : vector<3xf32> to vector<3x1xf32>
    %25 = vector.broadcast %24 : vector<3x1xf32> to vector<3x3xf32>
    %26 = arith.subf %22, %25 : vector<3x3xf32>
    %27 = math.exp %26 : vector<3x3xf32>
    %cst_11 = arith.constant dense<0.000000e+00> : vector<3xf32>
    %28 = vector.multi_reduction <add>, %27, %cst_11 [1] : vector<3x3xf32> to vector<3xf32>
    %29 = vector.shape_cast %28 : vector<3xf32> to vector<3x1xf32>
    %30 = tpu.reciprocal %29 : vector<3x1xf32> -> vector<3x1xf32>
    %31 = vector.broadcast %30 : vector<3x1xf32> to vector<3x3xf32>
    %32 = arith.mulf %27, %31 : vector<3x3xf32>
    %33 = arith.truncf %32 : vector<3x3xf32> to vector<3x3xbf16>
    %cst_12 = arith.constant dense<0.000000e+00> : vector<3x8xf32>
    %34 = tpu.matmul %33, %21, %cst_12 {dimension_numbers = #tpu.dot_dimension_numbers<[1], [0], [0], [1], [0, 0, 1, 1], [], []>} : vector<3x3xbf16>, vector<3x8xbf16>, vector<3x8xf32> -> vector<3x8xf32>
    %35 = vector.extract_strided_slice %13 {offsets = [0, 8], sizes = [3, 8], strides = [1, 1]} : vector<3x32xf32> to vector<3x8xf32>
    %36 = arith.truncf %35 : vector<3x8xf32> to vector<3x8xbf16>
    %37 = vector.extract_strided_slice %14 {offsets = [0, 8], sizes = [3, 8], strides = [1, 1]} : vector<3x32xf32> to vector<3x8xf32>
    %38 = arith.truncf %37 : vector<3x8xf32> to vector<3x8xbf16>
    %39 = vector.extract_strided_slice %15 {offsets = [0, 8], sizes = [3, 8], strides = [1, 1]} : vector<3x32xf32> to vector<3x8xf32>
    %40 = arith.truncf %39 : vector<3x8xf32> to vector<3x8xbf16>
    %cst_13 = arith.constant dense<0.000000e+00> : vector<3x3xf32>
    %41 = tpu.matmul %36, %38, %cst_13 {dimension_numbers = #tpu.dot_dimension_numbers<[1], [1], [0], [0], [0, 0, 1, 0], [], []>} : vector<3x8xbf16>, vector<3x8xbf16>, vector<3x3xf32> -> vector<3x3xf32>
    %cst_14 = arith.constant dense<0xFF800000> : vector<3xf32>
    %42 = vector.multi_reduction <maximumf>, %41, %cst_14 [1] : vector<3x3xf32> to vector<3xf32>
    %43 = vector.shape_cast %42 : vector<3xf32> to vector<3x1xf32>
    %44 = vector.broadcast %43 : vector<3x1xf32> to vector<3x3xf32>
    %45 = arith.subf %41, %44 : vector<3x3xf32>
    %46 = math.exp %45 : vector<3x3xf32>
    %cst_15 = arith.constant dense<0.000000e+00> : vector<3xf32>
    %47 = vector.multi_reduction <add>, %46, %cst_15 [1] : vector<3x3xf32> to vector<3xf32>
    %48 = vector.shape_cast %47 : vector<3xf32> to vector<3x1xf32>
    %49 = tpu.reciprocal %48 : vector<3x1xf32> -> vector<3x1xf32>
    %50 = vector.broadcast %49 : vector<3x1xf32> to vector<3x3xf32>
    %51 = arith.mulf %46, %50 : vector<3x3xf32>
    %52 = arith.truncf %51 : vector<3x3xf32> to vector<3x3xbf16>
    %cst_16 = arith.constant dense<0.000000e+00> : vector<3x8xf32>
    %53 = tpu.matmul %52, %40, %cst_16 {dimension_numbers = #tpu.dot_dimension_numbers<[1], [0], [0], [1], [0, 0, 1, 1], [], []>} : vector<3x3xbf16>, vector<3x8xbf16>, vector<3x8xf32> -> vector<3x8xf32>
    %54 = vector.extract_strided_slice %13 {offsets = [0, 16], sizes = [3, 8], strides = [1, 1]} : vector<3x32xf32> to vector<3x8xf32>
    %55 = arith.truncf %54 : vector<3x8xf32> to vector<3x8xbf16>
    %56 = vector.extract_strided_slice %14 {offsets = [0, 16], sizes = [3, 8], strides = [1, 1]} : vector<3x32xf32> to vector<3x8xf32>
    %57 = arith.truncf %56 : vector<3x8xf32> to vector<3x8xbf16>
    %58 = vector.extract_strided_slice %15 {offsets = [0, 16], sizes = [3, 8], strides = [1, 1]} : vector<3x32xf32> to vector<3x8xf32>
    %59 = arith.truncf %58 : vector<3x8xf32> to vector<3x8xbf16>
    %cst_17 = arith.constant dense<0.000000e+00> : vector<3x3xf32>
    %60 = tpu.matmul %55, %57, %cst_17 {dimension_numbers = #tpu.dot_dimension_numbers<[1], [1], [0], [0], [0, 0, 1, 0], [], []>} : vector<3x8xbf16>, vector<3x8xbf16>, vector<3x3xf32> -> vector<3x3xf32>
    %cst_18 = arith.constant dense<0xFF800000> : vector<3xf32>
    %61 = vector.multi_reduction <maximumf>, %60, %cst_18 [1] : vector<3x3xf32> to vector<3xf32>
    %62 = vector.shape_cast %61 : vector<3xf32> to vector<3x1xf32>
    %63 = vector.broadcast %62 : vector<3x1xf32> to vector<3x3xf32>
    %64 = arith.subf %60, %63 : vector<3x3xf32>
    %65 = math.exp %64 : vector<3x3xf32>
    %cst_19 = arith.constant dense<0.000000e+00> : vector<3xf32>
    %66 = vector.multi_reduction <add>, %65, %cst_19 [1] : vector<3x3xf32> to vector<3xf32>
    %67 = vector.shape_cast %66 : vector<3xf32> to vector<3x1xf32>
    %68 = tpu.reciprocal %67 : vector<3x1xf32> -> vector<3x1xf32>
    %69 = vector.broadcast %68 : vector<3x1xf32> to vector<3x3xf32>
    %70 = arith.mulf %65, %69 : vector<3x3xf32>
    %71 = arith.truncf %70 : vector<3x3xf32> to vector<3x3xbf16>
    %cst_20 = arith.constant dense<0.000000e+00> : vector<3x8xf32>
    %72 = tpu.matmul %71, %59, %cst_20 {dimension_numbers = #tpu.dot_dimension_numbers<[1], [0], [0], [1], [0, 0, 1, 1], [], []>} : vector<3x3xbf16>, vector<3x8xbf16>, vector<3x8xf32> -> vector<3x8xf32>
    %73 = vector.extract_strided_slice %13 {offsets = [0, 24], sizes = [3, 8], strides = [1, 1]} : vector<3x32xf32> to vector<3x8xf32>
    %74 = arith.truncf %73 : vector<3x8xf32> to vector<3x8xbf16>
    %75 = vector.extract_strided_slice %14 {offsets = [0, 24], sizes = [3, 8], strides = [1, 1]} : vector<3x32xf32> to vector<3x8xf32>
    %76 = arith.truncf %75 : vector<3x8xf32> to vector<3x8xbf16>
    %77 = vector.extract_strided_slice %15 {offsets = [0, 24], sizes = [3, 8], strides = [1, 1]} : vector<3x32xf32> to vector<3x8xf32>
    %78 = arith.truncf %77 : vector<3x8xf32> to vector<3x8xbf16>
    %cst_21 = arith.constant dense<0.000000e+00> : vector<3x3xf32>
    %79 = tpu.matmul %74, %76, %cst_21 {dimension_numbers = #tpu.dot_dimension_numbers<[1], [1], [0], [0], [0, 0, 1, 0], [], []>} : vector<3x8xbf16>, vector<3x8xbf16>, vector<3x3xf32> -> vector<3x3xf32>
    %cst_22 = arith.constant dense<0xFF800000> : vector<3xf32>
    %80 = vector.multi_reduction <maximumf>, %79, %cst_22 [1] : vector<3x3xf32> to vector<3xf32>
    %81 = vector.shape_cast %80 : vector<3xf32> to vector<3x1xf32>
    %82 = vector.broadcast %81 : vector<3x1xf32> to vector<3x3xf32>
    %83 = arith.subf %79, %82 : vector<3x3xf32>
    %84 = math.exp %83 : vector<3x3xf32>
    %cst_23 = arith.constant dense<0.000000e+00> : vector<3xf32>
    %85 = vector.multi_reduction <add>, %84, %cst_23 [1] : vector<3x3xf32> to vector<3xf32>
    %86 = vector.shape_cast %85 : vector<3xf32> to vector<3x1xf32>
    %87 = tpu.reciprocal %86 : vector<3x1xf32> -> vector<3x1xf32>
    %88 = vector.broadcast %87 : vector<3x1xf32> to vector<3x3xf32>
    %89 = arith.mulf %84, %88 : vector<3x3xf32>
    %90 = arith.truncf %89 : vector<3x3xf32> to vector<3x3xbf16>
    %cst_24 = arith.constant dense<0.000000e+00> : vector<3x8xf32>
    %91 = tpu.matmul %90, %78, %cst_24 {dimension_numbers = #tpu.dot_dimension_numbers<[1], [0], [0], [1], [0, 0, 1, 1], [], []>} : vector<3x3xbf16>, vector<3x8xbf16>, vector<3x8xf32> -> vector<3x8xf32>
    %92 = tpu.concatenate %34, %53, %72, %91 in 1 : vector<3x8xf32>, vector<3x8xf32>, vector<3x8xf32>, vector<3x8xf32> -> vector<3x32xf32>
    %93 = arith.truncf %92 : vector<3x32xf32> to vector<3x32xbf16>
    %c0_25 = arith.constant 0 : index
    %c0_26 = arith.constant 0 : index
    %c0_27 = arith.constant 0 : index
    %94 = vector.load %arg5[%c0_25, %c0_26, %c0_27] : memref<1x32x32xbf16, #tpu.memory_space<vmem>>, vector<1x32x32xbf16>
    %95 = vector.shape_cast %94 : vector<1x32x32xbf16> to vector<32x32xbf16>
    %cst_28 = arith.constant dense<0.000000e+00> : vector<3x32xf32>
    %96 = tpu.matmul %93, %95, %cst_28 {dimension_numbers = #tpu.dot_dimension_numbers<[1], [0], [0], [1], [0, 0, 1, 1], [], []>} : vector<3x32xbf16>, vector<32x32xbf16>, vector<3x32xf32> -> vector<3x32xf32>
    %c0_29 = arith.constant 0 : index
    %c0_30 = arith.constant 0 : index
    %c0_31 = arith.constant 0 : index
    %97 = vector.load %arg6[%c0_29, %c0_30, %c0_31] : memref<1x1x32xf32, #tpu.memory_space<vmem>>, vector<1x1x32xf32>
    %98 = vector.shape_cast %97 : vector<1x1x32xf32> to vector<1x32xf32>
    %99 = vector.broadcast %98 : vector<1x32xf32> to vector<3x32xf32>
    %100 = arith.addf %96, %99 : vector<3x32xf32>
    %101 = arith.addf %4, %100 : vector<3x32xf32>
    %c0_32 = arith.constant 0 : index
    %c0_33 = arith.constant 0 : index
    %c0_34 = arith.constant 0 : index
    %102 = vector.load %arg7[%c0_32, %c0_33, %c0_34] : memref<1x1x32xf32, #tpu.memory_space<vmem>>, vector<1x1x32xf32>
    %103 = vector.shape_cast %102 : vector<1x1x32xf32> to vector<1x32xf32>
    %c0_35 = arith.constant 0 : index
    %c0_36 = arith.constant 0 : index
    %c0_37 = arith.constant 0 : index
    %104 = vector.load %arg8[%c0_35, %c0_36, %c0_37] : memref<1x1x32xf32, #tpu.memory_space<vmem>>, vector<1x1x32xf32>
    %105 = vector.shape_cast %104 : vector<1x1x32xf32> to vector<1x32xf32>
    %cst_38 = arith.constant dense<0.000000e+00> : vector<3xf32>
    %106 = vector.multi_reduction <add>, %101, %cst_38 [1] : vector<3x32xf32> to vector<3xf32>
    %107 = vector.shape_cast %106 : vector<3xf32> to vector<3x1xf32>
    %cst_39 = arith.constant 3.200000e+01 : f32
    %108 = vector.broadcast %cst_39 : f32 to vector<3x1xf32>
    %109 = arith.divf %107, %108 : vector<3x1xf32>
    %110 = vector.broadcast %109 : vector<3x1xf32> to vector<3x32xf32>
    %111 = arith.subf %101, %110 : vector<3x32xf32>
    %112 = arith.mulf %111, %111 : vector<3x32xf32>
    %cst_40 = arith.constant dense<0.000000e+00> : vector<3xf32>
    %113 = vector.multi_reduction <add>, %112, %cst_40 [1] : vector<3x32xf32> to vector<3xf32>
    %114 = vector.shape_cast %113 : vector<3xf32> to vector<3x1xf32>
    %cst_41 = arith.constant 3.200000e+01 : f32
    %115 = vector.broadcast %cst_41 : f32 to vector<3x1xf32>
    %116 = arith.divf %114, %115 : vector<3x1xf32>
    %cst_42 = arith.constant 9.99999974E-6 : f32
    %117 = vector.broadcast %cst_42 : f32 to vector<3x1xf32>
    %118 = arith.addf %116, %117 : vector<3x1xf32>
    %119 = math.rsqrt %118 : vector<3x1xf32>
    %120 = vector.broadcast %119 : vector<3x1xf32> to vector<3x32xf32>
    %121 = arith.mulf %111, %120 : vector<3x32xf32>
    %122 = vector.broadcast %103 : vector<1x32xf32> to vector<3x32xf32>
    %123 = arith.mulf %121, %122 : vector<3x32xf32>
    %124 = vector.broadcast %105 : vector<1x32xf32> to vector<3x32xf32>
    %125 = arith.addf %123, %124 : vector<3x32xf32>
    %c0_43 = arith.constant 0 : index
    %c0_44 = arith.constant 0 : index
    %c0_45 = arith.constant 0 : index
    %126 = vector.load %arg9[%c0_43, %c0_44, %c0_45] : memref<1x3x32xf32, #tpu.memory_space<vmem>>, vector<1x3x32xf32>
    %127 = vector.shape_cast %126 : vector<1x3x32xf32> to vector<3x32xf32>
    %128 = vector.shape_cast %125 : vector<3x32xf32> to vector<1x3x32xf32>
    tpu.vector_store %arg9[%c0_43, %c0_44, %c0_45], %128 {strides = array<i32>} : memref<1x3x32xf32, #tpu.memory_space<vmem>>, vector<1x3x32xf32>,
    return
  }
  func.func @transform_0(%arg0: i32, %arg1: i32) -> (i32, i32, i32) {
    %c0_i32 = arith.constant 0 : i32
    %c0_i32_0 = arith.constant 0 : i32
    %c0_i32_1 = arith.constant 0 : i32
    return %arg0, %c0_i32, %c0_i32_0 : i32, i32, i32
  }
  func.func @transform_1(%arg0: i32, %arg1: i32) -> (i32, i32, i32) {
    %c0_i32 = arith.constant 0 : i32
    %c0_i32_0 = arith.constant 0 : i32
    %c0_i32_1 = arith.constant 0 : i32
    return %arg1, %c0_i32, %c0_i32_0 : i32, i32, i32
  }
  func.func @transform_2(%arg0: i32, %arg1: i32) -> (i32, i32, i32) {
    %c0_i32 = arith.constant 0 : i32
    %c0_i32_0 = arith.constant 0 : i32
    %c0_i32_1 = arith.constant 0 : i32
    return %arg1, %c0_i32, %c0_i32_0 : i32, i32, i32
  }
  func.func @transform_3(%arg0: i32, %arg1: i32) -> (i32, i32, i32) {
    %c0_i32 = arith.constant 0 : i32
    %c0_i32_0 = arith.constant 0 : i32
    %c0_i32_1 = arith.constant 0 : i32
    return %arg1, %c0_i32, %c0_i32_0 : i32, i32, i32
  }
  func.func @transform_4(%arg0: i32, %arg1: i32) -> (i32, i32, i32) {
    %c0_i32 = arith.constant 0 : i32
    %c0_i32_0 = arith.constant 0 : i32
    %c0_i32_1 = arith.constant 0 : i32
    return %arg1, %c0_i32, %c0_i32_0 : i32, i32, i32
  }
  func.func @transform_5(%arg0: i32, %arg1: i32) -> (i32, i32, i32) {
    %c0_i32 = arith.constant 0 : i32
    %c0_i32_0 = arith.constant 0 : i32
    %c0_i32_1 = arith.constant 0 : i32
    return %arg1, %c0_i32, %c0_i32_0 : i32, i32, i32
  }
  func.func @transform_6(%arg0: i32, %arg1: i32) -> (i32, i32, i32) {
    %c0_i32 = arith.constant 0 : i32
    %c0_i32_0 = arith.constant 0 : i32
    %c0_i32_1 = arith.constant 0 : i32
    return %arg1, %c0_i32, %c0_i32_0 : i32, i32, i32
  }
  func.func @transform_7(%arg0: i32, %arg1: i32) -> (i32, i32, i32) {
    %c0_i32 = arith.constant 0 : i32
    %c0_i32_0 = arith.constant 0 : i32
    %c0_i32_1 = arith.constant 0 : i32
    return %arg0, %c0_i32, %c0_i32_0 : i32, i32, i32
  }
}

module attributes {stable_mosaic.version = 11 : i64} {
  func.func @_local_stack_kernel(%arg0: i32, %arg1: i32, %arg2: memref<1x16x32xf32, #tpu.memory_space<vmem>>, %arg3: memref<1x32x96xbf16, #tpu.memory_space<vmem>>, %arg4: memref<1x1x96xf32, #tpu.memory_space<vmem>>, %arg5: memref<1x1x32xf32, #tpu.memory_space<vmem>>, %arg6: memref<1x1x32xf32, #tpu.memory_space<vmem>>, %arg7: memref<1x16x32xf32, #tpu.memory_space<vmem>>) attributes {dimension_semantics = [#tpu.dimension_semantics<parallel>, #tpu.dimension_semantics<arbitrary>], iteration_bounds = array<i64: 2, 2>, scalar_prefetch = 0 : i64, scratch_operands = 0 : i64, tpu.core_type = #tpu.core_type<tc>, window_params = [{transform_indices = @transform_0, window_bounds = array<i64: 1, 16, 32>}, {transform_indices = @transform_1, window_bounds = array<i64: 1, 32, 96>}, {transform_indices = @transform_2, window_bounds = array<i64: 1, 1, 96>}, {transform_indices = @transform_3, window_bounds = array<i64: 1, 1, 32>}, {transform_indices = @transform_4, window_bounds = array<i64: 1, 1, 32>}, {transform_indices = @transform_5, window_bounds = array<i64: 1, 16, 32>}]} {
    %c0_i32 = arith.constant 0 : i32
    %0 = arith.cmpi eq, %arg1, %c0_i32 : i32
    %1 = arith.extui %0 : i1 to i32
    %c0_i32_0 = arith.constant 0 : i32
    %2 = arith.cmpi ne, %1, %c0_i32_0 : i32
    scf.if %2 {
      %c0_41 = arith.constant 0 : index
      %c0_42 = arith.constant 0 : index
      %c0_43 = arith.constant 0 : index
      %134 = vector.load %arg2[%c0_41, %c0_42, %c0_43] : memref<1x16x32xf32, #tpu.memory_space<vmem>>, vector<1x16x32xf32>
      %c0_44 = arith.constant 0 : index
      %c0_45 = arith.constant 0 : index
      %c0_46 = arith.constant 0 : index
      %135 = vector.load %arg7[%c0_44, %c0_45, %c0_46] : memref<1x16x32xf32, #tpu.memory_space<vmem>>, vector<1x16x32xf32>
      tpu.vector_store %arg7[%c0_44, %c0_45, %c0_46], %134 {strides = array<i32>} : memref<1x16x32xf32, #tpu.memory_space<vmem>>, vector<1x16x32xf32>,
    } else {
    }
    %c0 = arith.constant 0 : index
    %c0_1 = arith.constant 0 : index
    %c0_2 = arith.constant 0 : index
    %3 = vector.load %arg7[%c0, %c0_1, %c0_2] : memref<1x16x32xf32, #tpu.memory_space<vmem>>, vector<1x16x32xf32>
    %4 = vector.shape_cast %3 : vector<1x16x32xf32> to vector<16x32xf32>
    %5 = arith.truncf %4 : vector<16x32xf32> to vector<16x32xbf16>
    %c0_3 = arith.constant 0 : index
    %c0_4 = arith.constant 0 : index
    %c0_5 = arith.constant 0 : index
    %6 = vector.load %arg3[%c0_3, %c0_4, %c0_5] : memref<1x32x96xbf16, #tpu.memory_space<vmem>>, vector<1x32x96xbf16>
    %7 = vector.shape_cast %6 : vector<1x32x96xbf16> to vector<32x96xbf16>
    %cst = arith.constant dense<0.000000e+00> : vector<16x96xf32>
    %8 = tpu.matmul %5, %7, %cst {dimension_numbers = #tpu.dot_dimension_numbers<[1], [0], [0], [1], [0, 0, 1, 1], [], []>} : vector<16x32xbf16>, vector<32x96xbf16>, vector<16x96xf32> -> vector<16x96xf32>
    %c0_6 = arith.constant 0 : index
    %c0_7 = arith.constant 0 : index
    %c0_8 = arith.constant 0 : index
    %9 = vector.load %arg4[%c0_6, %c0_7, %c0_8] : memref<1x1x96xf32, #tpu.memory_space<vmem>>, vector<1x1x96xf32>
    %10 = vector.shape_cast %9 : vector<1x1x96xf32> to vector<1x96xf32>
    %11 = vector.broadcast %10 : vector<1x96xf32> to vector<16x96xf32>
    %12 = arith.addf %8, %11 : vector<16x96xf32>
    %13 = tpu.iota {dimensions = array<i32: 0>} : vector<16x16xi32>
    %14 = tpu.iota {dimensions = array<i32: 1>} : vector<16x16xi32>
    %15 = arith.subi %13, %14 : vector<16x16xi32>
    %16 = math.absi %15 : vector<16x16xi32>
    %c4_i32 = arith.constant 4 : i32
    %17 = vector.broadcast %c4_i32 : i32 to vector<16x16xi32>
    %18 = arith.cmpi sle, %16, %17 : vector<16x16xi32>
    %cst_9 = arith.constant 0.000000e+00 : f32
    %cst_10 = arith.constant -1.000000e+09 : f32
    %19 = vector.broadcast %cst_9 : f32 to vector<16x16xf32>
    %20 = vector.broadcast %cst_10 : f32 to vector<16x16xf32>
    %21 = arith.select %18, %19, %20 : vector<16x16xi1>, vector<16x16xf32>
    %22 = vector.extract_strided_slice %12 {offsets = [0, 0], sizes = [16, 32], strides = [1, 1]} : vector<16x96xf32> to vector<16x32xf32>
    %23 = vector.extract_strided_slice %12 {offsets = [0, 32], sizes = [16, 32], strides = [1, 1]} : vector<16x96xf32> to vector<16x32xf32>
    %24 = vector.extract_strided_slice %12 {offsets = [0, 64], sizes = [16, 32], strides = [1, 1]} : vector<16x96xf32> to vector<16x32xf32>
    %25 = vector.extract_strided_slice %22 {offsets = [0, 0], sizes = [16, 8], strides = [1, 1]} : vector<16x32xf32> to vector<16x8xf32>
    %26 = arith.truncf %25 : vector<16x8xf32> to vector<16x8xbf16>
    %27 = vector.extract_strided_slice %23 {offsets = [0, 0], sizes = [16, 8], strides = [1, 1]} : vector<16x32xf32> to vector<16x8xf32>
    %28 = arith.truncf %27 : vector<16x8xf32> to vector<16x8xbf16>
    %29 = vector.extract_strided_slice %24 {offsets = [0, 0], sizes = [16, 8], strides = [1, 1]} : vector<16x32xf32> to vector<16x8xf32>
    %30 = arith.truncf %29 : vector<16x8xf32> to vector<16x8xbf16>
    %cst_11 = arith.constant dense<0.000000e+00> : vector<16x16xf32>
    %31 = tpu.matmul %26, %28, %cst_11 {dimension_numbers = #tpu.dot_dimension_numbers<[1], [1], [0], [0], [0, 0, 1, 0], [], []>} : vector<16x8xbf16>, vector<16x8xbf16>, vector<16x16xf32> -> vector<16x16xf32>
    %32 = arith.addf %31, %21 : vector<16x16xf32>
    %cst_12 = arith.constant dense<0xFF800000> : vector<16xf32>
    %33 = vector.multi_reduction <maximumf>, %32, %cst_12 [1] : vector<16x16xf32> to vector<16xf32>
    %34 = vector.shape_cast %33 : vector<16xf32> to vector<16x1xf32>
    %35 = vector.broadcast %34 : vector<16x1xf32> to vector<16x16xf32>
    %36 = arith.subf %32, %35 : vector<16x16xf32>
    %37 = math.exp %36 : vector<16x16xf32>
    %cst_13 = arith.constant dense<0.000000e+00> : vector<16xf32>
    %38 = vector.multi_reduction <add>, %37, %cst_13 [1] : vector<16x16xf32> to vector<16xf32>
    %39 = vector.shape_cast %38 : vector<16xf32> to vector<16x1xf32>
    %40 = tpu.reciprocal %39 : vector<16x1xf32> -> vector<16x1xf32>
    %41 = vector.broadcast %40 : vector<16x1xf32> to vector<16x16xf32>
    %42 = arith.mulf %37, %41 : vector<16x16xf32>
    %43 = arith.truncf %42 : vector<16x16xf32> to vector<16x16xbf16>
    %cst_14 = arith.constant dense<0.000000e+00> : vector<16x8xf32>
    %44 = tpu.matmul %43, %30, %cst_14 {dimension_numbers = #tpu.dot_dimension_numbers<[1], [0], [0], [1], [0, 0, 1, 1], [], []>} : vector<16x16xbf16>, vector<16x8xbf16>, vector<16x8xf32> -> vector<16x8xf32>
    %45 = vector.extract_strided_slice %22 {offsets = [0, 8], sizes = [16, 8], strides = [1, 1]} : vector<16x32xf32> to vector<16x8xf32>
    %46 = arith.truncf %45 : vector<16x8xf32> to vector<16x8xbf16>
    %47 = vector.extract_strided_slice %23 {offsets = [0, 8], sizes = [16, 8], strides = [1, 1]} : vector<16x32xf32> to vector<16x8xf32>
    %48 = arith.truncf %47 : vector<16x8xf32> to vector<16x8xbf16>
    %49 = vector.extract_strided_slice %24 {offsets = [0, 8], sizes = [16, 8], strides = [1, 1]} : vector<16x32xf32> to vector<16x8xf32>
    %50 = arith.truncf %49 : vector<16x8xf32> to vector<16x8xbf16>
    %cst_15 = arith.constant dense<0.000000e+00> : vector<16x16xf32>
    %51 = tpu.matmul %46, %48, %cst_15 {dimension_numbers = #tpu.dot_dimension_numbers<[1], [1], [0], [0], [0, 0, 1, 0], [], []>} : vector<16x8xbf16>, vector<16x8xbf16>, vector<16x16xf32> -> vector<16x16xf32>
    %52 = arith.addf %51, %21 : vector<16x16xf32>
    %cst_16 = arith.constant dense<0xFF800000> : vector<16xf32>
    %53 = vector.multi_reduction <maximumf>, %52, %cst_16 [1] : vector<16x16xf32> to vector<16xf32>
    %54 = vector.shape_cast %53 : vector<16xf32> to vector<16x1xf32>
    %55 = vector.broadcast %54 : vector<16x1xf32> to vector<16x16xf32>
    %56 = arith.subf %52, %55 : vector<16x16xf32>
    %57 = math.exp %56 : vector<16x16xf32>
    %cst_17 = arith.constant dense<0.000000e+00> : vector<16xf32>
    %58 = vector.multi_reduction <add>, %57, %cst_17 [1] : vector<16x16xf32> to vector<16xf32>
    %59 = vector.shape_cast %58 : vector<16xf32> to vector<16x1xf32>
    %60 = tpu.reciprocal %59 : vector<16x1xf32> -> vector<16x1xf32>
    %61 = vector.broadcast %60 : vector<16x1xf32> to vector<16x16xf32>
    %62 = arith.mulf %57, %61 : vector<16x16xf32>
    %63 = arith.truncf %62 : vector<16x16xf32> to vector<16x16xbf16>
    %cst_18 = arith.constant dense<0.000000e+00> : vector<16x8xf32>
    %64 = tpu.matmul %63, %50, %cst_18 {dimension_numbers = #tpu.dot_dimension_numbers<[1], [0], [0], [1], [0, 0, 1, 1], [], []>} : vector<16x16xbf16>, vector<16x8xbf16>, vector<16x8xf32> -> vector<16x8xf32>
    %65 = vector.extract_strided_slice %22 {offsets = [0, 16], sizes = [16, 8], strides = [1, 1]} : vector<16x32xf32> to vector<16x8xf32>
    %66 = arith.truncf %65 : vector<16x8xf32> to vector<16x8xbf16>
    %67 = vector.extract_strided_slice %23 {offsets = [0, 16], sizes = [16, 8], strides = [1, 1]} : vector<16x32xf32> to vector<16x8xf32>
    %68 = arith.truncf %67 : vector<16x8xf32> to vector<16x8xbf16>
    %69 = vector.extract_strided_slice %24 {offsets = [0, 16], sizes = [16, 8], strides = [1, 1]} : vector<16x32xf32> to vector<16x8xf32>
    %70 = arith.truncf %69 : vector<16x8xf32> to vector<16x8xbf16>
    %cst_19 = arith.constant dense<0.000000e+00> : vector<16x16xf32>
    %71 = tpu.matmul %66, %68, %cst_19 {dimension_numbers = #tpu.dot_dimension_numbers<[1], [1], [0], [0], [0, 0, 1, 0], [], []>} : vector<16x8xbf16>, vector<16x8xbf16>, vector<16x16xf32> -> vector<16x16xf32>
    %72 = arith.addf %71, %21 : vector<16x16xf32>
    %cst_20 = arith.constant dense<0xFF800000> : vector<16xf32>
    %73 = vector.multi_reduction <maximumf>, %72, %cst_20 [1] : vector<16x16xf32> to vector<16xf32>
    %74 = vector.shape_cast %73 : vector<16xf32> to vector<16x1xf32>
    %75 = vector.broadcast %74 : vector<16x1xf32> to vector<16x16xf32>
    %76 = arith.subf %72, %75 : vector<16x16xf32>
    %77 = math.exp %76 : vector<16x16xf32>
    %cst_21 = arith.constant dense<0.000000e+00> : vector<16xf32>
    %78 = vector.multi_reduction <add>, %77, %cst_21 [1] : vector<16x16xf32> to vector<16xf32>
    %79 = vector.shape_cast %78 : vector<16xf32> to vector<16x1xf32>
    %80 = tpu.reciprocal %79 : vector<16x1xf32> -> vector<16x1xf32>
    %81 = vector.broadcast %80 : vector<16x1xf32> to vector<16x16xf32>
    %82 = arith.mulf %77, %81 : vector<16x16xf32>
    %83 = arith.truncf %82 : vector<16x16xf32> to vector<16x16xbf16>
    %cst_22 = arith.constant dense<0.000000e+00> : vector<16x8xf32>
    %84 = tpu.matmul %83, %70, %cst_22 {dimension_numbers = #tpu.dot_dimension_numbers<[1], [0], [0], [1], [0, 0, 1, 1], [], []>} : vector<16x16xbf16>, vector<16x8xbf16>, vector<16x8xf32> -> vector<16x8xf32>
    %85 = vector.extract_strided_slice %22 {offsets = [0, 24], sizes = [16, 8], strides = [1, 1]} : vector<16x32xf32> to vector<16x8xf32>
    %86 = arith.truncf %85 : vector<16x8xf32> to vector<16x8xbf16>
    %87 = vector.extract_strided_slice %23 {offsets = [0, 24], sizes = [16, 8], strides = [1, 1]} : vector<16x32xf32> to vector<16x8xf32>
    %88 = arith.truncf %87 : vector<16x8xf32> to vector<16x8xbf16>
    %89 = vector.extract_strided_slice %24 {offsets = [0, 24], sizes = [16, 8], strides = [1, 1]} : vector<16x32xf32> to vector<16x8xf32>
    %90 = arith.truncf %89 : vector<16x8xf32> to vector<16x8xbf16>
    %cst_23 = arith.constant dense<0.000000e+00> : vector<16x16xf32>
    %91 = tpu.matmul %86, %88, %cst_23 {dimension_numbers = #tpu.dot_dimension_numbers<[1], [1], [0], [0], [0, 0, 1, 0], [], []>} : vector<16x8xbf16>, vector<16x8xbf16>, vector<16x16xf32> -> vector<16x16xf32>
    %92 = arith.addf %91, %21 : vector<16x16xf32>
    %cst_24 = arith.constant dense<0xFF800000> : vector<16xf32>
    %93 = vector.multi_reduction <maximumf>, %92, %cst_24 [1] : vector<16x16xf32> to vector<16xf32>
    %94 = vector.shape_cast %93 : vector<16xf32> to vector<16x1xf32>
    %95 = vector.broadcast %94 : vector<16x1xf32> to vector<16x16xf32>
    %96 = arith.subf %92, %95 : vector<16x16xf32>
    %97 = math.exp %96 : vector<16x16xf32>
    %cst_25 = arith.constant dense<0.000000e+00> : vector<16xf32>
    %98 = vector.multi_reduction <add>, %97, %cst_25 [1] : vector<16x16xf32> to vector<16xf32>
    %99 = vector.shape_cast %98 : vector<16xf32> to vector<16x1xf32>
    %100 = tpu.reciprocal %99 : vector<16x1xf32> -> vector<16x1xf32>
    %101 = vector.broadcast %100 : vector<16x1xf32> to vector<16x16xf32>
    %102 = arith.mulf %97, %101 : vector<16x16xf32>
    %103 = arith.truncf %102 : vector<16x16xf32> to vector<16x16xbf16>
    %cst_26 = arith.constant dense<0.000000e+00> : vector<16x8xf32>
    %104 = tpu.matmul %103, %90, %cst_26 {dimension_numbers = #tpu.dot_dimension_numbers<[1], [0], [0], [1], [0, 0, 1, 1], [], []>} : vector<16x16xbf16>, vector<16x8xbf16>, vector<16x8xf32> -> vector<16x8xf32>
    %105 = tpu.concatenate %44, %64, %84, %104 in 1 : vector<16x8xf32>, vector<16x8xf32>, vector<16x8xf32>, vector<16x8xf32> -> vector<16x32xf32>
    %106 = arith.addf %4, %105 : vector<16x32xf32>
    %c0_27 = arith.constant 0 : index
    %c0_28 = arith.constant 0 : index
    %c0_29 = arith.constant 0 : index
    %107 = vector.load %arg5[%c0_27, %c0_28, %c0_29] : memref<1x1x32xf32, #tpu.memory_space<vmem>>, vector<1x1x32xf32>
    %108 = vector.shape_cast %107 : vector<1x1x32xf32> to vector<1x32xf32>
    %c0_30 = arith.constant 0 : index
    %c0_31 = arith.constant 0 : index
    %c0_32 = arith.constant 0 : index
    %109 = vector.load %arg6[%c0_30, %c0_31, %c0_32] : memref<1x1x32xf32, #tpu.memory_space<vmem>>, vector<1x1x32xf32>
    %110 = vector.shape_cast %109 : vector<1x1x32xf32> to vector<1x32xf32>
    %cst_33 = arith.constant dense<0.000000e+00> : vector<16xf32>
    %111 = vector.multi_reduction <add>, %106, %cst_33 [1] : vector<16x32xf32> to vector<16xf32>
    %112 = vector.shape_cast %111 : vector<16xf32> to vector<16x1xf32>
    %cst_34 = arith.constant 3.200000e+01 : f32
    %113 = vector.broadcast %cst_34 : f32 to vector<16x1xf32>
    %114 = arith.divf %112, %113 : vector<16x1xf32>
    %115 = vector.broadcast %114 : vector<16x1xf32> to vector<16x32xf32>
    %116 = arith.subf %106, %115 : vector<16x32xf32>
    %117 = arith.mulf %116, %116 : vector<16x32xf32>
    %cst_35 = arith.constant dense<0.000000e+00> : vector<16xf32>
    %118 = vector.multi_reduction <add>, %117, %cst_35 [1] : vector<16x32xf32> to vector<16xf32>
    %119 = vector.shape_cast %118 : vector<16xf32> to vector<16x1xf32>
    %cst_36 = arith.constant 3.200000e+01 : f32
    %120 = vector.broadcast %cst_36 : f32 to vector<16x1xf32>
    %121 = arith.divf %119, %120 : vector<16x1xf32>
    %cst_37 = arith.constant 9.99999974E-6 : f32
    %122 = vector.broadcast %cst_37 : f32 to vector<16x1xf32>
    %123 = arith.addf %121, %122 : vector<16x1xf32>
    %124 = math.rsqrt %123 : vector<16x1xf32>
    %125 = vector.broadcast %124 : vector<16x1xf32> to vector<16x32xf32>
    %126 = arith.mulf %116, %125 : vector<16x32xf32>
    %127 = vector.broadcast %108 : vector<1x32xf32> to vector<16x32xf32>
    %128 = arith.mulf %126, %127 : vector<16x32xf32>
    %129 = vector.broadcast %110 : vector<1x32xf32> to vector<16x32xf32>
    %130 = arith.addf %128, %129 : vector<16x32xf32>
    %c0_38 = arith.constant 0 : index
    %c0_39 = arith.constant 0 : index
    %c0_40 = arith.constant 0 : index
    %131 = vector.load %arg7[%c0_38, %c0_39, %c0_40] : memref<1x16x32xf32, #tpu.memory_space<vmem>>, vector<1x16x32xf32>
    %132 = vector.shape_cast %131 : vector<1x16x32xf32> to vector<16x32xf32>
    %133 = vector.shape_cast %130 : vector<16x32xf32> to vector<1x16x32xf32>
    tpu.vector_store %arg7[%c0_38, %c0_39, %c0_40], %133 {strides = array<i32>} : memref<1x16x32xf32, #tpu.memory_space<vmem>>, vector<1x16x32xf32>,
    return
  }
  func.func @transform_0(%arg0: i32, %arg1: i32) -> (i32, i32, i32) {
    %c0_i32 = arith.constant 0 : i32
    %c0_i32_0 = arith.constant 0 : i32
    %c0_i32_1 = arith.constant 0 : i32
    return %arg0, %c0_i32, %c0_i32_0 : i32, i32, i32
  }
  func.func @transform_1(%arg0: i32, %arg1: i32) -> (i32, i32, i32) {
    %c0_i32 = arith.constant 0 : i32
    %c0_i32_0 = arith.constant 0 : i32
    %c0_i32_1 = arith.constant 0 : i32
    return %arg1, %c0_i32, %c0_i32_0 : i32, i32, i32
  }
  func.func @transform_2(%arg0: i32, %arg1: i32) -> (i32, i32, i32) {
    %c0_i32 = arith.constant 0 : i32
    %c0_i32_0 = arith.constant 0 : i32
    %c0_i32_1 = arith.constant 0 : i32
    return %arg1, %c0_i32, %c0_i32_0 : i32, i32, i32
  }
  func.func @transform_3(%arg0: i32, %arg1: i32) -> (i32, i32, i32) {
    %c0_i32 = arith.constant 0 : i32
    %c0_i32_0 = arith.constant 0 : i32
    %c0_i32_1 = arith.constant 0 : i32
    return %arg1, %c0_i32, %c0_i32_0 : i32, i32, i32
  }
  func.func @transform_4(%arg0: i32, %arg1: i32) -> (i32, i32, i32) {
    %c0_i32 = arith.constant 0 : i32
    %c0_i32_0 = arith.constant 0 : i32
    %c0_i32_1 = arith.constant 0 : i32
    return %arg1, %c0_i32, %c0_i32_0 : i32, i32, i32
  }
  func.func @transform_5(%arg0: i32, %arg1: i32) -> (i32, i32, i32) {
    %c0_i32 = arith.constant 0 : i32
    %c0_i32_0 = arith.constant 0 : i32
    %c0_i32_1 = arith.constant 0 : i32
    return %arg0, %c0_i32, %c0_i32_0 : i32, i32, i32
  }
}

module attributes {stable_mosaic.version = 11 : i64} {
  func.func @_topdown_stack_kernel(%arg0: i32, %arg1: i32, %arg2: memref<1x16x32xf32, #tpu.memory_space<vmem>>, %arg3: memref<1x3x32xf32, #tpu.memory_space<vmem>>, %arg4: memref<1x32x96xbf16, #tpu.memory_space<vmem>>, %arg5: memref<1x1x96xf32, #tpu.memory_space<vmem>>, %arg6: memref<1x32x32xbf16, #tpu.memory_space<vmem>>, %arg7: memref<1x1x32xf32, #tpu.memory_space<vmem>>, %arg8: memref<1x32x64xbf16, #tpu.memory_space<vmem>>, %arg9: memref<1x1x64xf32, #tpu.memory_space<vmem>>, %arg10: memref<1x32x32xbf16, #tpu.memory_space<vmem>>, %arg11: memref<1x1x32xf32, #tpu.memory_space<vmem>>, %arg12: memref<1x1x32xf32, #tpu.memory_space<vmem>>, %arg13: memref<1x1x32xf32, #tpu.memory_space<vmem>>, %arg14: memref<1x32x64xbf16, #tpu.memory_space<vmem>>, %arg15: memref<1x1x64xf32, #tpu.memory_space<vmem>>, %arg16: memref<1x64x32xbf16, #tpu.memory_space<vmem>>, %arg17: memref<1x1x32xf32, #tpu.memory_space<vmem>>, %arg18: memref<1x1x32xf32, #tpu.memory_space<vmem>>, %arg19: memref<1x1x32xf32, #tpu.memory_space<vmem>>, %arg20: memref<1x16x32xf32, #tpu.memory_space<vmem>>) attributes {dimension_semantics = [#tpu.dimension_semantics<parallel>, #tpu.dimension_semantics<arbitrary>], iteration_bounds = array<i64: 2, 2>, scalar_prefetch = 0 : i64, scratch_operands = 0 : i64, tpu.core_type = #tpu.core_type<tc>, window_params = [{transform_indices = @transform_0, window_bounds = array<i64: 1, 16, 32>}, {transform_indices = @transform_1, window_bounds = array<i64: 1, 3, 32>}, {transform_indices = @transform_2, window_bounds = array<i64: 1, 32, 96>}, {transform_indices = @transform_3, window_bounds = array<i64: 1, 1, 96>}, {transform_indices = @transform_4, window_bounds = array<i64: 1, 32, 32>}, {transform_indices = @transform_5, window_bounds = array<i64: 1, 1, 32>}, {transform_indices = @transform_6, window_bounds = array<i64: 1, 32, 64>}, {transform_indices = @transform_7, window_bounds = array<i64: 1, 1, 64>}, {transform_indices = @transform_8, window_bounds = array<i64: 1, 32, 32>}, {transform_indices = @transform_9, window_bounds = array<i64: 1, 1, 32>}, {transform_indices = @transform_10, window_bounds = array<i64: 1, 1, 32>}, {transform_indices = @transform_11, window_bounds = array<i64: 1, 1, 32>}, {transform_indices = @transform_12, window_bounds = array<i64: 1, 32, 64>}, {transform_indices = @transform_13, window_bounds = array<i64: 1, 1, 64>}, {transform_indices = @transform_14, window_bounds = array<i64: 1, 64, 32>}, {transform_indices = @transform_15, window_bounds = array<i64: 1, 1, 32>}, {transform_indices = @transform_16, window_bounds = array<i64: 1, 1, 32>}, {transform_indices = @transform_17, window_bounds = array<i64: 1, 1, 32>}, {transform_indices = @transform_18, window_bounds = array<i64: 1, 16, 32>}]} {
    %c0_i32 = arith.constant 0 : i32
    %0 = arith.cmpi eq, %arg1, %c0_i32 : i32
    %1 = arith.extui %0 : i1 to i32
    %c0_i32_0 = arith.constant 0 : i32
    %2 = arith.cmpi ne, %1, %c0_i32_0 : i32
    scf.if %2 {
      %c0_107 = arith.constant 0 : index
      %c0_108 = arith.constant 0 : index
      %c0_109 = arith.constant 0 : index
      %281 = vector.load %arg2[%c0_107, %c0_108, %c0_109] : memref<1x16x32xf32, #tpu.memory_space<vmem>>, vector<1x16x32xf32>
      %c0_110 = arith.constant 0 : index
      %c0_111 = arith.constant 0 : index
      %c0_112 = arith.constant 0 : index
      %282 = vector.load %arg20[%c0_110, %c0_111, %c0_112] : memref<1x16x32xf32, #tpu.memory_space<vmem>>, vector<1x16x32xf32>
      tpu.vector_store %arg20[%c0_110, %c0_111, %c0_112], %281 {strides = array<i32>} : memref<1x16x32xf32, #tpu.memory_space<vmem>>, vector<1x16x32xf32>,
    } else {
    }
    %c0 = arith.constant 0 : index
    %c0_1 = arith.constant 0 : index
    %c0_2 = arith.constant 0 : index
    %3 = vector.load %arg20[%c0, %c0_1, %c0_2] : memref<1x16x32xf32, #tpu.memory_space<vmem>>, vector<1x16x32xf32>
    %4 = vector.shape_cast %3 : vector<1x16x32xf32> to vector<16x32xf32>
    %c0_3 = arith.constant 0 : index
    %c0_4 = arith.constant 0 : index
    %c0_5 = arith.constant 0 : index
    %5 = vector.load %arg3[%c0_3, %c0_4, %c0_5] : memref<1x3x32xf32, #tpu.memory_space<vmem>>, vector<1x3x32xf32>
    %6 = vector.shape_cast %5 : vector<1x3x32xf32> to vector<3x32xf32>
    %7 = arith.truncf %4 : vector<16x32xf32> to vector<16x32xbf16>
    %c0_6 = arith.constant 0 : index
    %c0_7 = arith.constant 0 : index
    %c0_8 = arith.constant 0 : index
    %8 = vector.load %arg4[%c0_6, %c0_7, %c0_8] : memref<1x32x96xbf16, #tpu.memory_space<vmem>>, vector<1x32x96xbf16>
    %9 = vector.shape_cast %8 : vector<1x32x96xbf16> to vector<32x96xbf16>
    %cst = arith.constant dense<0.000000e+00> : vector<16x96xf32>
    %10 = tpu.matmul %7, %9, %cst {dimension_numbers = #tpu.dot_dimension_numbers<[1], [0], [0], [1], [0, 0, 1, 1], [], []>} : vector<16x32xbf16>, vector<32x96xbf16>, vector<16x96xf32> -> vector<16x96xf32>
    %c0_9 = arith.constant 0 : index
    %c0_10 = arith.constant 0 : index
    %c0_11 = arith.constant 0 : index
    %11 = vector.load %arg5[%c0_9, %c0_10, %c0_11] : memref<1x1x96xf32, #tpu.memory_space<vmem>>, vector<1x1x96xf32>
    %12 = vector.shape_cast %11 : vector<1x1x96xf32> to vector<1x96xf32>
    %13 = vector.broadcast %12 : vector<1x96xf32> to vector<16x96xf32>
    %14 = arith.addf %10, %13 : vector<16x96xf32>
    %15 = tpu.iota {dimensions = array<i32: 0>} : vector<16x16xi32>
    %16 = tpu.iota {dimensions = array<i32: 1>} : vector<16x16xi32>
    %17 = arith.subi %15, %16 : vector<16x16xi32>
    %18 = math.absi %17 : vector<16x16xi32>
    %c4_i32 = arith.constant 4 : i32
    %19 = vector.broadcast %c4_i32 : i32 to vector<16x16xi32>
    %20 = arith.cmpi sle, %18, %19 : vector<16x16xi32>
    %cst_12 = arith.constant 0.000000e+00 : f32
    %cst_13 = arith.constant -1.000000e+09 : f32
    %21 = vector.broadcast %cst_12 : f32 to vector<16x16xf32>
    %22 = vector.broadcast %cst_13 : f32 to vector<16x16xf32>
    %23 = arith.select %20, %21, %22 : vector<16x16xi1>, vector<16x16xf32>
    %24 = vector.extract_strided_slice %14 {offsets = [0, 0], sizes = [16, 32], strides = [1, 1]} : vector<16x96xf32> to vector<16x32xf32>
    %25 = vector.extract_strided_slice %14 {offsets = [0, 32], sizes = [16, 32], strides = [1, 1]} : vector<16x96xf32> to vector<16x32xf32>
    %26 = vector.extract_strided_slice %14 {offsets = [0, 64], sizes = [16, 32], strides = [1, 1]} : vector<16x96xf32> to vector<16x32xf32>
    %27 = vector.extract_strided_slice %24 {offsets = [0, 0], sizes = [16, 8], strides = [1, 1]} : vector<16x32xf32> to vector<16x8xf32>
    %28 = arith.truncf %27 : vector<16x8xf32> to vector<16x8xbf16>
    %29 = vector.extract_strided_slice %25 {offsets = [0, 0], sizes = [16, 8], strides = [1, 1]} : vector<16x32xf32> to vector<16x8xf32>
    %30 = arith.truncf %29 : vector<16x8xf32> to vector<16x8xbf16>
    %31 = vector.extract_strided_slice %26 {offsets = [0, 0], sizes = [16, 8], strides = [1, 1]} : vector<16x32xf32> to vector<16x8xf32>
    %32 = arith.truncf %31 : vector<16x8xf32> to vector<16x8xbf16>
    %cst_14 = arith.constant dense<0.000000e+00> : vector<16x16xf32>
    %33 = tpu.matmul %28, %30, %cst_14 {dimension_numbers = #tpu.dot_dimension_numbers<[1], [1], [0], [0], [0, 0, 1, 0], [], []>} : vector<16x8xbf16>, vector<16x8xbf16>, vector<16x16xf32> -> vector<16x16xf32>
    %34 = arith.addf %33, %23 : vector<16x16xf32>
    %cst_15 = arith.constant dense<0xFF800000> : vector<16xf32>
    %35 = vector.multi_reduction <maximumf>, %34, %cst_15 [1] : vector<16x16xf32> to vector<16xf32>
    %36 = vector.shape_cast %35 : vector<16xf32> to vector<16x1xf32>
    %37 = vector.broadcast %36 : vector<16x1xf32> to vector<16x16xf32>
    %38 = arith.subf %34, %37 : vector<16x16xf32>
    %39 = math.exp %38 : vector<16x16xf32>
    %cst_16 = arith.constant dense<0.000000e+00> : vector<16xf32>
    %40 = vector.multi_reduction <add>, %39, %cst_16 [1] : vector<16x16xf32> to vector<16xf32>
    %41 = vector.shape_cast %40 : vector<16xf32> to vector<16x1xf32>
    %42 = tpu.reciprocal %41 : vector<16x1xf32> -> vector<16x1xf32>
    %43 = vector.broadcast %42 : vector<16x1xf32> to vector<16x16xf32>
    %44 = arith.mulf %39, %43 : vector<16x16xf32>
    %45 = arith.truncf %44 : vector<16x16xf32> to vector<16x16xbf16>
    %cst_17 = arith.constant dense<0.000000e+00> : vector<16x8xf32>
    %46 = tpu.matmul %45, %32, %cst_17 {dimension_numbers = #tpu.dot_dimension_numbers<[1], [0], [0], [1], [0, 0, 1, 1], [], []>} : vector<16x16xbf16>, vector<16x8xbf16>, vector<16x8xf32> -> vector<16x8xf32>
    %47 = vector.extract_strided_slice %24 {offsets = [0, 8], sizes = [16, 8], strides = [1, 1]} : vector<16x32xf32> to vector<16x8xf32>
    %48 = arith.truncf %47 : vector<16x8xf32> to vector<16x8xbf16>
    %49 = vector.extract_strided_slice %25 {offsets = [0, 8], sizes = [16, 8], strides = [1, 1]} : vector<16x32xf32> to vector<16x8xf32>
    %50 = arith.truncf %49 : vector<16x8xf32> to vector<16x8xbf16>
    %51 = vector.extract_strided_slice %26 {offsets = [0, 8], sizes = [16, 8], strides = [1, 1]} : vector<16x32xf32> to vector<16x8xf32>
    %52 = arith.truncf %51 : vector<16x8xf32> to vector<16x8xbf16>
    %cst_18 = arith.constant dense<0.000000e+00> : vector<16x16xf32>
    %53 = tpu.matmul %48, %50, %cst_18 {dimension_numbers = #tpu.dot_dimension_numbers<[1], [1], [0], [0], [0, 0, 1, 0], [], []>} : vector<16x8xbf16>, vector<16x8xbf16>, vector<16x16xf32> -> vector<16x16xf32>
    %54 = arith.addf %53, %23 : vector<16x16xf32>
    %cst_19 = arith.constant dense<0xFF800000> : vector<16xf32>
    %55 = vector.multi_reduction <maximumf>, %54, %cst_19 [1] : vector<16x16xf32> to vector<16xf32>
    %56 = vector.shape_cast %55 : vector<16xf32> to vector<16x1xf32>
    %57 = vector.broadcast %56 : vector<16x1xf32> to vector<16x16xf32>
    %58 = arith.subf %54, %57 : vector<16x16xf32>
    %59 = math.exp %58 : vector<16x16xf32>
    %cst_20 = arith.constant dense<0.000000e+00> : vector<16xf32>
    %60 = vector.multi_reduction <add>, %59, %cst_20 [1] : vector<16x16xf32> to vector<16xf32>
    %61 = vector.shape_cast %60 : vector<16xf32> to vector<16x1xf32>
    %62 = tpu.reciprocal %61 : vector<16x1xf32> -> vector<16x1xf32>
    %63 = vector.broadcast %62 : vector<16x1xf32> to vector<16x16xf32>
    %64 = arith.mulf %59, %63 : vector<16x16xf32>
    %65 = arith.truncf %64 : vector<16x16xf32> to vector<16x16xbf16>
    %cst_21 = arith.constant dense<0.000000e+00> : vector<16x8xf32>
    %66 = tpu.matmul %65, %52, %cst_21 {dimension_numbers = #tpu.dot_dimension_numbers<[1], [0], [0], [1], [0, 0, 1, 1], [], []>} : vector<16x16xbf16>, vector<16x8xbf16>, vector<16x8xf32> -> vector<16x8xf32>
    %67 = vector.extract_strided_slice %24 {offsets = [0, 16], sizes = [16, 8], strides = [1, 1]} : vector<16x32xf32> to vector<16x8xf32>
    %68 = arith.truncf %67 : vector<16x8xf32> to vector<16x8xbf16>
    %69 = vector.extract_strided_slice %25 {offsets = [0, 16], sizes = [16, 8], strides = [1, 1]} : vector<16x32xf32> to vector<16x8xf32>
    %70 = arith.truncf %69 : vector<16x8xf32> to vector<16x8xbf16>
    %71 = vector.extract_strided_slice %26 {offsets = [0, 16], sizes = [16, 8], strides = [1, 1]} : vector<16x32xf32> to vector<16x8xf32>
    %72 = arith.truncf %71 : vector<16x8xf32> to vector<16x8xbf16>
    %cst_22 = arith.constant dense<0.000000e+00> : vector<16x16xf32>
    %73 = tpu.matmul %68, %70, %cst_22 {dimension_numbers = #tpu.dot_dimension_numbers<[1], [1], [0], [0], [0, 0, 1, 0], [], []>} : vector<16x8xbf16>, vector<16x8xbf16>, vector<16x16xf32> -> vector<16x16xf32>
    %74 = arith.addf %73, %23 : vector<16x16xf32>
    %cst_23 = arith.constant dense<0xFF800000> : vector<16xf32>
    %75 = vector.multi_reduction <maximumf>, %74, %cst_23 [1] : vector<16x16xf32> to vector<16xf32>
    %76 = vector.shape_cast %75 : vector<16xf32> to vector<16x1xf32>
    %77 = vector.broadcast %76 : vector<16x1xf32> to vector<16x16xf32>
    %78 = arith.subf %74, %77 : vector<16x16xf32>
    %79 = math.exp %78 : vector<16x16xf32>
    %cst_24 = arith.constant dense<0.000000e+00> : vector<16xf32>
    %80 = vector.multi_reduction <add>, %79, %cst_24 [1] : vector<16x16xf32> to vector<16xf32>
    %81 = vector.shape_cast %80 : vector<16xf32> to vector<16x1xf32>
    %82 = tpu.reciprocal %81 : vector<16x1xf32> -> vector<16x1xf32>
    %83 = vector.broadcast %82 : vector<16x1xf32> to vector<16x16xf32>
    %84 = arith.mulf %79, %83 : vector<16x16xf32>
    %85 = arith.truncf %84 : vector<16x16xf32> to vector<16x16xbf16>
    %cst_25 = arith.constant dense<0.000000e+00> : vector<16x8xf32>
    %86 = tpu.matmul %85, %72, %cst_25 {dimension_numbers = #tpu.dot_dimension_numbers<[1], [0], [0], [1], [0, 0, 1, 1], [], []>} : vector<16x16xbf16>, vector<16x8xbf16>, vector<16x8xf32> -> vector<16x8xf32>
    %87 = vector.extract_strided_slice %24 {offsets = [0, 24], sizes = [16, 8], strides = [1, 1]} : vector<16x32xf32> to vector<16x8xf32>
    %88 = arith.truncf %87 : vector<16x8xf32> to vector<16x8xbf16>
    %89 = vector.extract_strided_slice %25 {offsets = [0, 24], sizes = [16, 8], strides = [1, 1]} : vector<16x32xf32> to vector<16x8xf32>
    %90 = arith.truncf %89 : vector<16x8xf32> to vector<16x8xbf16>
    %91 = vector.extract_strided_slice %26 {offsets = [0, 24], sizes = [16, 8], strides = [1, 1]} : vector<16x32xf32> to vector<16x8xf32>
    %92 = arith.truncf %91 : vector<16x8xf32> to vector<16x8xbf16>
    %cst_26 = arith.constant dense<0.000000e+00> : vector<16x16xf32>
    %93 = tpu.matmul %88, %90, %cst_26 {dimension_numbers = #tpu.dot_dimension_numbers<[1], [1], [0], [0], [0, 0, 1, 0], [], []>} : vector<16x8xbf16>, vector<16x8xbf16>, vector<16x16xf32> -> vector<16x16xf32>
    %94 = arith.addf %93, %23 : vector<16x16xf32>
    %cst_27 = arith.constant dense<0xFF800000> : vector<16xf32>
    %95 = vector.multi_reduction <maximumf>, %94, %cst_27 [1] : vector<16x16xf32> to vector<16xf32>
    %96 = vector.shape_cast %95 : vector<16xf32> to vector<16x1xf32>
    %97 = vector.broadcast %96 : vector<16x1xf32> to vector<16x16xf32>
    %98 = arith.subf %94, %97 : vector<16x16xf32>
    %99 = math.exp %98 : vector<16x16xf32>
    %cst_28 = arith.constant dense<0.000000e+00> : vector<16xf32>
    %100 = vector.multi_reduction <add>, %99, %cst_28 [1] : vector<16x16xf32> to vector<16xf32>
    %101 = vector.shape_cast %100 : vector<16xf32> to vector<16x1xf32>
    %102 = tpu.reciprocal %101 : vector<16x1xf32> -> vector<16x1xf32>
    %103 = vector.broadcast %102 : vector<16x1xf32> to vector<16x16xf32>
    %104 = arith.mulf %99, %103 : vector<16x16xf32>
    %105 = arith.truncf %104 : vector<16x16xf32> to vector<16x16xbf16>
    %cst_29 = arith.constant dense<0.000000e+00> : vector<16x8xf32>
    %106 = tpu.matmul %105, %92, %cst_29 {dimension_numbers = #tpu.dot_dimension_numbers<[1], [0], [0], [1], [0, 0, 1, 1], [], []>} : vector<16x16xbf16>, vector<16x8xbf16>, vector<16x8xf32> -> vector<16x8xf32>
    %107 = tpu.concatenate %46, %66, %86, %106 in 1 : vector<16x8xf32>, vector<16x8xf32>, vector<16x8xf32>, vector<16x8xf32> -> vector<16x32xf32>
    %108 = arith.truncf %107 : vector<16x32xf32> to vector<16x32xbf16>
    %c0_30 = arith.constant 0 : index
    %c0_31 = arith.constant 0 : index
    %c0_32 = arith.constant 0 : index
    %109 = vector.load %arg6[%c0_30, %c0_31, %c0_32] : memref<1x32x32xbf16, #tpu.memory_space<vmem>>, vector<1x32x32xbf16>
    %110 = vector.shape_cast %109 : vector<1x32x32xbf16> to vector<32x32xbf16>
    %cst_33 = arith.constant dense<0.000000e+00> : vector<16x32xf32>
    %111 = tpu.matmul %108, %110, %cst_33 {dimension_numbers = #tpu.dot_dimension_numbers<[1], [0], [0], [1], [0, 0, 1, 1], [], []>} : vector<16x32xbf16>, vector<32x32xbf16>, vector<16x32xf32> -> vector<16x32xf32>
    %c0_34 = arith.constant 0 : index
    %c0_35 = arith.constant 0 : index
    %c0_36 = arith.constant 0 : index
    %112 = vector.load %arg7[%c0_34, %c0_35, %c0_36] : memref<1x1x32xf32, #tpu.memory_space<vmem>>, vector<1x1x32xf32>
    %113 = vector.shape_cast %112 : vector<1x1x32xf32> to vector<1x32xf32>
    %114 = vector.broadcast %113 : vector<1x32xf32> to vector<16x32xf32>
    %115 = arith.addf %111, %114 : vector<16x32xf32>
    %116 = arith.truncf %6 : vector<3x32xf32> to vector<3x32xbf16>
    %c0_37 = arith.constant 0 : index
    %c0_38 = arith.constant 0 : index
    %c0_39 = arith.constant 0 : index
    %117 = vector.load %arg8[%c0_37, %c0_38, %c0_39] : memref<1x32x64xbf16, #tpu.memory_space<vmem>>, vector<1x32x64xbf16>
    %118 = vector.shape_cast %117 : vector<1x32x64xbf16> to vector<32x64xbf16>
    %cst_40 = arith.constant dense<0.000000e+00> : vector<3x64xf32>
    %119 = tpu.matmul %116, %118, %cst_40 {dimension_numbers = #tpu.dot_dimension_numbers<[1], [0], [0], [1], [0, 0, 1, 1], [], []>} : vector<3x32xbf16>, vector<32x64xbf16>, vector<3x64xf32> -> vector<3x64xf32>
    %c0_41 = arith.constant 0 : index
    %c0_42 = arith.constant 0 : index
    %c0_43 = arith.constant 0 : index
    %120 = vector.load %arg9[%c0_41, %c0_42, %c0_43] : memref<1x1x64xf32, #tpu.memory_space<vmem>>, vector<1x1x64xf32>
    %121 = vector.shape_cast %120 : vector<1x1x64xf32> to vector<1x64xf32>
    %122 = vector.broadcast %121 : vector<1x64xf32> to vector<3x64xf32>
    %123 = arith.addf %119, %122 : vector<3x64xf32>
    %124 = vector.extract_strided_slice %123 {offsets = [0, 0], sizes = [3, 32], strides = [1, 1]} : vector<3x64xf32> to vector<3x32xf32>
    %125 = vector.extract_strided_slice %123 {offsets = [0, 32], sizes = [3, 32], strides = [1, 1]} : vector<3x64xf32> to vector<3x32xf32>
    %126 = vector.extract_strided_slice %115 {offsets = [0, 0], sizes = [16, 8], strides = [1, 1]} : vector<16x32xf32> to vector<16x8xf32>
    %127 = arith.truncf %126 : vector<16x8xf32> to vector<16x8xbf16>
    %128 = vector.extract_strided_slice %124 {offsets = [0, 0], sizes = [3, 8], strides = [1, 1]} : vector<3x32xf32> to vector<3x8xf32>
    %129 = arith.truncf %128 : vector<3x8xf32> to vector<3x8xbf16>
    %130 = vector.extract_strided_slice %125 {offsets = [0, 0], sizes = [3, 8], strides = [1, 1]} : vector<3x32xf32> to vector<3x8xf32>
    %131 = arith.truncf %130 : vector<3x8xf32> to vector<3x8xbf16>
    %cst_44 = arith.constant dense<0.000000e+00> : vector<16x3xf32>
    %132 = tpu.matmul %127, %129, %cst_44 {dimension_numbers = #tpu.dot_dimension_numbers<[1], [1], [0], [0], [0, 0, 1, 0], [], []>} : vector<16x8xbf16>, vector<3x8xbf16>, vector<16x3xf32> -> vector<16x3xf32>
    %cst_45 = arith.constant dense<0xFF800000> : vector<16xf32>
    %133 = vector.multi_reduction <maximumf>, %132, %cst_45 [1] : vector<16x3xf32> to vector<16xf32>
    %134 = vector.shape_cast %133 : vector<16xf32> to vector<16x1xf32>
    %135 = vector.broadcast %134 : vector<16x1xf32> to vector<16x3xf32>
    %136 = arith.subf %132, %135 : vector<16x3xf32>
    %137 = math.exp %136 : vector<16x3xf32>
    %cst_46 = arith.constant dense<0.000000e+00> : vector<16xf32>
    %138 = vector.multi_reduction <add>, %137, %cst_46 [1] : vector<16x3xf32> to vector<16xf32>
    %139 = vector.shape_cast %138 : vector<16xf32> to vector<16x1xf32>
    %140 = tpu.reciprocal %139 : vector<16x1xf32> -> vector<16x1xf32>
    %141 = vector.broadcast %140 : vector<16x1xf32> to vector<16x3xf32>
    %142 = arith.mulf %137, %141 : vector<16x3xf32>
    %143 = arith.truncf %142 : vector<16x3xf32> to vector<16x3xbf16>
    %cst_47 = arith.constant dense<0.000000e+00> : vector<16x8xf32>
    %144 = tpu.matmul %143, %131, %cst_47 {dimension_numbers = #tpu.dot_dimension_numbers<[1], [0], [0], [1], [0, 0, 1, 1], [], []>} : vector<16x3xbf16>, vector<3x8xbf16>, vector<16x8xf32> -> vector<16x8xf32>
    %145 = vector.extract_strided_slice %115 {offsets = [0, 8], sizes = [16, 8], strides = [1, 1]} : vector<16x32xf32> to vector<16x8xf32>
    %146 = arith.truncf %145 : vector<16x8xf32> to vector<16x8xbf16>
    %147 = vector.extract_strided_slice %124 {offsets = [0, 8], sizes = [3, 8], strides = [1, 1]} : vector<3x32xf32> to vector<3x8xf32>
    %148 = arith.truncf %147 : vector<3x8xf32> to vector<3x8xbf16>
    %149 = vector.extract_strided_slice %125 {offsets = [0, 8], sizes = [3, 8], strides = [1, 1]} : vector<3x32xf32> to vector<3x8xf32>
    %150 = arith.truncf %149 : vector<3x8xf32> to vector<3x8xbf16>
    %cst_48 = arith.constant dense<0.000000e+00> : vector<16x3xf32>
    %151 = tpu.matmul %146, %148, %cst_48 {dimension_numbers = #tpu.dot_dimension_numbers<[1], [1], [0], [0], [0, 0, 1, 0], [], []>} : vector<16x8xbf16>, vector<3x8xbf16>, vector<16x3xf32> -> vector<16x3xf32>
    %cst_49 = arith.constant dense<0xFF800000> : vector<16xf32>
    %152 = vector.multi_reduction <maximumf>, %151, %cst_49 [1] : vector<16x3xf32> to vector<16xf32>
    %153 = vector.shape_cast %152 : vector<16xf32> to vector<16x1xf32>
    %154 = vector.broadcast %153 : vector<16x1xf32> to vector<16x3xf32>
    %155 = arith.subf %151, %154 : vector<16x3xf32>
    %156 = math.exp %155 : vector<16x3xf32>
    %cst_50 = arith.constant dense<0.000000e+00> : vector<16xf32>
    %157 = vector.multi_reduction <add>, %156, %cst_50 [1] : vector<16x3xf32> to vector<16xf32>
    %158 = vector.shape_cast %157 : vector<16xf32> to vector<16x1xf32>
    %159 = tpu.reciprocal %158 : vector<16x1xf32> -> vector<16x1xf32>
    %160 = vector.broadcast %159 : vector<16x1xf32> to vector<16x3xf32>
    %161 = arith.mulf %156, %160 : vector<16x3xf32>
    %162 = arith.truncf %161 : vector<16x3xf32> to vector<16x3xbf16>
    %cst_51 = arith.constant dense<0.000000e+00> : vector<16x8xf32>
    %163 = tpu.matmul %162, %150, %cst_51 {dimension_numbers = #tpu.dot_dimension_numbers<[1], [0], [0], [1], [0, 0, 1, 1], [], []>} : vector<16x3xbf16>, vector<3x8xbf16>, vector<16x8xf32> -> vector<16x8xf32>
    %164 = vector.extract_strided_slice %115 {offsets = [0, 16], sizes = [16, 8], strides = [1, 1]} : vector<16x32xf32> to vector<16x8xf32>
    %165 = arith.truncf %164 : vector<16x8xf32> to vector<16x8xbf16>
    %166 = vector.extract_strided_slice %124 {offsets = [0, 16], sizes = [3, 8], strides = [1, 1]} : vector<3x32xf32> to vector<3x8xf32>
    %167 = arith.truncf %166 : vector<3x8xf32> to vector<3x8xbf16>
    %168 = vector.extract_strided_slice %125 {offsets = [0, 16], sizes = [3, 8], strides = [1, 1]} : vector<3x32xf32> to vector<3x8xf32>
    %169 = arith.truncf %168 : vector<3x8xf32> to vector<3x8xbf16>
    %cst_52 = arith.constant dense<0.000000e+00> : vector<16x3xf32>
    %170 = tpu.matmul %165, %167, %cst_52 {dimension_numbers = #tpu.dot_dimension_numbers<[1], [1], [0], [0], [0, 0, 1, 0], [], []>} : vector<16x8xbf16>, vector<3x8xbf16>, vector<16x3xf32> -> vector<16x3xf32>
    %cst_53 = arith.constant dense<0xFF800000> : vector<16xf32>
    %171 = vector.multi_reduction <maximumf>, %170, %cst_53 [1] : vector<16x3xf32> to vector<16xf32>
    %172 = vector.shape_cast %171 : vector<16xf32> to vector<16x1xf32>
    %173 = vector.broadcast %172 : vector<16x1xf32> to vector<16x3xf32>
    %174 = arith.subf %170, %173 : vector<16x3xf32>
    %175 = math.exp %174 : vector<16x3xf32>
    %cst_54 = arith.constant dense<0.000000e+00> : vector<16xf32>
    %176 = vector.multi_reduction <add>, %175, %cst_54 [1] : vector<16x3xf32> to vector<16xf32>
    %177 = vector.shape_cast %176 : vector<16xf32> to vector<16x1xf32>
    %178 = tpu.reciprocal %177 : vector<16x1xf32> -> vector<16x1xf32>
    %179 = vector.broadcast %178 : vector<16x1xf32> to vector<16x3xf32>
    %180 = arith.mulf %175, %179 : vector<16x3xf32>
    %181 = arith.truncf %180 : vector<16x3xf32> to vector<16x3xbf16>
    %cst_55 = arith.constant dense<0.000000e+00> : vector<16x8xf32>
    %182 = tpu.matmul %181, %169, %cst_55 {dimension_numbers = #tpu.dot_dimension_numbers<[1], [0], [0], [1], [0, 0, 1, 1], [], []>} : vector<16x3xbf16>, vector<3x8xbf16>, vector<16x8xf32> -> vector<16x8xf32>
    %183 = vector.extract_strided_slice %115 {offsets = [0, 24], sizes = [16, 8], strides = [1, 1]} : vector<16x32xf32> to vector<16x8xf32>
    %184 = arith.truncf %183 : vector<16x8xf32> to vector<16x8xbf16>
    %185 = vector.extract_strided_slice %124 {offsets = [0, 24], sizes = [3, 8], strides = [1, 1]} : vector<3x32xf32> to vector<3x8xf32>
    %186 = arith.truncf %185 : vector<3x8xf32> to vector<3x8xbf16>
    %187 = vector.extract_strided_slice %125 {offsets = [0, 24], sizes = [3, 8], strides = [1, 1]} : vector<3x32xf32> to vector<3x8xf32>
    %188 = arith.truncf %187 : vector<3x8xf32> to vector<3x8xbf16>
    %cst_56 = arith.constant dense<0.000000e+00> : vector<16x3xf32>
    %189 = tpu.matmul %184, %186, %cst_56 {dimension_numbers = #tpu.dot_dimension_numbers<[1], [1], [0], [0], [0, 0, 1, 0], [], []>} : vector<16x8xbf16>, vector<3x8xbf16>, vector<16x3xf32> -> vector<16x3xf32>
    %cst_57 = arith.constant dense<0xFF800000> : vector<16xf32>
    %190 = vector.multi_reduction <maximumf>, %189, %cst_57 [1] : vector<16x3xf32> to vector<16xf32>
    %191 = vector.shape_cast %190 : vector<16xf32> to vector<16x1xf32>
    %192 = vector.broadcast %191 : vector<16x1xf32> to vector<16x3xf32>
    %193 = arith.subf %189, %192 : vector<16x3xf32>
    %194 = math.exp %193 : vector<16x3xf32>
    %cst_58 = arith.constant dense<0.000000e+00> : vector<16xf32>
    %195 = vector.multi_reduction <add>, %194, %cst_58 [1] : vector<16x3xf32> to vector<16xf32>
    %196 = vector.shape_cast %195 : vector<16xf32> to vector<16x1xf32>
    %197 = tpu.reciprocal %196 : vector<16x1xf32> -> vector<16x1xf32>
    %198 = vector.broadcast %197 : vector<16x1xf32> to vector<16x3xf32>
    %199 = arith.mulf %194, %198 : vector<16x3xf32>
    %200 = arith.truncf %199 : vector<16x3xf32> to vector<16x3xbf16>
    %cst_59 = arith.constant dense<0.000000e+00> : vector<16x8xf32>
    %201 = tpu.matmul %200, %188, %cst_59 {dimension_numbers = #tpu.dot_dimension_numbers<[1], [0], [0], [1], [0, 0, 1, 1], [], []>} : vector<16x3xbf16>, vector<3x8xbf16>, vector<16x8xf32> -> vector<16x8xf32>
    %202 = tpu.concatenate %144, %163, %182, %201 in 1 : vector<16x8xf32>, vector<16x8xf32>, vector<16x8xf32>, vector<16x8xf32> -> vector<16x32xf32>
    %203 = arith.truncf %202 : vector<16x32xf32> to vector<16x32xbf16>
    %c0_60 = arith.constant 0 : index
    %c0_61 = arith.constant 0 : index
    %c0_62 = arith.constant 0 : index
    %204 = vector.load %arg10[%c0_60, %c0_61, %c0_62] : memref<1x32x32xbf16, #tpu.memory_space<vmem>>, vector<1x32x32xbf16>
    %205 = vector.shape_cast %204 : vector<1x32x32xbf16> to vector<32x32xbf16>
    %cst_63 = arith.constant dense<0.000000e+00> : vector<16x32xf32>
    %206 = tpu.matmul %203, %205, %cst_63 {dimension_numbers = #tpu.dot_dimension_numbers<[1], [0], [0], [1], [0, 0, 1, 1], [], []>} : vector<16x32xbf16>, vector<32x32xbf16>, vector<16x32xf32> -> vector<16x32xf32>
    %c0_64 = arith.constant 0 : index
    %c0_65 = arith.constant 0 : index
    %c0_66 = arith.constant 0 : index
    %207 = vector.load %arg11[%c0_64, %c0_65, %c0_66] : memref<1x1x32xf32, #tpu.memory_space<vmem>>, vector<1x1x32xf32>
    %208 = vector.shape_cast %207 : vector<1x1x32xf32> to vector<1x32xf32>
    %209 = vector.broadcast %208 : vector<1x32xf32> to vector<16x32xf32>
    %210 = arith.addf %206, %209 : vector<16x32xf32>
    %c0_67 = arith.constant 0 : index
    %c0_68 = arith.constant 0 : index
    %c0_69 = arith.constant 0 : index
    %211 = vector.load %arg12[%c0_67, %c0_68, %c0_69] : memref<1x1x32xf32, #tpu.memory_space<vmem>>, vector<1x1x32xf32>
    %212 = vector.shape_cast %211 : vector<1x1x32xf32> to vector<1x32xf32>
    %c0_70 = arith.constant 0 : index
    %c0_71 = arith.constant 0 : index
    %c0_72 = arith.constant 0 : index
    %213 = vector.load %arg13[%c0_70, %c0_71, %c0_72] : memref<1x1x32xf32, #tpu.memory_space<vmem>>, vector<1x1x32xf32>
    %214 = vector.shape_cast %213 : vector<1x1x32xf32> to vector<1x32xf32>
    %cst_73 = arith.constant dense<0.000000e+00> : vector<16xf32>
    %215 = vector.multi_reduction <add>, %210, %cst_73 [1] : vector<16x32xf32> to vector<16xf32>
    %216 = vector.shape_cast %215 : vector<16xf32> to vector<16x1xf32>
    %cst_74 = arith.constant 3.200000e+01 : f32
    %217 = vector.broadcast %cst_74 : f32 to vector<16x1xf32>
    %218 = arith.divf %216, %217 : vector<16x1xf32>
    %219 = vector.broadcast %218 : vector<16x1xf32> to vector<16x32xf32>
    %220 = arith.subf %210, %219 : vector<16x32xf32>
    %221 = arith.mulf %220, %220 : vector<16x32xf32>
    %cst_75 = arith.constant dense<0.000000e+00> : vector<16xf32>
    %222 = vector.multi_reduction <add>, %221, %cst_75 [1] : vector<16x32xf32> to vector<16xf32>
    %223 = vector.shape_cast %222 : vector<16xf32> to vector<16x1xf32>
    %cst_76 = arith.constant 3.200000e+01 : f32
    %224 = vector.broadcast %cst_76 : f32 to vector<16x1xf32>
    %225 = arith.divf %223, %224 : vector<16x1xf32>
    %cst_77 = arith.constant 9.99999974E-6 : f32
    %226 = vector.broadcast %cst_77 : f32 to vector<16x1xf32>
    %227 = arith.addf %225, %226 : vector<16x1xf32>
    %228 = math.rsqrt %227 : vector<16x1xf32>
    %229 = vector.broadcast %228 : vector<16x1xf32> to vector<16x32xf32>
    %230 = arith.mulf %220, %229 : vector<16x32xf32>
    %231 = vector.broadcast %212 : vector<1x32xf32> to vector<16x32xf32>
    %232 = arith.mulf %230, %231 : vector<16x32xf32>
    %233 = vector.broadcast %214 : vector<1x32xf32> to vector<16x32xf32>
    %234 = arith.addf %232, %233 : vector<16x32xf32>
    %235 = arith.addf %107, %234 : vector<16x32xf32>
    %236 = arith.truncf %235 : vector<16x32xf32> to vector<16x32xbf16>
    %c0_78 = arith.constant 0 : index
    %c0_79 = arith.constant 0 : index
    %c0_80 = arith.constant 0 : index
    %237 = vector.load %arg14[%c0_78, %c0_79, %c0_80] : memref<1x32x64xbf16, #tpu.memory_space<vmem>>, vector<1x32x64xbf16>
    %238 = vector.shape_cast %237 : vector<1x32x64xbf16> to vector<32x64xbf16>
    %cst_81 = arith.constant dense<0.000000e+00> : vector<16x64xf32>
    %239 = tpu.matmul %236, %238, %cst_81 {dimension_numbers = #tpu.dot_dimension_numbers<[1], [0], [0], [1], [0, 0, 1, 1], [], []>} : vector<16x32xbf16>, vector<32x64xbf16>, vector<16x64xf32> -> vector<16x64xf32>
    %c0_82 = arith.constant 0 : index
    %c0_83 = arith.constant 0 : index
    %c0_84 = arith.constant 0 : index
    %240 = vector.load %arg15[%c0_82, %c0_83, %c0_84] : memref<1x1x64xf32, #tpu.memory_space<vmem>>, vector<1x1x64xf32>
    %241 = vector.shape_cast %240 : vector<1x1x64xf32> to vector<1x64xf32>
    %242 = vector.broadcast %241 : vector<1x64xf32> to vector<16x64xf32>
    %243 = arith.addf %239, %242 : vector<16x64xf32>
    %cst_85 = arith.constant 0.000000e+00 : f32
    %244 = vector.broadcast %cst_85 : f32 to vector<16x64xf32>
    %245 = arith.maximumf %243, %244 : vector<16x64xf32>
    %246 = arith.truncf %245 : vector<16x64xf32> to vector<16x64xbf16>
    %c0_86 = arith.constant 0 : index
    %c0_87 = arith.constant 0 : index
    %c0_88 = arith.constant 0 : index
    %247 = vector.load %arg16[%c0_86, %c0_87, %c0_88] : memref<1x64x32xbf16, #tpu.memory_space<vmem>>, vector<1x64x32xbf16>
    %248 = vector.shape_cast %247 : vector<1x64x32xbf16> to vector<64x32xbf16>
    %cst_89 = arith.constant dense<0.000000e+00> : vector<16x32xf32>
    %249 = tpu.matmul %246, %248, %cst_89 {dimension_numbers = #tpu.dot_dimension_numbers<[1], [0], [0], [1], [0, 0, 1, 1], [], []>} : vector<16x64xbf16>, vector<64x32xbf16>, vector<16x32xf32> -> vector<16x32xf32>
    %c0_90 = arith.constant 0 : index
    %c0_91 = arith.constant 0 : index
    %c0_92 = arith.constant 0 : index
    %250 = vector.load %arg17[%c0_90, %c0_91, %c0_92] : memref<1x1x32xf32, #tpu.memory_space<vmem>>, vector<1x1x32xf32>
    %251 = vector.shape_cast %250 : vector<1x1x32xf32> to vector<1x32xf32>
    %252 = vector.broadcast %251 : vector<1x32xf32> to vector<16x32xf32>
    %253 = arith.addf %249, %252 : vector<16x32xf32>
    %c0_93 = arith.constant 0 : index
    %c0_94 = arith.constant 0 : index
    %c0_95 = arith.constant 0 : index
    %254 = vector.load %arg18[%c0_93, %c0_94, %c0_95] : memref<1x1x32xf32, #tpu.memory_space<vmem>>, vector<1x1x32xf32>
    %255 = vector.shape_cast %254 : vector<1x1x32xf32> to vector<1x32xf32>
    %c0_96 = arith.constant 0 : index
    %c0_97 = arith.constant 0 : index
    %c0_98 = arith.constant 0 : index
    %256 = vector.load %arg19[%c0_96, %c0_97, %c0_98] : memref<1x1x32xf32, #tpu.memory_space<vmem>>, vector<1x1x32xf32>
    %257 = vector.shape_cast %256 : vector<1x1x32xf32> to vector<1x32xf32>
    %cst_99 = arith.constant dense<0.000000e+00> : vector<16xf32>
    %258 = vector.multi_reduction <add>, %253, %cst_99 [1] : vector<16x32xf32> to vector<16xf32>
    %259 = vector.shape_cast %258 : vector<16xf32> to vector<16x1xf32>
    %cst_100 = arith.constant 3.200000e+01 : f32
    %260 = vector.broadcast %cst_100 : f32 to vector<16x1xf32>
    %261 = arith.divf %259, %260 : vector<16x1xf32>
    %262 = vector.broadcast %261 : vector<16x1xf32> to vector<16x32xf32>
    %263 = arith.subf %253, %262 : vector<16x32xf32>
    %264 = arith.mulf %263, %263 : vector<16x32xf32>
    %cst_101 = arith.constant dense<0.000000e+00> : vector<16xf32>
    %265 = vector.multi_reduction <add>, %264, %cst_101 [1] : vector<16x32xf32> to vector<16xf32>
    %266 = vector.shape_cast %265 : vector<16xf32> to vector<16x1xf32>
    %cst_102 = arith.constant 3.200000e+01 : f32
    %267 = vector.broadcast %cst_102 : f32 to vector<16x1xf32>
    %268 = arith.divf %266, %267 : vector<16x1xf32>
    %cst_103 = arith.constant 9.99999974E-6 : f32
    %269 = vector.broadcast %cst_103 : f32 to vector<16x1xf32>
    %270 = arith.addf %268, %269 : vector<16x1xf32>
    %271 = math.rsqrt %270 : vector<16x1xf32>
    %272 = vector.broadcast %271 : vector<16x1xf32> to vector<16x32xf32>
    %273 = arith.mulf %263, %272 : vector<16x32xf32>
    %274 = vector.broadcast %255 : vector<1x32xf32> to vector<16x32xf32>
    %275 = arith.mulf %273, %274 : vector<16x32xf32>
    %276 = vector.broadcast %257 : vector<1x32xf32> to vector<16x32xf32>
    %277 = arith.addf %275, %276 : vector<16x32xf32>
    %c0_104 = arith.constant 0 : index
    %c0_105 = arith.constant 0 : index
    %c0_106 = arith.constant 0 : index
    %278 = vector.load %arg20[%c0_104, %c0_105, %c0_106] : memref<1x16x32xf32, #tpu.memory_space<vmem>>, vector<1x16x32xf32>
    %279 = vector.shape_cast %278 : vector<1x16x32xf32> to vector<16x32xf32>
    %280 = vector.shape_cast %277 : vector<16x32xf32> to vector<1x16x32xf32>
    tpu.vector_store %arg20[%c0_104, %c0_105, %c0_106], %280 {strides = array<i32>} : memref<1x16x32xf32, #tpu.memory_space<vmem>>, vector<1x16x32xf32>,
    return
  }
  func.func @transform_0(%arg0: i32, %arg1: i32) -> (i32, i32, i32) {
    %c0_i32 = arith.constant 0 : i32
    %c0_i32_0 = arith.constant 0 : i32
    %c0_i32_1 = arith.constant 0 : i32
    return %arg0, %c0_i32, %c0_i32_0 : i32, i32, i32
  }
  func.func @transform_1(%arg0: i32, %arg1: i32) -> (i32, i32, i32) {
    %c0_i32 = arith.constant 0 : i32
    %c0_i32_0 = arith.constant 0 : i32
    %c0_i32_1 = arith.constant 0 : i32
    return %arg0, %c0_i32, %c0_i32_0 : i32, i32, i32
  }
  func.func @transform_2(%arg0: i32, %arg1: i32) -> (i32, i32, i32) {
    %c0_i32 = arith.constant 0 : i32
    %c0_i32_0 = arith.constant 0 : i32
    %c0_i32_1 = arith.constant 0 : i32
    return %arg1, %c0_i32, %c0_i32_0 : i32, i32, i32
  }
  func.func @transform_3(%arg0: i32, %arg1: i32) -> (i32, i32, i32) {
    %c0_i32 = arith.constant 0 : i32
    %c0_i32_0 = arith.constant 0 : i32
    %c0_i32_1 = arith.constant 0 : i32
    return %arg1, %c0_i32, %c0_i32_0 : i32, i32, i32
  }
  func.func @transform_4(%arg0: i32, %arg1: i32) -> (i32, i32, i32) {
    %c0_i32 = arith.constant 0 : i32
    %c0_i32_0 = arith.constant 0 : i32
    %c0_i32_1 = arith.constant 0 : i32
    return %arg1, %c0_i32, %c0_i32_0 : i32, i32, i32
  }
  func.func @transform_5(%arg0: i32, %arg1: i32) -> (i32, i32, i32) {
    %c0_i32 = arith.constant 0 : i32
    %c0_i32_0 = arith.constant 0 : i32
    %c0_i32_1 = arith.constant 0 : i32
    return %arg1, %c0_i32, %c0_i32_0 : i32, i32, i32
  }
  func.func @transform_6(%arg0: i32, %arg1: i32) -> (i32, i32, i32) {
    %c0_i32 = arith.constant 0 : i32
    %c0_i32_0 = arith.constant 0 : i32
    %c0_i32_1 = arith.constant 0 : i32
    return %arg1, %c0_i32, %c0_i32_0 : i32, i32, i32
  }
  func.func @transform_7(%arg0: i32, %arg1: i32) -> (i32, i32, i32) {
    %c0_i32 = arith.constant 0 : i32
    %c0_i32_0 = arith.constant 0 : i32
    %c0_i32_1 = arith.constant 0 : i32
    return %arg1, %c0_i32, %c0_i32_0 : i32, i32, i32
  }
  func.func @transform_8(%arg0: i32, %arg1: i32) -> (i32, i32, i32) {
    %c0_i32 = arith.constant 0 : i32
    %c0_i32_0 = arith.constant 0 : i32
    %c0_i32_1 = arith.constant 0 : i32
    return %arg1, %c0_i32, %c0_i32_0 : i32, i32, i32
  }
  func.func @transform_9(%arg0: i32, %arg1: i32) -> (i32, i32, i32) {
    %c0_i32 = arith.constant 0 : i32
    %c0_i32_0 = arith.constant 0 : i32
    %c0_i32_1 = arith.constant 0 : i32
    return %arg1, %c0_i32, %c0_i32_0 : i32, i32, i32
  }
  func.func @transform_10(%arg0: i32, %arg1: i32) -> (i32, i32, i32) {
    %c0_i32 = arith.constant 0 : i32
    %c0_i32_0 = arith.constant 0 : i32
    %c0_i32_1 = arith.constant 0 : i32
    return %arg1, %c0_i32, %c0_i32_0 : i32, i32, i32
  }
  func.func @transform_11(%arg0: i32, %arg1: i32) -> (i32, i32, i32) {
    %c0_i32 = arith.constant 0 : i32
    %c0_i32_0 = arith.constant 0 : i32
    %c0_i32_1 = arith.constant 0 : i32
    return %arg1, %c0_i32, %c0_i32_0 : i32, i32, i32
  }
  func.func @transform_12(%arg0: i32, %arg1: i32) -> (i32, i32, i32) {
    %c0_i32 = arith.constant 0 : i32
    %c0_i32_0 = arith.constant 0 : i32
    %c0_i32_1 = arith.constant 0 : i32
    return %arg1, %c0_i32, %c0_i32_0 : i32, i32, i32
  }
  func.func @transform_13(%arg0: i32, %arg1: i32) -> (i32, i32, i32) {
    %c0_i32 = arith.constant 0 : i32
    %c0_i32_0 = arith.constant 0 : i32
    %c0_i32_1 = arith.constant 0 : i32
    return %arg1, %c0_i32, %c0_i32_0 : i32, i32, i32
  }
  func.func @transform_14(%arg0: i32, %arg1: i32) -> (i32, i32, i32) {
    %c0_i32 = arith.constant 0 : i32
    %c0_i32_0 = arith.constant 0 : i32
    %c0_i32_1 = arith.constant 0 : i32
    return %arg1, %c0_i32, %c0_i32_0 : i32, i32, i32
  }
  func.func @transform_15(%arg0: i32, %arg1: i32) -> (i32, i32, i32) {
    %c0_i32 = arith.constant 0 : i32
    %c0_i32_0 = arith.constant 0 : i32
    %c0_i32_1 = arith.constant 0 : i32
    return %arg1, %c0_i32, %c0_i32_0 : i32, i32, i32
  }
  func.func @transform_16(%arg0: i32, %arg1: i32) -> (i32, i32, i32) {
    %c0_i32 = arith.constant 0 : i32
    %c0_i32_0 = arith.constant 0 : i32
    %c0_i32_1 = arith.constant 0 : i32
    return %arg1, %c0_i32, %c0_i32_0 : i32, i32, i32
  }
  func.func @transform_17(%arg0: i32, %arg1: i32) -> (i32, i32, i32) {
    %c0_i32 = arith.constant 0 : i32
    %c0_i32_0 = arith.constant 0 : i32
    %c0_i32_1 = arith.constant 0 : i32
    return %arg1, %c0_i32, %c0_i32_0 : i32, i32, i32
  }
  func.func @transform_18(%arg0: i32, %arg1: i32) -> (i32, i32, i32) {
    %c0_i32 = arith.constant 0 : i32
    %c0_i32_0 = arith.constant 0 : i32
    %c0_i32_1 = arith.constant 0 : i32
    return %arg0, %c0_i32, %c0_i32_0 : i32, i32, i32
  }
}

</mosaic_0001>

<llo_original>
// kernel: bottom_up_top_down_encoder.3
$region0: #{bottom_up_top_down_encoder.3}
  #allocation0 [shape = 'u32[]', space=smem, size = 0x4, offset = 0x4, fixed_abs, tag = 'smem constant byte address 0x4 - core index']
  #allocation1 [shape = 'u32[144,128]{1,0:T(1,128)}', space=vmem, size = 0x12000, scoped, tag = 'internal scratch']
  %s0 = inlined_call_operand.vmem [shape: f32[2,16,32], index: 0, kind: input, shape index: {}]
  %s1 = inlined_call_operand.vmem [shape: bf16[2,32,96], index: 1, kind: input, shape index: {}]
  %s2 = inlined_call_operand.vmem [shape: f32[2,1,96], index: 2, kind: input, shape index: {}]
  %s3 = inlined_call_operand.vmem [shape: f32[2,1,32], index: 3, kind: input, shape index: {}]
  %s4 = inlined_call_operand.vmem [shape: f32[2,1,32], index: 4, kind: input, shape index: {}]
  %s5 = inlined_call_operand.vmem [shape: f32[2,16,32], index: 5, kind: output, shape index: {}]
  %s6 = sld [smem:[#allocation0]]
  $region57: #{bottom_up_top_down_encoder.3} parent=0
    _
  %s8 = ssub.s32 1, %s6
  %s9 = scalar_select 0, %s8, %s6
  loop: start=0, step=1, limit=6
  $region2: #{bottom_up_top_down_encoder.3} parent=0 // loop_pre_header
    _
  $region3: #{bottom_up_top_down_encoder.3} parent=0 // loop_header
    %s11 = sphi 0, %s15
    %p12 = scmp.ge.s32.totalorder %s11, 6
    %s18 = sphi 0, %s30
    %s19 = sphi 0, %s26
    %s20 = sphi 0, %s18
    %s21 = sphi 0, %s19
    %s22 = sphi 0, %s20
    %s23 = sphi 0, %s21
    %s33 = sphi 0, %s35
    %s36 = sphi 0, %s33
    %s37 = sphi 0, %s36
    %s53 = sphi 0, %s37
    %s59 = sphi 0, %s61
    %s62 = sphi 0, %s59
    %s63 = sphi 0, %s62
    %s79 = sphi 0, %s63
    %s85 = sphi 0, %s87
    %s88 = sphi 0, %s85
    %s89 = sphi 0, %s88
    %s105 = sphi 0, %s89
    %s111 = sphi 0, %s113
    %s114 = sphi 0, %s111
    %s115 = sphi 0, %s114
    %s131 = sphi 0, %s115
    %s137 = sphi 0, %s139
    %s140 = sphi 0, %s137
    %s141 = sphi 0, %s140
    %s157 = sphi 0, %s141
    %s163 = sphi 0, %s165
    %s166 = sphi 0, %s163
    %s167 = sphi 0, %s166
    %s183 = sphi 0, %s167
  $region4: #{bottom_up_top_down_encoder.3} parent=0 // loop_header_branch
    %14 = sbr.rel (%p12) target = $region8
  $region5: #{bottom_up_top_down_encoder.3} parent=0 // loop_body
    %s16 = ssub.s32 %s11, 1
    %s17 = ssub.s32 %s11, 2
    %s24 = sadd.s32 1, %s19
    %p25 = scmp.ge.s32.totalorder %s24, 2
    %s26 = scalar_select %p25, 0, %s24
    %s27 = sadd.s32 1, %s18
    %s28 = scalar_select %p25, %s27, %s18
    %p29 = scmp.ge.s32.totalorder %s28, 2
    %s30 = scalar_select %p29, 0, %s28
    %s31 = ssub.s32 %s18, %s30
    %p32 = scmp.eq.s32.totalorder %s31, 0
    %s34 = sadd.s32 %s33, 1
    %s35 = scalar_select %p32, %s33, %s34
    %p38 = pneg %p32
    %p39 = scmp.eq.s32.totalorder %s11, 3
    %p40 = por %p38, %p39
    %p41 = scmp.ne.s32.totalorder %s33, %s36
    %p42 = scmp.eq.s32.totalorder %s11, 0
    %p43 = por %p41, %p42
    %p44 = scmp.ne.s32.totalorder %s33, %s36
    %p45 = scmp.eq.s32.totalorder %s16, 3
    %p46 = por %p44, %p45
    %p47 = scmp.ne.s32.totalorder %s36, %s37
    %p48 = scmp.eq.s32.totalorder %s16, 0
    %p49 = por %p47, %p48
    %p50 = scmp.ne.s32.totalorder %s36, %s37
    %p51 = scmp.eq.s32.totalorder %s17, 3
    %p52 = por %p50, %p51
    %p54 = scmp.ne.s32.totalorder %s37, %s53
    %p55 = scmp.eq.s32.totalorder %s17, 0
    %p56 = por %p54, %p55
    %s57 = ssub.s32 %s19, %s26
    %p58 = scmp.eq.s32.totalorder %s57, 0
    %s60 = sadd.s32 %s59, 1
    %s61 = scalar_select %p58, %s59, %s60
    %p64 = pneg %p58
    %p65 = scmp.eq.s32.totalorder %s11, 3
    %p66 = por %p64, %p65
    %p67 = scmp.ne.s32.totalorder %s59, %s62
    %p68 = scmp.eq.s32.totalorder %s11, 0
    %p69 = por %p67, %p68
    %p70 = scmp.ne.s32.totalorder %s59, %s62
    %p71 = scmp.eq.s32.totalorder %s16, 3
    %p72 = por %p70, %p71
    %p73 = scmp.ne.s32.totalorder %s62, %s63
    %p74 = scmp.eq.s32.totalorder %s16, 0
    %p75 = por %p73, %p74
    %p76 = scmp.ne.s32.totalorder %s62, %s63
    %p77 = scmp.eq.s32.totalorder %s17, 3
    %p78 = por %p76, %p77
    %p80 = scmp.ne.s32.totalorder %s63, %s79
    %p81 = scmp.eq.s32.totalorder %s17, 0
    %p82 = por %p80, %p81
    %s83 = ssub.s32 %s19, %s26
    %p84 = scmp.eq.s32.totalorder %s83, 0
    %s86 = sadd.s32 %s85, 1
    %s87 = scalar_select %p84, %s85, %s86
    %p90 = pneg %p84
    %p91 = scmp.eq.s32.totalorder %s11, 3
    %p92 = por %p90, %p91
    %p93 = scmp.ne.s32.totalorder %s85, %s88
    %p94 = scmp.eq.s32.totalorder %s11, 0
    %p95 = por %p93, %p94
    %p96 = scmp.ne.s32.totalorder %s85, %s88
    %p97 = scmp.eq.s32.totalorder %s16, 3
    %p98 = por %p96, %p97
    %p99 = scmp.ne.s32.totalorder %s88, %s89
    %p100 = scmp.eq.s32.totalorder %s16, 0
    %p101 = por %p99, %p100
    %p102 = scmp.ne.s32.totalorder %s88, %s89
    %p103 = scmp.eq.s32.totalorder %s17, 3
    %p104 = por %p102, %p103
    %p106 = scmp.ne.s32.totalorder %s89, %s105
    %p107 = scmp.eq.s32.totalorder %s17, 0
    %p108 = por %p106, %p107
    %s109 = ssub.s32 %s19, %s26
    %p110 = scmp.eq.s32.totalorder %s109, 0
    %s112 = sadd.s32 %s111, 1
    %s113 = scalar_select %p110, %s111, %s112
    %p116 = pneg %p110
    %p117 = scmp.eq.s32.totalorder %s11, 3
    %p118 = por %p116, %p117
    %p119 = scmp.ne.s32.totalorder %s111, %s114
    %p120 = scmp.eq.s32.totalorder %s11, 0
    %p121 = por %p119, %p120
    %p122 = scmp.ne.s32.totalorder %s111, %s114
    %p123 = scmp.eq.s32.totalorder %s16, 3
    %p124 = por %p122, %p123
    %p125 = scmp.ne.s32.totalorder %s114, %s115
    %p126 = scmp.eq.s32.totalorder %s16, 0
    %p127 = por %p125, %p126
    %p128 = scmp.ne.s32.totalorder %s114, %s115
    %p129 = scmp.eq.s32.totalorder %s17, 3
    %p130 = por %p128, %p129
    %p132 = scmp.ne.s32.totalorder %s115, %s131
    %p133 = scmp.eq.s32.totalorder %s17, 0
    %p134 = por %p132, %p133
    %s135 = ssub.s32 %s19, %s26
    %p136 = scmp.eq.s32.totalorder %s135, 0
    %s138 = sadd.s32 %s137, 1
    %s139 = scalar_select %p136, %s137, %s138
    %p142 = pneg %p136
    %p143 = scmp.eq.s32.totalorder %s11, 3
    %p144 = por %p142, %p143
    %p145 = scmp.ne.s32.totalorder %s137, %s140
    %p146 = scmp.eq.s32.totalorder %s11, 0
    %p147 = por %p145, %p146
    %p148 = scmp.ne.s32.totalorder %s137, %s140
    %p149 = scmp.eq.s32.totalorder %s16, 3
    %p150 = por %p148, %p149
    %p151 = scmp.ne.s32.totalorder %s140, %s141
    %p152 = scmp.eq.s32.totalorder %s16, 0
    %p153 = por %p151, %p152
    %p154 = scmp.ne.s32.totalorder %s140, %s141
    %p155 = scmp.eq.s32.totalorder %s17, 3
    %p156 = por %p154, %p155
    %p158 = scmp.ne.s32.totalorder %s141, %s157
    %p159 = scmp.eq.s32.totalorder %s17, 0
    %p160 = por %p158, %p159
    %s161 = ssub.s32 %s18, %s30
    %p162 = scmp.eq.s32.totalorder %s161, 0
    %s164 = sadd.s32 %s163, 1
    %s165 = scalar_select %p162, %s163, %s164
    %p168 = pneg %p162
    %p169 = scmp.eq.s32.totalorder %s11, 3
    %p170 = por %p168, %p169
    %p171 = scmp.ne.s32.totalorder %s163, %s166
    %p172 = scmp.eq.s32.totalorder %s11, 0
    %p173 = por %p171, %p172
    %p174 = scmp.ne.s32.totalorder %s163, %s166
    %p175 = scmp.eq.s32.totalorder %s16, 3
    %p176 = por %p174, %p175
    %p177 = scmp.ne.s32.totalorder %s166, %s167
    %p178 = scmp.eq.s32.totalorder %s16, 0
    %p179 = por %p177, %p178
    %p180 = scmp.ne.s32.totalorder %s166, %s167
    %p181 = scmp.eq.s32.totalorder %s17, 3
    %p182 = por %p180, %p181
    %p184 = scmp.ne.s32.totalorder %s167, %s183
    %p185 = scmp.eq.s32.totalorder %s17, 0
    %p186 = por %p184, %p185
    %p187 = scmp.le.s32.totalorder 1, %s11
    %p188 = scmp.lt.s32.totalorder %s11, 5
    %p189 = pnand %p187, %p188
    %p190 = pneg %p189
    // Predicated region
    $region9: #{bottom_up_top_down_encoder.3} parent=5 // pred_check
      _
    $region10: #{bottom_up_top_down_encoder.3} parent=5 // pred_check_branch
      %192 = sbr.rel (%p189) target = $region12
    $region11: #{bottom_up_top_down_encoder.3} parent=5 // pred_region
      %s193 = ssub.s32 %s11, 1
    $region12: #{bottom_up_top_down_encoder.3} parent=5 // pred_fallthru
      _
    %p194 = scmp.lt.s32.totalorder %s11, 4
    // Predicated region
    $region13: #{bottom_up_top_down_encoder.3} parent=5 // pred_check
      %p195 = pneg %p194
    $region14: #{bottom_up_top_down_encoder.3} parent=5 // pred_check_branch
      %197 = sbr.rel (%p195) target = $region16
    $region15: #{bottom_up_top_down_encoder.3} parent=5 // pred_region
      // Predicated region
      $region17: #{bottom_up_top_down_encoder.3} parent=15 // pred_check
        %p198 = pneg %p43
      $region18: #{bottom_up_top_down_encoder.3} parent=15 // pred_check_branch
        %200 = sbr.rel (%p198) target = $region20
      $region19: #{bottom_up_top_down_encoder.3} parent=15 // pred_region
        %p201 = scmp.lt.s32.totalorder %s18, 1
        %s202 = scalar_select %p201, %s18, 1
        %s203 = smul.addr %s202, 2
        %s204 = smul.addr %s203, 8
        %s205 = scalar_lea.vmem %s0, %s204
      $region20: #{bottom_up_top_down_encoder.3} parent=15 // pred_fallthru
        _
      // Predicated region
      $region21: #{bottom_up_top_down_encoder.3} parent=15 // pred_check
        %p206 = pneg %p69
      $region22: #{bottom_up_top_down_encoder.3} parent=15 // pred_check_branch
        %208 = sbr.rel (%p206) target = $region24
      $region23: #{bottom_up_top_down_encoder.3} parent=15 // pred_region
        %p209 = scmp.lt.s32.totalorder %s19, 1
        %s210 = scalar_select %p209, %s19, 1
        %s211 = smul.addr %s210, 4
        %s212 = smul.addr %s211, 4
        %s213 = scalar_lea.vmem %s1, %s212
      $region24: #{bottom_up_top_down_encoder.3} parent=15 // pred_fallthru
        _
      // Predicated region
      $region25: #{bottom_up_top_down_encoder.3} parent=15 // pred_check
        %p214 = pneg %p95
      $region26: #{bottom_up_top_down_encoder.3} parent=15 // pred_check_branch
        %216 = sbr.rel (%p214) target = $region28
      $region27: #{bottom_up_top_down_encoder.3} parent=15 // pred_region
        %p217 = scmp.lt.s32.totalorder %s19, 1
        %s218 = scalar_select %p217, %s19, 1
        %s219 = scalar_lea.vmem %s2, %s218
      $region28: #{bottom_up_top_down_encoder.3} parent=15 // pred_fallthru
        _
      // Predicated region
      $region29: #{bottom_up_top_down_encoder.3} parent=15 // pred_check
        %p220 = pneg %p121
      $region30: #{bottom_up_top_down_encoder.3} parent=15 // pred_check_branch
        %222 = sbr.rel (%p220) target = $region32
      $region31: #{bottom_up_top_down_encoder.3} parent=15 // pred_region
        %p223 = scmp.lt.s32.totalorder %s19, 1
        %s224 = scalar_select %p223, %s19, 1
        %s225 = scalar_lea.vmem %s3, %s224
      $region32: #{bottom_up_top_down_encoder.3} parent=15 // pred_fallthru
        _
      // Predicated region
      $region33: #{bottom_up_top_down_encoder.3} parent=15 // pred_check
        %p226 = pneg %p147
      $region34: #{bottom_up_top_down_encoder.3} parent=15 // pred_check_branch
        %228 = sbr.rel (%p226) target = $region36
      $region35: #{bottom_up_top_down_encoder.3} parent=15 // pred_region
        %p229 = scmp.lt.s32.totalorder %s19, 1
        %s230 = scalar_select %p229, %s19, 1
        %s231 = scalar_lea.vmem %s4, %s230
      $region36: #{bottom_up_top_down_encoder.3} parent=15 // pred_fallthru
        _
    $region16: #{bottom_up_top_down_encoder.3} parent=5 // pred_fallthru
      _
    %p232 = scmp.le.s32.totalorder 1, %s11
    %p233 = scmp.lt.s32.totalorder %s11, 5
    %p234 = pnand %p232, %p233
    %p235 = pneg %p234
    // Predicated region
    $region37: #{bottom_up_top_down_encoder.3} parent=5 // pred_check
      _
    $region38: #{bottom_up_top_down_encoder.3} parent=5 // pred_check_branch
      %237 = sbr.rel (%p234) target = $region40
    $region39: #{bottom_up_top_down_encoder.3} parent=5 // pred_region
      %s238 = ssub.s32 %s11, 1
      %p239 = scmp.lt.s32.totalorder %s20, 1
      %s240 = scalar_select %p239, %s20, 1
      %s241 = smul.addr %s240, 2
      %s242 = smul.addr %s241, 8
      %s243 = scalar_lea.vmem %s0, %s242
      %p244 = pneg %p49
      %p245 = pneg %p46
      %p246 = scmp.lt.s32.totalorder %s21, 1
      %s247 = scalar_select %p246, %s21, 1
      %s248 = smul.addr %s247, 4
      %s249 = smul.addr %s248, 4
      %s250 = scalar_lea.vmem %s1, %s249
      %p251 = pneg %p75
      %p252 = pneg %p72
      %p253 = scmp.lt.s32.totalorder %s21, 1
      %s254 = scalar_select %p253, %s21, 1
      %s255 = scalar_lea.vmem %s2, %s254
      %p256 = pneg %p101
      %p257 = pneg %p98
      %p258 = scmp.lt.s32.totalorder %s21, 1
      %s259 = scalar_select %p258, %s21, 1
      %s260 = scalar_lea.vmem %s3, %s259
      %p261 = pneg %p127
      %p262 = pneg %p124
      %p263 = scmp.lt.s32.totalorder %s21, 1
      %s264 = scalar_select %p263, %s21, 1
      %s265 = scalar_lea.vmem %s4, %s264
      %p266 = pneg %p153
      %p267 = pneg %p150
      %p268 = pneg %p179
      %p269 = pneg %p176
      %p270 = scmp.lt.s32.totalorder %s20, 1
      %s271 = scalar_select %p270, %s20, 1
      %s272 = smul.addr %s271, 2
      %s273 = smul.addr %s272, 8
      %s274 = scalar_lea.vmem %s5, %s273
      %p275 = scmp.lt.s32.totalorder %s20, 1
      %s276 = scalar_select %p275, %s20, 1
      %s277 = smul.addr %s276, 2
      %s278 = smul.addr %s277, 8
      %s279 = scalar_lea.vmem %s0, %s278
      %p280 = scmp.lt.s32.totalorder %s21, 1
      %s281 = scalar_select %p280, %s21, 1
      %s282 = smul.addr %s281, 4
      %s283 = smul.addr %s282, 4
      %s284 = scalar_lea.vmem %s1, %s283
      %p285 = scmp.lt.s32.totalorder %s21, 1
      %s286 = scalar_select %p285, %s21, 1
      %s287 = scalar_lea.vmem %s2, %s286
      %p288 = scmp.lt.s32.totalorder %s21, 1
      %s289 = scalar_select %p288, %s21, 1
      %s290 = scalar_lea.vmem %s3, %s289
      %p291 = scmp.lt.s32.totalorder %s21, 1
      %s292 = scalar_select %p291, %s21, 1
      %s293 = scalar_lea.vmem %s4, %s292
      %p294 = scmp.lt.s32.totalorder %s20, 1
      %s295 = scalar_select %p294, %s20, 1
      %s296 = smul.addr %s295, 2
      %s297 = smul.addr %s296, 8
      %s298 = scalar_lea.vmem %s5, %s297
      %p300 = scmp.eq.s32.totalorder %s21, 0
      // Predicated region
      $region41: #{bottom_up_top_down_encoder.3} parent=39 // pred_check
        %p301 = pneg %p300
      $region42: #{bottom_up_top_down_encoder.3} parent=39 // pred_check_branch
        %303 = sbr.rel (%p301) target = $region44
      $region43: #{bottom_up_top_down_encoder.3} parent=39 // pred_region
        %v304 = vld [vmem:[%s279] sm:$0xff]
        %v305 = vld [vmem:[%s279 + $0x8] sm:$0xff]
        %vm306 = vcmask 261120
        %307 = vst.msk [vmem:[%s298] sm:$0xff] %vm306, %v304
        %308 = vst.msk [vmem:[%s298 + $0x8] sm:$0xff] %vm306, %v305
      $region44: #{bottom_up_top_down_encoder.3} parent=39 // pred_fallthru
        _
      %v309 = vld [vmem:[%s298] sm:$0xff]
      %v310 = vld [vmem:[%s298 + $0x8] sm:$0xff]
      %v311 = vpack.c.bf16 %v310, %v309
      %v312 = vld [vmem:[%s284] sm:$0xf]
      %v313 = vld [vmem:[%s284 + $0x4] sm:$0xf]
      %v314 = vld [vmem:[%s284 + $0x8] sm:$0xf]
      %v315 = vld [vmem:[%s284 + $0xc] sm:$0xf]
      %v316 = vld [vmem:[%s287] sm:$0x1]
      %v318 = vlaneseq
      %v319 = vshrl.u32 %v318, 7
      %v320 = vsub.s32 0, %v319
      %v321 = vrot.slane %v316, %v320
      %v327 = vunpack.c.l.b16 %v312
      %v328 = vunpack.c.l.b16 %v313
      %v329 = vunpack.c.l.b16 %v314
      %v330 = vunpack.c.l.b16 %v315
      %v331 = vpack.c.b16 %v328, %v327
      %v332 = vpack.c.b16 %v330, %v329
      %vm335 = vcmask 261120
      %v337 = vsel %vm335, %v311, 0
      %339 = vmatprep.subr.bf16.mxu0 0
      %340 = vmatpush1.bf16.msra.mxu0 0
      %341 = vmatprep.subr.bf16.mxu0 0
      %342 = vmatpush1.bf16.msra.mxu0 0
      %343 = vmatprep.subr.bf16.mxu0 0
      %344 = vmatpush1.bf16.msra.mxu0 0
      %345 = vmatprep.subr.bf16.mxu0 0
      %346 = vmatpush1.bf16.msra.mxu0 0
      %347 = vmatprep.subr.bf16.mxu0 0
      %348 = vmatpush1.bf16.msra.mxu0 0
      %349 = vmatprep.subr.bf16.mxu0 0
      %350 = vmatpush1.bf16.msra.mxu0 0
      %351 = vmatprep.subr.bf16.mxu0 0
      %352 = vmatpush1.bf16.msra.mxu0 %v332
      %353 = vmatprep.subr.bf16.mxu0 0
      %354 = vmatpush1.bf16.msra.mxu0 %v331
      %355 = vmatprep.subr.bf16.mxu0 0
      %356 = vmatpush2.bf16.msra.mxu0 0
      %357 = vmatprep.subr.bf16.mxu0 0
      %358 = vmatpush2.bf16.msra.mxu0 0
      %359 = vmatprep.subr.bf16.mxu0 0
      %360 = vmatpush2.bf16.msra.mxu0 0
      %361 = vmatprep.subr.bf16.mxu0 0
      %362 = vmatpush2.bf16.msra.mxu0 0
      %363 = vmatprep.subr.bf16.mxu0 0
      %364 = vmatpush2.bf16.msra.mxu0 0
      %365 = vmatprep.subr.bf16.mxu0 0
      %366 = vmatpush2.bf16.msra.mxu0 0
      %367 = vmatprep.subr.bf16.mxu0 0
      %368 = vmatpush2.bf16.msra.mxu0 0
      %369 = vmatprep.subr.bf16.mxu0 0
      %370 = vmatpush2.bf16.msra.mxu0 0
      %371 = vmatprep.mubr.bf16.mxu0 0
      %372 = vmatmul.mubr.bf16.gmra.mxu0 %v337
      %v373 = vpop.f32.mrf.mxu0
      %v374 = vadd.f32 %v321, %v373
      %v375 = vpop.f32.mrf.mxu0
      %v376 = vpop.f32.mrf.mxu0
      %v377 = vadd.f32 %v321, %v376
      %v378 = vpop.f32.mrf.mxu0
      %379 = vdwg.mxu0
      %v380 = vlaneseq
      %v381 = vshrl.u32 %v380, 7
      %v382 = vadd.s32 %v381, 8
      %v383 = vlaneseq
      %v384 = vand.u32 %v383, 127
      %v385 = vsub.s32 %v381, %v384
      %v386 = vsub.s32 %v382, %v384
      %vm387 = vcmp.lt.s32.totalorder %v385, 0
      %v388 = vsub.s32 0, %v385
      %v389 = vsel %vm387, %v388, %v385
      %vm390 = vcmp.lt.s32.totalorder %v386, 0
      %v391 = vsub.s32 0, %v386
      %v392 = vsel %vm390, %v391, %v386
      %vm393 = vcmp.le.s32.totalorder %v389, 4
      %vm394 = vcmp.le.s32.totalorder %v392, 4
      %v395 = vsel %vm393, 0.0, -1e+09
      %v396 = vsel %vm394, 0.0, -1e+09
      %v397 = vpack.c.bf16 %v377, %v374
      %399 = vrot.lane.b32.xlu0 %v397, 96
      %v400 = vpop.permute.xlu0 %399
      %vm401 = vcmask 64512
      %v403 = vsel %vm401, %v397, 0
      %v406 = vsel %vm401, %v400, 0
      %408 = vmatprep.subr.bf16.mxu0 0
      %409 = vmatpush1.bf16.xpose.msra.mxu0 0
      %410 = vmatprep.subr.bf16.mxu0 0
      %411 = vmatpush1.bf16.xpose.msra.mxu0 0
      %412 = vmatprep.subr.bf16.mxu0 0
      %413 = vmatpush1.bf16.xpose.msra.mxu0 0
      %414 = vmatprep.subr.bf16.mxu0 0
      %415 = vmatpush1.bf16.xpose.msra.mxu0 0
      %416 = vmatprep.subr.bf16.mxu0 0
      %417 = vmatpush1.bf16.xpose.msra.mxu0 0
      %418 = vmatprep.subr.bf16.mxu0 0
      %419 = vmatpush1.bf16.xpose.msra.mxu0 0
      %420 = vmatprep.subr.bf16.mxu0 0
      %421 = vmatpush1.bf16.xpose.msra.mxu0 0
      %422 = vmatprep.subr.bf16.mxu0 0
      %423 = vmatpush1.bf16.xpose.msra.mxu0 %v406
      %424 = vmatprep.subr.bf16.mxu0 0
      %425 = vmatpush2.bf16.xpose.msra.mxu0 0
      %426 = vmatprep.subr.bf16.mxu0 0
      %427 = vmatpush2.bf16.xpose.msra.mxu0 0
      %428 = vmatprep.subr.bf16.mxu0 0
      %429 = vmatpush2.bf16.xpose.msra.mxu0 0
      %430 = vmatprep.subr.bf16.mxu0 0
      %431 = vmatpush2.bf16.xpose.msra.mxu0 0
      %432 = vmatprep.subr.bf16.mxu0 0
      %433 = vmatpush2.bf16.xpose.msra.mxu0 0
      %434 = vmatprep.subr.bf16.mxu0 0
      %435 = vmatpush2.bf16.xpose.msra.mxu0 0
      %436 = vmatprep.subr.bf16.mxu0 0
      %437 = vmatpush2.bf16.xpose.msra.mxu0 0
      %438 = vmatprep.subr.bf16.mxu0 0
      %439 = vmatpush2.bf16.xpose.msra.mxu0 0
      %440 = vmatprep.mubr.bf16.mxu0 0
      %441 = vmatmul.mubr.bf16.gmra.mxu0 %v403
      %v442 = vpop.f32.mrf.mxu0
      %v443 = vadd.f32 %v395, %v442
      %v444 = vpop.f32.mrf.mxu0
      %v445 = vpop.f32.mrf.mxu0
      %v446 = vadd.f32 %v396, %v445
      %v447 = vpop.f32.mrf.mxu0
      %448 = vdwg.mxu0
      %vm449 = vcmask 130048
      %v450 = vsel %vm449, %v443, -inf
      %451 = vmax.xlane.f32.xlu0 %v450
      %v452 = vpop.xlane.xlu0 %451
      %v453 = vsel %vm449, %v446, -inf
      %454 = vmax.xlane.f32.xlu0 %v453
      %v455 = vpop.xlane.xlu0 %454
      %v456 = vsub.f32 %v443, %v452
      %v457 = vsub.f32 %v446, %v455
      %v458 = vmul.f32 %v456, 1.442695
      %v459 = vpow.pop %v458
      %v460 = vmul.f32 %v457, 1.442695
      %v461 = vpow.pop %v460
      %v462 = vsel %vm449, %v459, 0.0
      %463 = vadd.xlane.f32.xlu0 %v462
      %v464 = vpop.xlane.xlu0 %463
      %v465 = vsel %vm449, %v461, 0.0
      %466 = vadd.xlane.f32.xlu0 %v465
      %v467 = vpop.xlane.xlu0 %466
      %v468 = vrcp.pop %v464
      %v469 = vrcp.pop %v467
      %v470 = vmul.f32 %v459, %v468
      %v471 = vmul.f32 %v461, %v469
      %v472 = vpack.c.bf16 %v471, %v470
      %473 = vrot.lane.b32.xlu0 %v397, 64
      %v474 = vpop.permute.xlu0 %473
      %v477 = vsel %vm449, %v472, 0
      %479 = vmatprep.subr.bf16.mxu0 0
      %480 = vmatpush1.bf16.msra.mxu0 0
      %481 = vmatprep.subr.bf16.mxu0 0
      %482 = vmatpush1.bf16.msra.mxu0 0
      %483 = vmatprep.subr.bf16.mxu0 0
      %484 = vmatpush1.bf16.msra.mxu0 0
      %485 = vmatprep.subr.bf16.mxu0 0
      %486 = vmatpush1.bf16.msra.mxu0 0
      %487 = vmatprep.subr.bf16.mxu0 0
      %488 = vmatpush1.bf16.msra.mxu0 0
      %489 = vmatprep.subr.bf16.mxu0 0
      %490 = vmatpush1.bf16.msra.mxu0 0
      %491 = vmatprep.subr.bf16.mxu0 0
      %492 = vmatpush1.bf16.msra.mxu0 0
      %493 = vmatprep.subr.bf16.mxu0 0
      %494 = vmatpush1.bf16.msra.mxu0 %v474
      %495 = vmatprep.subr.bf16.mxu0 0
      %496 = vmatpush2.bf16.msra.mxu0 0
      %497 = vmatprep.subr.bf16.mxu0 0
      %498 = vmatpush2.bf16.msra.mxu0 0
      %499 = vmatprep.subr.bf16.mxu0 0
      %500 = vmatpush2.bf16.msra.mxu0 0
      %501 = vmatprep.subr.bf16.mxu0 0
      %502 = vmatpush2.bf16.msra.mxu0 0
      %503 = vmatprep.subr.bf16.mxu0 0
      %504 = vmatpush2.bf16.msra.mxu0 0
      %505 = vmatprep.subr.bf16.mxu0 0
      %506 = vmatpush2.bf16.msra.mxu0 0
      %507 = vmatprep.subr.bf16.mxu0 0
      %508 = vmatpush2.bf16.msra.mxu0 0
      %509 = vmatprep.subr.bf16.mxu0 0
      %510 = vmatpush2.bf16.msra.mxu0 0
      %511 = vmatprep.mubr.bf16.mxu0 0
      %512 = vmatmul.mubr.bf16.gmra.mxu0 %v477
      %v513 = vpop.f32.mrf.mxu0
      %v514 = vadd.f32 0.0, %v513
      %v515 = vpop.f32.mrf.mxu0
      %v516 = vpop.f32.mrf.mxu0
      %v517 = vadd.f32 0.0, %v516
      %v518 = vpop.f32.mrf.mxu0
      %519 = vdwg.mxu0
      %520 = vrot.lane.b32.xlu0 %v397, 120
      %v521 = vpop.permute.xlu0 %520
      %522 = vrot.lane.b32.xlu0 %v397, 88
      %v523 = vpop.permute.xlu0 %522
      %v525 = vsel %vm401, %v521, 0
      %v528 = vsel %vm401, %v523, 0
      %530 = vmatprep.subr.bf16.mxu0 0
      %531 = vmatpush1.bf16.xpose.msra.mxu0 0
      %532 = vmatprep.subr.bf16.mxu0 0
      %533 = vmatpush1.bf16.xpose.msra.mxu0 0
      %534 = vmatprep.subr.bf16.mxu0 0
      %535 = vmatpush1.bf16.xpose.msra.mxu0 0
      %536 = vmatprep.subr.bf16.mxu0 0
      %537 = vmatpush1.bf16.xpose.msra.mxu0 0
      %538 = vmatprep.subr.bf16.mxu0 0
      %539 = vmatpush1.bf16.xpose.msra.mxu0 0
      %540 = vmatprep.subr.bf16.mxu0 0
      %541 = vmatpush1.bf16.xpose.msra.mxu0 0
      %542 = vmatprep.subr.bf16.mxu0 0
      %543 = vmatpush1.bf16.xpose.msra.mxu0 0
      %544 = vmatprep.subr.bf16.mxu0 0
      %545 = vmatpush1.bf16.xpose.msra.mxu0 %v528
      %546 = vmatprep.subr.bf16.mxu0 0
      %547 = vmatpush2.bf16.xpose.msra.mxu0 0
      %548 = vmatprep.subr.bf16.mxu0 0
      %549 = vmatpush2.bf16.xpose.msra.mxu0 0
      %550 = vmatprep.subr.bf16.mxu0 0
      %551 = vmatpush2.bf16.xpose.msra.mxu0 0
      %552 = vmatprep.subr.bf16.mxu0 0
      %553 = vmatpush2.bf16.xpose.msra.mxu0 0
      %554 = vmatprep.subr.bf16.mxu0 0
      %555 = vmatpush2.bf16.xpose.msra.mxu0 0
      %556 = vmatprep.subr.bf16.mxu0 0
      %557 = vmatpush2.bf16.xpose.msra.mxu0 0
      %558 = vmatprep.subr.bf16.mxu0 0
      %559 = vmatpush2.bf16.xpose.msra.mxu0 0
      %560 = vmatprep.subr.bf16.mxu0 0
      %561 = vmatpush2.bf16.xpose.msra.mxu0 0
      %562 = vmatprep.mubr.bf16.mxu0 0
      %563 = vmatmul.mubr.bf16.gmra.mxu0 %v525
      %v564 = vpop.f32.mrf.mxu0
      %v565 = vadd.f32 %v395, %v564
      %v566 = vpop.f32.mrf.mxu0
      %v567 = vpop.f32.mrf.mxu0
      %v568 = vadd.f32 %v396, %v567
      %v569 = vpop.f32.mrf.mxu0
      %570 = vdwg.mxu0
      %v571 = vsel %vm449, %v565, -inf
      %572 = vmax.xlane.f32.xlu0 %v571
      %v573 = vpop.xlane.xlu0 %572
      %v574 = vsel %vm449, %v568, -inf
      %575 = vmax.xlane.f32.xlu0 %v574
      %v576 = vpop.xlane.xlu0 %575
      %v577 = vsub.f32 %v565, %v573
      %v578 = vsub.f32 %v568, %v576
      %v579 = vmul.f32 %v577, 1.442695
      %v580 = vpow.pop %v579
      %v581 = vmul.f32 %v578, 1.442695
      %v582 = vpow.pop %v581
      %v583 = vsel %vm449, %v580, 0.0
      %584 = vadd.xlane.f32.xlu0 %v583
      %v585 = vpop.xlane.xlu0 %584
      %v586 = vsel %vm449, %v582, 0.0
      %587 = vadd.xlane.f32.xlu0 %v586
      %v588 = vpop.xlane.xlu0 %587
      %v589 = vrcp.pop %v585
      %v590 = vrcp.pop %v588
      %v591 = vmul.f32 %v580, %v589
      %v592 = vmul.f32 %v582, %v590
      %v593 = vpack.c.bf16 %v592, %v591
      %594 = vrot.lane.b32.xlu0 %v397, 56
      %v595 = vpop.permute.xlu0 %594
      %v598 = vsel %vm449, %v593, 0
      %600 = vmatprep.subr.bf16.mxu0 0
      %601 = vmatpush1.bf16.msra.mxu0 0
      %602 = vmatprep.subr.bf16.mxu0 0
      %603 = vmatpush1.bf16.msra.mxu0 0
      %604 = vmatprep.subr.bf16.mxu0 0
      %605 = vmatpush1.bf16.msra.mxu0 0
      %606 = vmatprep.subr.bf16.mxu0 0
      %607 = vmatpush1.bf16.msra.mxu0 0
      %608 = vmatprep.subr.bf16.mxu0 0
      %609 = vmatpush1.bf16.msra.mxu0 0
      %610 = vmatprep.subr.bf16.mxu0 0
      %611 = vmatpush1.bf16.msra.mxu0 0
      %612 = vmatprep.subr.bf16.mxu0 0
      %613 = vmatpush1.bf16.msra.mxu0 0
      %614 = vmatprep.subr.bf16.mxu0 0
      %615 = vmatpush1.bf16.msra.mxu0 %v595
      %616 = vmatprep.subr.bf16.mxu0 0
      %617 = vmatpush2.bf16.msra.mxu0 0
      %618 = vmatprep.subr.bf16.mxu0 0
      %619 = vmatpush2.bf16.msra.mxu0 0
      %620 = vmatprep.subr.bf16.mxu0 0
      %621 = vmatpush2.bf16.msra.mxu0 0
      %622 = vmatprep.subr.bf16.mxu0 0
      %623 = vmatpush2.bf16.msra.mxu0 0
      %624 = vmatprep.subr.bf16.mxu0 0
      %625 = vmatpush2.bf16.msra.mxu0 0
      %626 = vmatprep.subr.bf16.mxu0 0
      %627 = vmatpush2.bf16.msra.mxu0 0
      %628 = vmatprep.subr.bf16.mxu0 0
      %629 = vmatpush2.bf16.msra.mxu0 0
      %630 = vmatprep.subr.bf16.mxu0 0
      %631 = vmatpush2.bf16.msra.mxu0 0
      %632 = vmatprep.mubr.bf16.mxu0 0
      %633 = vmatmul.mubr.bf16.gmra.mxu0 %v598
      %v634 = vpop.f32.mrf.mxu0
      %v635 = vadd.f32 0.0, %v634
      %v636 = vpop.f32.mrf.mxu0
      %v637 = vpop.f32.mrf.mxu0
      %v638 = vadd.f32 0.0, %v637
      %v639 = vpop.f32.mrf.mxu0
      %640 = vdwg.mxu0
      %641 = vrot.lane.b32.xlu0 %v397, 112
      %v642 = vpop.permute.xlu0 %641
      %643 = vrot.lane.b32.xlu0 %v397, 80
      %v644 = vpop.permute.xlu0 %643
      %v646 = vsel %vm401, %v642, 0
      %v649 = vsel %vm401, %v644, 0
      %651 = vmatprep.subr.bf16.mxu0 0
      %652 = vmatpush1.bf16.xpose.msra.mxu0 0
      %653 = vmatprep.subr.bf16.mxu0 0
      %654 = vmatpush1.bf16.xpose.msra.mxu0 0
      %655 = vmatprep.subr.bf16.mxu0 0
      %656 = vmatpush1.bf16.xpose.msra.mxu0 0
      %657 = vmatprep.subr.bf16.mxu0 0
      %658 = vmatpush1.bf16.xpose.msra.mxu0 0
      %659 = vmatprep.subr.bf16.mxu0 0
      %660 = vmatpush1.bf16.xpose.msra.mxu0 0
      %661 = vmatprep.subr.bf16.mxu0 0
      %662 = vmatpush1.bf16.xpose.msra.mxu0 0
      %663 = vmatprep.subr.bf16.mxu0 0
      %664 = vmatpush1.bf16.xpose.msra.mxu0 0
      %665 = vmatprep.subr.bf16.mxu0 0
      %666 = vmatpush1.bf16.xpose.msra.mxu0 %v649
      %667 = vmatprep.subr.bf16.mxu0 0
      %668 = vmatpush2.bf16.xpose.msra.mxu0 0
      %669 = vmatprep.subr.bf16.mxu0 0
      %670 = vmatpush2.bf16.xpose.msra.mxu0 0
      %671 = vmatprep.subr.bf16.mxu0 0
      %672 = vmatpush2.bf16.xpose.msra.mxu0 0
      %673 = vmatprep.subr.bf16.mxu0 0
      %674 = vmatpush2.bf16.xpose.msra.mxu0 0
      %675 = vmatprep.subr.bf16.mxu0 0
      %676 = vmatpush2.bf16.xpose.msra.mxu0 0
      %677 = vmatprep.subr.bf16.mxu0 0
      %678 = vmatpush2.bf16.xpose.msra.mxu0 0
      %679 = vmatprep.subr.bf16.mxu0 0
      %680 = vmatpush2.bf16.xpose.msra.mxu0 0
      %681 = vmatprep.subr.bf16.mxu0 0
      %682 = vmatpush2.bf16.xpose.msra.mxu0 0
      %683 = vmatprep.mubr.bf16.mxu0 0
      %684 = vmatmul.mubr.bf16.gmra.mxu0 %v646
      %v685 = vpop.f32.mrf.mxu0
      %v686 = vadd.f32 %v395, %v685
      %v687 = vpop.f32.mrf.mxu0
      %v688 = vpop.f32.mrf.mxu0
      %v689 = vadd.f32 %v396, %v688
      %v690 = vpop.f32.mrf.mxu0
      %691 = vdwg.mxu0
      %v692 = vsel %vm449, %v686, -inf
      %693 = vmax.xlane.f32.xlu0 %v692
      %v694 = vpop.xlane.xlu0 %693
      %v695 = vsel %vm449, %v689, -inf
      %696 = vmax.xlane.f32.xlu0 %v695
      %v697 = vpop.xlane.xlu0 %696
      %v698 = vsub.f32 %v686, %v694
      %v699 = vsub.f32 %v689, %v697
      %v700 = vmul.f32 %v698, 1.442695
      %v701 = vpow.pop %v700
      %v702 = vmul.f32 %v699, 1.442695
      %v703 = vpow.pop %v702
      %v704 = vsel %vm449, %v701, 0.0
      %705 = vadd.xlane.f32.xlu0 %v704
      %v706 = vpop.xlane.xlu0 %705
      %v707 = vsel %vm449, %v703, 0.0
      %708 = vadd.xlane.f32.xlu0 %v707
      %v709 = vpop.xlane.xlu0 %708
      %v710 = vrcp.pop %v706
      %v711 = vrcp.pop %v709
      %v712 = vmul.f32 %v701, %v710
      %v713 = vmul.f32 %v703, %v711
      %v714 = vpack.c.bf16 %v713, %v712
      %715 = vrot.lane.b32.xlu0 %v397, 48
      %v716 = vpop.permute.xlu0 %715
      %v719 = vsel %vm449, %v714, 0
      %721 = vmatprep.subr.bf16.mxu0 0
      %722 = vmatpush1.bf16.msra.mxu0 0
      %723 = vmatprep.subr.bf16.mxu0 0
      %724 = vmatpush1.bf16.msra.mxu0 0
      %725 = vmatprep.subr.bf16.mxu0 0
      %726 = vmatpush1.bf16.msra.mxu0 0
      %727 = vmatprep.subr.bf16.mxu0 0
      %728 = vmatpush1.bf16.msra.mxu0 0
      %729 = vmatprep.subr.bf16.mxu0 0
      %730 = vmatpush1.bf16.msra.mxu0 0
      %731 = vmatprep.subr.bf16.mxu0 0
      %732 = vmatpush1.bf16.msra.mxu0 0
      %733 = vmatprep.subr.bf16.mxu0 0
      %734 = vmatpush1.bf16.msra.mxu0 0
      %735 = vmatprep.subr.bf16.mxu0 0
      %736 = vmatpush1.bf16.msra.mxu0 %v716
      %737 = vmatprep.subr.bf16.mxu0 0
      %738 = vmatpush2.bf16.msra.mxu0 0
      %739 = vmatprep.subr.bf16.mxu0 0
      %740 = vmatpush2.bf16.msra.mxu0 0
      %741 = vmatprep.subr.bf16.mxu0 0
      %742 = vmatpush2.bf16.msra.mxu0 0
      %743 = vmatprep.subr.bf16.mxu0 0
      %744 = vmatpush2.bf16.msra.mxu0 0
      %745 = vmatprep.subr.bf16.mxu0 0
      %746 = vmatpush2.bf16.msra.mxu0 0
      %747 = vmatprep.subr.bf16.mxu0 0
      %748 = vmatpush2.bf16.msra.mxu0 0
      %749 = vmatprep.subr.bf16.mxu0 0
      %750 = vmatpush2.bf16.msra.mxu0 0
      %751 = vmatprep.subr.bf16.mxu0 0
      %752 = vmatpush2.bf16.msra.mxu0 0
      %753 = vmatprep.mubr.bf16.mxu0 0
      %754 = vmatmul.mubr.bf16.gmra.mxu0 %v719
      %v755 = vpop.f32.mrf.mxu0
      %v756 = vadd.f32 0.0, %v755
      %v757 = vpop.f32.mrf.mxu0
      %v758 = vpop.f32.mrf.mxu0
      %v759 = vadd.f32 0.0, %v758
      %v760 = vpop.f32.mrf.mxu0
      %761 = vdwg.mxu0
      %762 = vrot.lane.b32.xlu0 %v397, 104
      %v763 = vpop.permute.xlu0 %762
      %764 = vrot.lane.b32.xlu0 %v397, 72
      %v765 = vpop.permute.xlu0 %764
      %v767 = vsel %vm401, %v763, 0
      %v770 = vsel %vm401, %v765, 0
      %772 = vmatprep.subr.bf16.mxu0 0
      %773 = vmatpush1.bf16.xpose.msra.mxu0 0
      %774 = vmatprep.subr.bf16.mxu0 0
      %775 = vmatpush1.bf16.xpose.msra.mxu0 0
      %776 = vmatprep.subr.bf16.mxu0 0
      %777 = vmatpush1.bf16.xpose.msra.mxu0 0
      %778 = vmatprep.subr.bf16.mxu0 0
      %779 = vmatpush1.bf16.xpose.msra.mxu0 0
      %780 = vmatprep.subr.bf16.mxu0 0
      %781 = vmatpush1.bf16.xpose.msra.mxu0 0
      %782 = vmatprep.subr.bf16.mxu0 0
      %783 = vmatpush1.bf16.xpose.msra.mxu0 0
      %784 = vmatprep.subr.bf16.mxu0 0
      %785 = vmatpush1.bf16.xpose.msra.mxu0 0
      %786 = vmatprep.subr.bf16.mxu0 0
      %787 = vmatpush1.bf16.xpose.msra.mxu0 %v770
      %788 = vmatprep.subr.bf16.mxu0 0
      %789 = vmatpush2.bf16.xpose.msra.mxu0 0
      %790 = vmatprep.subr.bf16.mxu0 0
      %791 = vmatpush2.bf16.xpose.msra.mxu0 0
      %792 = vmatprep.subr.bf16.mxu0 0
      %793 = vmatpush2.bf16.xpose.msra.mxu0 0
      %794 = vmatprep.subr.bf16.mxu0 0
      %795 = vmatpush2.bf16.xpose.msra.mxu0 0
      %796 = vmatprep.subr.bf16.mxu0 0
      %797 = vmatpush2.bf16.xpose.msra.mxu0 0
      %798 = vmatprep.subr.bf16.mxu0 0
      %799 = vmatpush2.bf16.xpose.msra.mxu0 0
      %800 = vmatprep.subr.bf16.mxu0 0
      %801 = vmatpush2.bf16.xpose.msra.mxu0 0
      %802 = vmatprep.subr.bf16.mxu0 0
      %803 = vmatpush2.bf16.xpose.msra.mxu0 0
      %804 = vmatprep.mubr.bf16.mxu0 0
      %805 = vmatmul.mubr.bf16.gmra.mxu0 %v767
      %v806 = vpop.f32.mrf.mxu0
      %v807 = vadd.f32 %v395, %v806
      %v808 = vpop.f32.mrf.mxu0
      %v809 = vpop.f32.mrf.mxu0
      %v810 = vadd.f32 %v396, %v809
      %v811 = vpop.f32.mrf.mxu0
      %812 = vdwg.mxu0
      %v813 = vsel %vm449, %v807, -inf
      %814 = vmax.xlane.f32.xlu0 %v813
      %v815 = vpop.xlane.xlu0 %814
      %v816 = vsel %vm449, %v810, -inf
      %817 = vmax.xlane.f32.xlu0 %v816
      %v818 = vpop.xlane.xlu0 %817
      %v819 = vsub.f32 %v807, %v815
      %v820 = vsub.f32 %v810, %v818
      %v821 = vmul.f32 %v819, 1.442695
      %v822 = vpow.pop %v821
      %v823 = vmul.f32 %v820, 1.442695
      %v824 = vpow.pop %v823
      %v825 = vsel %vm449, %v822, 0.0
      %826 = vadd.xlane.f32.xlu0 %v825
      %v827 = vpop.xlane.xlu0 %826
      %v828 = vsel %vm449, %v824, 0.0
      %829 = vadd.xlane.f32.xlu0 %v828
      %v830 = vpop.xlane.xlu0 %829
      %v831 = vrcp.pop %v827
      %v832 = vrcp.pop %v830
      %v833 = vmul.f32 %v822, %v831
      %v834 = vmul.f32 %v824, %v832
      %v835 = vpack.c.bf16 %v834, %v833
      %836 = vrot.lane.b32.xlu0 %v397, 40
      %v837 = vpop.permute.xlu0 %836
      %v840 = vsel %vm449, %v835, 0
      %842 = vmatprep.subr.bf16.mxu0 0
      %843 = vmatpush1.bf16.msra.mxu0 0
      %844 = vmatprep.subr.bf16.mxu0 0
      %845 = vmatpush1.bf16.msra.mxu0 0
      %846 = vmatprep.subr.bf16.mxu0 0
      %847 = vmatpush1.bf16.msra.mxu0 0
      %848 = vmatprep.subr.bf16.mxu0 0
      %849 = vmatpush1.bf16.msra.mxu0 0
      %850 = vmatprep.subr.bf16.mxu0 0
      %851 = vmatpush1.bf16.msra.mxu0 0
      %852 = vmatprep.subr.bf16.mxu0 0
      %853 = vmatpush1.bf16.msra.mxu0 0
      %854 = vmatprep.subr.bf16.mxu0 0
      %855 = vmatpush1.bf16.msra.mxu0 0
      %856 = vmatprep.subr.bf16.mxu0 0
      %857 = vmatpush1.bf16.msra.mxu0 %v837
      %858 = vmatprep.subr.bf16.mxu0 0
      %859 = vmatpush2.bf16.msra.mxu0 0
      %860 = vmatprep.subr.bf16.mxu0 0
      %861 = vmatpush2.bf16.msra.mxu0 0
      %862 = vmatprep.subr.bf16.mxu0 0
      %863 = vmatpush2.bf16.msra.mxu0 0
      %864 = vmatprep.subr.bf16.mxu0 0
      %865 = vmatpush2.bf16.msra.mxu0 0
      %866 = vmatprep.subr.bf16.mxu0 0
      %867 = vmatpush2.bf16.msra.mxu0 0
      %868 = vmatprep.subr.bf16.mxu0 0
      %869 = vmatpush2.bf16.msra.mxu0 0
      %870 = vmatprep.subr.bf16.mxu0 0
      %871 = vmatpush2.bf16.msra.mxu0 0
      %872 = vmatprep.subr.bf16.mxu0 0
      %873 = vmatpush2.bf16.msra.mxu0 0
      %874 = vmatprep.mubr.bf16.mxu0 0
      %875 = vmatmul.mubr.bf16.gmra.mxu0 %v840
      %v876 = vpop.f32.mrf.mxu0
      %v877 = vadd.f32 0.0, %v876
      %v878 = vpop.f32.mrf.mxu0
      %v879 = vpop.f32.mrf.mxu0
      %v880 = vadd.f32 0.0, %v879
      %v881 = vpop.f32.mrf.mxu0
      %882 = vdwg.mxu0
      %885 = vrot.lane.b32.xlu0 %v635, 8
      %v886 = vpop.permute.xlu0 %885
      %887 = vrot.lane.b32.xlu0 %v638, 8
      %v888 = vpop.permute.xlu0 %887
      %893 = vrot.lane.b32.xlu0 %v756, 16
      %v894 = vpop.permute.xlu0 %893
      %895 = vrot.lane.b32.xlu0 %v759, 16
      %v896 = vpop.permute.xlu0 %895
      %901 = vrot.lane.b32.xlu0 %v877, 24
      %v902 = vpop.permute.xlu0 %901
      %903 = vrot.lane.b32.xlu0 %v880, 24
      %v904 = vpop.permute.xlu0 %903
      %v907 = vsel %vm401, %v514, %v886
      %v908 = vsel %vm401, %v517, %v888
      %v909 = vsel %vm449, %v907, %v894
      %v910 = vsel %vm449, %v908, %v896
      %vm911 = vcmask 195584
      %v912 = vsel %vm911, %v909, %v902
      %v913 = vsel %vm911, %v910, %v904
      %v914 = vadd.f32 %v309, %v912
      %v915 = vadd.f32 %v310, %v913
      %v916 = vld [vmem:[%s290] sm:$0x1]
      %v917 = vld [vmem:[%s293] sm:$0x1]
      %v918 = vsel %vm335, %v914, 0.0
      %919 = vadd.xlane.f32.xlu0 %v918
      %v920 = vpop.xlane.xlu0 %919
      %v921 = vsel %vm335, %v915, 0.0
      %922 = vadd.xlane.f32.xlu0 %v921
      %v923 = vpop.xlane.xlu0 %922
      %v924 = vrcp.pop 32.0
      %v925 = vmul.f32 %v920, %v924
      %v926 = vmul.f32 %v923, %v924
      %v927 = vsub.f32 %v914, %v925
      %v928 = vsub.f32 %v915, %v926
      %v929 = vmul.f32 %v927, %v927
      %v930 = vmul.f32 %v928, %v928
      %v931 = vsel %vm335, %v929, 0.0
      %932 = vadd.xlane.f32.xlu0 %v931
      %v933 = vpop.xlane.xlu0 %932
      %v934 = vsel %vm335, %v930, 0.0
      %935 = vadd.xlane.f32.xlu0 %v934
      %v936 = vpop.xlane.xlu0 %935
      %v937 = vmul.f32 %v933, %v924
      %v938 = vmul.f32 %v936, %v924
      %v939 = vadd.f32 %v937, 1e-05
      %v940 = vadd.f32 %v938, 1e-05
      %v941 = vrsqrt.pop %v939
      %v942 = vrsqrt.pop %v940
      %v943 = vmul.f32 %v927, %v941
      %v944 = vmul.f32 %v928, %v942
      %v946 = vlaneseq
      %v947 = vshrl.u32 %v946, 7
      %v948 = vsub.s32 0, %v947
      %v949 = vrot.slane %v916, %v948
      %v951 = vmul.f32 %v943, %v949
      %v952 = vmul.f32 %v944, %v949
      %v954 = vlaneseq
      %v955 = vshrl.u32 %v954, 7
      %v956 = vsub.s32 0, %v955
      %v957 = vrot.slane %v917, %v956
      %v959 = vadd.f32 %v951, %v957
      %v960 = vadd.f32 %v952, %v957
      %961 = vst.msk [vmem:[%s298] sm:$0xff] %vm335, %v959
      %962 = vst.msk [vmem:[%s298 + $0x8] sm:$0xff] %vm335, %v960
      %p963 = scmp.lt.s32.totalorder %s20, 1
      %s964 = scalar_select %p963, %s20, 1
      %s965 = smul.addr %s964, 2
      %s966 = smul.addr %s965, 8
      %s967 = scalar_lea.vmem %s5, %s966
      // Predicated region
      $region45: #{bottom_up_top_down_encoder.3} parent=39 // pred_check
        %p968 = pneg %p176
      $region46: #{bottom_up_top_down_encoder.3} parent=39 // pred_check_branch
        %970 = sbr.rel (%p968) target = $region48
      $region47: #{bottom_up_top_down_encoder.3} parent=39 // pred_region
        _
      $region48: #{bottom_up_top_down_encoder.3} parent=39 // pred_fallthru
        _
    $region40: #{bottom_up_top_down_encoder.3} parent=5 // pred_fallthru
      _
    %p971 = scmp.le.s32.totalorder 2, %s11
    // Predicated region
    $region49: #{bottom_up_top_down_encoder.3} parent=5 // pred_check
      %p972 = pneg %p971
    $region50: #{bottom_up_top_down_encoder.3} parent=5 // pred_check_branch
      %974 = sbr.rel (%p972) target = $region52
    $region51: #{bottom_up_top_down_encoder.3} parent=5 // pred_region
      %s975 = ssub.s32 %s11, 2
      // Predicated region
      $region53: #{bottom_up_top_down_encoder.3} parent=51 // pred_check
        %p976 = pneg %p182
      $region54: #{bottom_up_top_down_encoder.3} parent=51 // pred_check_branch
        %978 = sbr.rel (%p976) target = $region56
      $region55: #{bottom_up_top_down_encoder.3} parent=51 // pred_region
        %p979 = scmp.lt.s32.totalorder %s22, 1
        %s980 = scalar_select %p979, %s22, 1
        %s981 = smul.addr %s980, 2
        %s982 = smul.addr %s981, 8
        %s983 = scalar_lea.vmem %s5, %s982
      $region56: #{bottom_up_top_down_encoder.3} parent=51 // pred_fallthru
        _
    $region52: #{bottom_up_top_down_encoder.3} parent=5 // pred_fallthru
      _
  $region6: #{bottom_up_top_down_encoder.3} parent=0 // loop_footer
    %s15 = sadd.s32 1, %s11
  $region7: #{bottom_up_top_down_encoder.3} parent=0 // loop_footer_branch
    %10 = sbr.rel target = $region3
  $region8: #{bottom_up_top_down_encoder.3} parent=0 // loop_exit
    _

// kernel: bottom_up_top_down_encoder.4
$region0: #{bottom_up_top_down_encoder.4}
  #allocation0 [shape = 'u32[]', space=smem, size = 0x4, offset = 0x4, fixed_abs, tag = 'smem constant byte address 0x4 - core index']
  #allocation1 [shape = 'u32[144,128]{1,0:T(1,128)}', space=vmem, size = 0x12000, scoped, tag = 'internal scratch']
  %s0 = inlined_call_operand.vmem [shape: f32[2,3,32], index: 0, kind: input, shape index: {}]
  %s1 = inlined_call_operand.vmem [shape: bf16[1,32,96], index: 1, kind: input, shape index: {}]
  %s2 = inlined_call_operand.vmem [shape: f32[1,1,96], index: 2, kind: input, shape index: {}]
  %s3 = inlined_call_operand.vmem [shape: bf16[1,32,32], index: 3, kind: input, shape index: {}]
  %s4 = inlined_call_operand.vmem [shape: f32[1,1,32], index: 4, kind: input, shape index: {}]
  %s5 = inlined_call_operand.vmem [shape: f32[1,1,32], index: 5, kind: input, shape index: {}]
  %s6 = inlined_call_operand.vmem [shape: f32[1,1,32], index: 6, kind: input, shape index: {}]
  %s7 = inlined_call_operand.vmem [shape: f32[2,3,32], index: 7, kind: output, shape index: {}]
  %s8 = sld [smem:[#allocation0]]
  $region65: #{bottom_up_top_down_encoder.4} parent=0
    _
  %s10 = ssub.s32 1, %s8
  %s11 = scalar_select 0, %s10, %s8
  loop: start=0, step=1, limit=4
  $region2: #{bottom_up_top_down_encoder.4} parent=0 // loop_pre_header
    _
  $region3: #{bottom_up_top_down_encoder.4} parent=0 // loop_header
    %s13 = sphi 0, %s17
    %p14 = scmp.ge.s32.totalorder %s13, 4
    %s20 = sphi 0, %s32
    %s21 = sphi 0, %s28
    %s22 = sphi 0, %s20
    %s23 = sphi 0, %s21
    %s24 = sphi 0, %s22
    %s25 = sphi 0, %s23
    %s35 = sphi 0, %s37
    %s38 = sphi 0, %s35
    %s39 = sphi 0, %s38
    %s55 = sphi 0, %s39
    %s61 = sphi 0, %s63
    %s64 = sphi 0, %s61
    %s65 = sphi 0, %s64
    %s81 = sphi 0, %s65
    %s87 = sphi 0, %s89
    %s90 = sphi 0, %s87
    %s91 = sphi 0, %s90
    %s107 = sphi 0, %s91
    %s113 = sphi 0, %s115
    %s116 = sphi 0, %s113
    %s117 = sphi 0, %s116
    %s133 = sphi 0, %s117
    %s139 = sphi 0, %s141
    %s142 = sphi 0, %s139
    %s143 = sphi 0, %s142
    %s159 = sphi 0, %s143
    %s165 = sphi 0, %s167
    %s168 = sphi 0, %s165
    %s169 = sphi 0, %s168
    %s185 = sphi 0, %s169
    %s191 = sphi 0, %s193
    %s194 = sphi 0, %s191
    %s195 = sphi 0, %s194
    %s211 = sphi 0, %s195
    %s217 = sphi 0, %s219
    %s220 = sphi 0, %s217
    %s221 = sphi 0, %s220
    %s237 = sphi 0, %s221
  $region4: #{bottom_up_top_down_encoder.4} parent=0 // loop_header_branch
    %16 = sbr.rel (%p14) target = $region8
  $region5: #{bottom_up_top_down_encoder.4} parent=0 // loop_body
    %s18 = ssub.s32 %s13, 1
    %s19 = ssub.s32 %s13, 2
    %s26 = sadd.s32 1, %s21
    %p27 = scmp.ge.s32.totalorder %s26, 1
    %s28 = scalar_select %p27, 0, %s26
    %s29 = sadd.s32 1, %s20
    %s30 = scalar_select %p27, %s29, %s20
    %p31 = scmp.ge.s32.totalorder %s30, 2
    %s32 = scalar_select %p31, 0, %s30
    %s33 = ssub.s32 %s20, %s32
    %p34 = scmp.eq.s32.totalorder %s33, 0
    %s36 = sadd.s32 %s35, 1
    %s37 = scalar_select %p34, %s35, %s36
    %p40 = pneg %p34
    %p41 = scmp.eq.s32.totalorder %s13, 1
    %p42 = por %p40, %p41
    %p43 = scmp.ne.s32.totalorder %s35, %s38
    %p44 = scmp.eq.s32.totalorder %s13, 0
    %p45 = por %p43, %p44
    %p46 = scmp.ne.s32.totalorder %s35, %s38
    %p47 = scmp.eq.s32.totalorder %s18, 1
    %p48 = por %p46, %p47
    %p49 = scmp.ne.s32.totalorder %s38, %s39
    %p50 = scmp.eq.s32.totalorder %s18, 0
    %p51 = por %p49, %p50
    %p52 = scmp.ne.s32.totalorder %s38, %s39
    %p53 = scmp.eq.s32.totalorder %s19, 1
    %p54 = por %p52, %p53
    %p56 = scmp.ne.s32.totalorder %s39, %s55
    %p57 = scmp.eq.s32.totalorder %s19, 0
    %p58 = por %p56, %p57
    %s59 = ssub.s32 %s21, %s28
    %p60 = scmp.eq.s32.totalorder %s59, 0
    %s62 = sadd.s32 %s61, 1
    %s63 = scalar_select %p60, %s61, %s62
    %p66 = pneg %p60
    %p67 = scmp.eq.s32.totalorder %s13, 1
    %p68 = por %p66, %p67
    %p69 = scmp.ne.s32.totalorder %s61, %s64
    %p70 = scmp.eq.s32.totalorder %s13, 0
    %p71 = por %p69, %p70
    %p72 = scmp.ne.s32.totalorder %s61, %s64
    %p73 = scmp.eq.s32.totalorder %s18, 1
    %p74 = por %p72, %p73
    %p75 = scmp.ne.s32.totalorder %s64, %s65
    %p76 = scmp.eq.s32.totalorder %s18, 0
    %p77 = por %p75, %p76
    %p78 = scmp.ne.s32.totalorder %s64, %s65
    %p79 = scmp.eq.s32.totalorder %s19, 1
    %p80 = por %p78, %p79
    %p82 = scmp.ne.s32.totalorder %s65, %s81
    %p83 = scmp.eq.s32.totalorder %s19, 0
    %p84 = por %p82, %p83
    %s85 = ssub.s32 %s21, %s28
    %p86 = scmp.eq.s32.totalorder %s85, 0
    %s88 = sadd.s32 %s87, 1
    %s89 = scalar_select %p86, %s87, %s88
    %p92 = pneg %p86
    %p93 = scmp.eq.s32.totalorder %s13, 1
    %p94 = por %p92, %p93
    %p95 = scmp.ne.s32.totalorder %s87, %s90
    %p96 = scmp.eq.s32.totalorder %s13, 0
    %p97 = por %p95, %p96
    %p98 = scmp.ne.s32.totalorder %s87, %s90
    %p99 = scmp.eq.s32.totalorder %s18, 1
    %p100 = por %p98, %p99
    %p101 = scmp.ne.s32.totalorder %s90, %s91
    %p102 = scmp.eq.s32.totalorder %s18, 0
    %p103 = por %p101, %p102
    %p104 = scmp.ne.s32.totalorder %s90, %s91
    %p105 = scmp.eq.s32.totalorder %s19, 1
    %p106 = por %p104, %p105
    %p108 = scmp.ne.s32.totalorder %s91, %s107
    %p109 = scmp.eq.s32.totalorder %s19, 0
    %p110 = por %p108, %p109
    %s111 = ssub.s32 %s21, %s28
    %p112 = scmp.eq.s32.totalorder %s111, 0
    %s114 = sadd.s32 %s113, 1
    %s115 = scalar_select %p112, %s113, %s114
    %p118 = pneg %p112
    %p119 = scmp.eq.s32.totalorder %s13, 1
    %p120 = por %p118, %p119
    %p121 = scmp.ne.s32.totalorder %s113, %s116
    %p122 = scmp.eq.s32.totalorder %s13, 0
    %p123 = por %p121, %p122
    %p124 = scmp.ne.s32.totalorder %s113, %s116
    %p125 = scmp.eq.s32.totalorder %s18, 1
    %p126 = por %p124, %p125
    %p127 = scmp.ne.s32.totalorder %s116, %s117
    %p128 = scmp.eq.s32.totalorder %s18, 0
    %p129 = por %p127, %p128
    %p130 = scmp.ne.s32.totalorder %s116, %s117
    %p131 = scmp.eq.s32.totalorder %s19, 1
    %p132 = por %p130, %p131
    %p134 = scmp.ne.s32.totalorder %s117, %s133
    %p135 = scmp.eq.s32.totalorder %s19, 0
    %p136 = por %p134, %p135
    %s137 = ssub.s32 %s21, %s28
    %p138 = scmp.eq.s32.totalorder %s137, 0
    %s140 = sadd.s32 %s139, 1
    %s141 = scalar_select %p138, %s139, %s140
    %p144 = pneg %p138
    %p145 = scmp.eq.s32.totalorder %s13, 1
    %p146 = por %p144, %p145
    %p147 = scmp.ne.s32.totalorder %s139, %s142
    %p148 = scmp.eq.s32.totalorder %s13, 0
    %p149 = por %p147, %p148
    %p150 = scmp.ne.s32.totalorder %s139, %s142
    %p151 = scmp.eq.s32.totalorder %s18, 1
    %p152 = por %p150, %p151
    %p153 = scmp.ne.s32.totalorder %s142, %s143
    %p154 = scmp.eq.s32.totalorder %s18, 0
    %p155 = por %p153, %p154
    %p156 = scmp.ne.s32.totalorder %s142, %s143
    %p157 = scmp.eq.s32.totalorder %s19, 1
    %p158 = por %p156, %p157
    %p160 = scmp.ne.s32.totalorder %s143, %s159
    %p161 = scmp.eq.s32.totalorder %s19, 0
    %p162 = por %p160, %p161
    %s163 = ssub.s32 %s21, %s28
    %p164 = scmp.eq.s32.totalorder %s163, 0
    %s166 = sadd.s32 %s165, 1
    %s167 = scalar_select %p164, %s165, %s166
    %p170 = pneg %p164
    %p171 = scmp.eq.s32.totalorder %s13, 1
    %p172 = por %p170, %p171
    %p173 = scmp.ne.s32.totalorder %s165, %s168
    %p174 = scmp.eq.s32.totalorder %s13, 0
    %p175 = por %p173, %p174
    %p176 = scmp.ne.s32.totalorder %s165, %s168
    %p177 = scmp.eq.s32.totalorder %s18, 1
    %p178 = por %p176, %p177
    %p179 = scmp.ne.s32.totalorder %s168, %s169
    %p180 = scmp.eq.s32.totalorder %s18, 0
    %p181 = por %p179, %p180
    %p182 = scmp.ne.s32.totalorder %s168, %s169
    %p183 = scmp.eq.s32.totalorder %s19, 1
    %p184 = por %p182, %p183
    %p186 = scmp.ne.s32.totalorder %s169, %s185
    %p187 = scmp.eq.s32.totalorder %s19, 0
    %p188 = por %p186, %p187
    %s189 = ssub.s32 %s21, %s28
    %p190 = scmp.eq.s32.totalorder %s189, 0
    %s192 = sadd.s32 %s191, 1
    %s193 = scalar_select %p190, %s191, %s192
    %p196 = pneg %p190
    %p197 = scmp.eq.s32.totalorder %s13, 1
    %p198 = por %p196, %p197
    %p199 = scmp.ne.s32.totalorder %s191, %s194
    %p200 = scmp.eq.s32.totalorder %s13, 0
    %p201 = por %p199, %p200
    %p202 = scmp.ne.s32.totalorder %s191, %s194
    %p203 = scmp.eq.s32.totalorder %s18, 1
    %p204 = por %p202, %p203
    %p205 = scmp.ne.s32.totalorder %s194, %s195
    %p206 = scmp.eq.s32.totalorder %s18, 0
    %p207 = por %p205, %p206
    %p208 = scmp.ne.s32.totalorder %s194, %s195
    %p209 = scmp.eq.s32.totalorder %s19, 1
    %p210 = por %p208, %p209
    %p212 = scmp.ne.s32.totalorder %s195, %s211
    %p213 = scmp.eq.s32.totalorder %s19, 0
    %p214 = por %p212, %p213
    %s215 = ssub.s32 %s20, %s32
    %p216 = scmp.eq.s32.totalorder %s215, 0
    %s218 = sadd.s32 %s217, 1
    %s219 = scalar_select %p216, %s217, %s218
    %p222 = pneg %p216
    %p223 = scmp.eq.s32.totalorder %s13, 1
    %p224 = por %p222, %p223
    %p225 = scmp.ne.s32.totalorder %s217, %s220
    %p226 = scmp.eq.s32.totalorder %s13, 0
    %p227 = por %p225, %p226
    %p228 = scmp.ne.s32.totalorder %s217, %s220
    %p229 = scmp.eq.s32.totalorder %s18, 1
    %p230 = por %p228, %p229
    %p231 = scmp.ne.s32.totalorder %s220, %s221
    %p232 = scmp.eq.s32.totalorder %s18, 0
    %p233 = por %p231, %p232
    %p234 = scmp.ne.s32.totalorder %s220, %s221
    %p235 = scmp.eq.s32.totalorder %s19, 1
    %p236 = por %p234, %p235
    %p238 = scmp.ne.s32.totalorder %s221, %s237
    %p239 = scmp.eq.s32.totalorder %s19, 0
    %p240 = por %p238, %p239
    %p241 = scmp.le.s32.totalorder 1, %s13
    %p242 = scmp.lt.s32.totalorder %s13, 3
    %p243 = pnand %p241, %p242
    %p244 = pneg %p243
    // Predicated region
    $region9: #{bottom_up_top_down_encoder.4} parent=5 // pred_check
      _
    $region10: #{bottom_up_top_down_encoder.4} parent=5 // pred_check_branch
      %246 = sbr.rel (%p243) target = $region12
    $region11: #{bottom_up_top_down_encoder.4} parent=5 // pred_region
      %s247 = ssub.s32 %s13, 1
      // Predicated region
      $region13: #{bottom_up_top_down_encoder.4} parent=11 // pred_check
        %p248 = pneg %p77
      $region14: #{bottom_up_top_down_encoder.4} parent=11 // pred_check_branch
        %250 = sbr.rel (%p248) target = $region16
      $region15: #{bottom_up_top_down_encoder.4} parent=11 // pred_region
        %p251 = scmp.lt.s32.totalorder %s23, 0
        %s252 = scalar_select %p251, %s23, 0
        %s253 = smul.addr %s252, 4
        %s254 = smul.addr %s253, 4
        %s255 = scalar_lea.vmem %s1, %s254
      $region16: #{bottom_up_top_down_encoder.4} parent=11 // pred_fallthru
        _
      // Predicated region
      $region17: #{bottom_up_top_down_encoder.4} parent=11 // pred_check
        %p256 = pneg %p103
      $region18: #{bottom_up_top_down_encoder.4} parent=11 // pred_check_branch
        %258 = sbr.rel (%p256) target = $region20
      $region19: #{bottom_up_top_down_encoder.4} parent=11 // pred_region
        %p259 = scmp.lt.s32.totalorder %s23, 0
        %s260 = scalar_select %p259, %s23, 0
        %s261 = scalar_lea.vmem %s2, %s260
      $region20: #{bottom_up_top_down_encoder.4} parent=11 // pred_fallthru
        _
      // Predicated region
      $region21: #{bottom_up_top_down_encoder.4} parent=11 // pred_check
        %p262 = pneg %p129
      $region22: #{bottom_up_top_down_encoder.4} parent=11 // pred_check_branch
        %264 = sbr.rel (%p262) target = $region24
      $region23: #{bottom_up_top_down_encoder.4} parent=11 // pred_region
        %p265 = scmp.lt.s32.totalorder %s23, 0
        %s266 = scalar_select %p265, %s23, 0
        %s267 = smul.addr %s266, 4
        %s268 = smul.addr %s267, 4
        %s269 = scalar_lea.vmem %s3, %s268
      $region24: #{bottom_up_top_down_encoder.4} parent=11 // pred_fallthru
        _
      // Predicated region
      $region25: #{bottom_up_top_down_encoder.4} parent=11 // pred_check
        %p270 = pneg %p155
      $region26: #{bottom_up_top_down_encoder.4} parent=11 // pred_check_branch
        %272 = sbr.rel (%p270) target = $region28
      $region27: #{bottom_up_top_down_encoder.4} parent=11 // pred_region
        %p273 = scmp.lt.s32.totalorder %s23, 0
        %s274 = scalar_select %p273, %s23, 0
        %s275 = scalar_lea.vmem %s4, %s274
      $region28: #{bottom_up_top_down_encoder.4} parent=11 // pred_fallthru
        _
      // Predicated region
      $region29: #{bottom_up_top_down_encoder.4} parent=11 // pred_check
        %p276 = pneg %p181
      $region30: #{bottom_up_top_down_encoder.4} parent=11 // pred_check_branch
        %278 = sbr.rel (%p276) target = $region32
      $region31: #{bottom_up_top_down_encoder.4} parent=11 // pred_region
        %p279 = scmp.lt.s32.totalorder %s23, 0
        %s280 = scalar_select %p279, %s23, 0
        %s281 = scalar_lea.vmem %s5, %s280
      $region32: #{bottom_up_top_down_encoder.4} parent=11 // pred_fallthru
        _
      // Predicated region
      $region33: #{bottom_up_top_down_encoder.4} parent=11 // pred_check
        %p282 = pneg %p207
      $region34: #{bottom_up_top_down_encoder.4} parent=11 // pred_check_branch
        %284 = sbr.rel (%p282) target = $region36
      $region35: #{bottom_up_top_down_encoder.4} parent=11 // pred_region
        %p285 = scmp.lt.s32.totalorder %s23, 0
        %s286 = scalar_select %p285, %s23, 0
        %s287 = scalar_lea.vmem %s6, %s286
      $region36: #{bottom_up_top_down_encoder.4} parent=11 // pred_fallthru
        _
    $region12: #{bottom_up_top_down_encoder.4} parent=5 // pred_fallthru
      _
    %p288 = scmp.lt.s32.totalorder %s13, 2
    // Predicated region
    $region37: #{bottom_up_top_down_encoder.4} parent=5 // pred_check
      %p289 = pneg %p288
    $region38: #{bottom_up_top_down_encoder.4} parent=5 // pred_check_branch
      %291 = sbr.rel (%p289) target = $region40
    $region39: #{bottom_up_top_down_encoder.4} parent=5 // pred_region
      // Predicated region
      $region41: #{bottom_up_top_down_encoder.4} parent=39 // pred_check
        %p292 = pneg %p45
      $region42: #{bottom_up_top_down_encoder.4} parent=39 // pred_check_branch
        %294 = sbr.rel (%p292) target = $region44
      $region43: #{bottom_up_top_down_encoder.4} parent=39 // pred_region
        %p295 = scmp.lt.s32.totalorder %s20, 1
        %s296 = scalar_select %p295, %s20, 1
        %s297 = smul.addr %s296, 4
        %s298 = scalar_lea.vmem %s0, %s297
      $region44: #{bottom_up_top_down_encoder.4} parent=39 // pred_fallthru
        _
    $region40: #{bottom_up_top_down_encoder.4} parent=5 // pred_fallthru
      _
    %p299 = scmp.le.s32.totalorder 1, %s13
    %p300 = scmp.lt.s32.totalorder %s13, 3
    %p301 = pnand %p299, %p300
    %p302 = pneg %p301
    // Predicated region
    $region45: #{bottom_up_top_down_encoder.4} parent=5 // pred_check
      _
    $region46: #{bottom_up_top_down_encoder.4} parent=5 // pred_check_branch
      %304 = sbr.rel (%p301) target = $region48
    $region47: #{bottom_up_top_down_encoder.4} parent=5 // pred_region
      %s305 = ssub.s32 %s13, 1
      %p306 = scmp.lt.s32.totalorder %s22, 1
      %s307 = scalar_select %p306, %s22, 1
      %s308 = smul.addr %s307, 4
      %s309 = scalar_lea.vmem %s0, %s308
      %p310 = pneg %p51
      %p311 = pneg %p48
      %p312 = scmp.lt.s32.totalorder %s23, 0
      %s313 = scalar_select %p312, %s23, 0
      %s314 = smul.addr %s313, 4
      %s315 = smul.addr %s314, 4
      %s316 = scalar_lea.vmem %s1, %s315
      %p317 = pneg %p77
      %p318 = pneg %p74
      %p319 = scmp.lt.s32.totalorder %s23, 0
      %s320 = scalar_select %p319, %s23, 0
      %s321 = scalar_lea.vmem %s2, %s320
      %p322 = pneg %p103
      %p323 = pneg %p100
      %p324 = scmp.lt.s32.totalorder %s23, 0
      %s325 = scalar_select %p324, %s23, 0
      %s326 = smul.addr %s325, 4
      %s327 = smul.addr %s326, 4
      %s328 = scalar_lea.vmem %s3, %s327
      %p329 = pneg %p129
      %p330 = pneg %p126
      %p331 = scmp.lt.s32.totalorder %s23, 0
      %s332 = scalar_select %p331, %s23, 0
      %s333 = scalar_lea.vmem %s4, %s332
      %p334 = pneg %p155
      %p335 = pneg %p152
      %p336 = scmp.lt.s32.totalorder %s23, 0
      %s337 = scalar_select %p336, %s23, 0
      %s338 = scalar_lea.vmem %s5, %s337
      %p339 = pneg %p181
      %p340 = pneg %p178
      %p341 = scmp.lt.s32.totalorder %s23, 0
      %s342 = scalar_select %p341, %s23, 0
      %s343 = scalar_lea.vmem %s6, %s342
      %p344 = pneg %p207
      %p345 = pneg %p204
      %p346 = pneg %p233
      %p347 = pneg %p230
      %p348 = scmp.lt.s32.totalorder %s22, 1
      %s349 = scalar_select %p348, %s22, 1
      %s350 = smul.addr %s349, 4
      %s351 = scalar_lea.vmem %s7, %s350
      %p352 = scmp.lt.s32.totalorder %s22, 1
      %s353 = scalar_select %p352, %s22, 1
      %s354 = smul.addr %s353, 4
      %s355 = scalar_lea.vmem %s0, %s354
      %p356 = scmp.lt.s32.totalorder %s23, 0
      %s357 = scalar_select %p356, %s23, 0
      %s358 = smul.addr %s357, 4
      %s359 = smul.addr %s358, 4
      %s360 = scalar_lea.vmem %s1, %s359
      %p361 = scmp.lt.s32.totalorder %s23, 0
      %s362 = scalar_select %p361, %s23, 0
      %s363 = scalar_lea.vmem %s2, %s362
      %p364 = scmp.lt.s32.totalorder %s23, 0
      %s365 = scalar_select %p364, %s23, 0
      %s366 = smul.addr %s365, 4
      %s367 = smul.addr %s366, 4
      %s368 = scalar_lea.vmem %s3, %s367
      %p369 = scmp.lt.s32.totalorder %s23, 0
      %s370 = scalar_select %p369, %s23, 0
      %s371 = scalar_lea.vmem %s4, %s370
      %p372 = scmp.lt.s32.totalorder %s23, 0
      %s373 = scalar_select %p372, %s23, 0
      %s374 = scalar_lea.vmem %s5, %s373
      %p375 = scmp.lt.s32.totalorder %s23, 0
      %s376 = scalar_select %p375, %s23, 0
      %s377 = scalar_lea.vmem %s6, %s376
      %p378 = scmp.lt.s32.totalorder %s22, 1
      %s379 = scalar_select %p378, %s22, 1
      %s380 = smul.addr %s379, 4
      %s381 = scalar_lea.vmem %s7, %s380
      %p383 = scmp.eq.s32.totalorder %s23, 0
      // Predicated region
      $region49: #{bottom_up_top_down_encoder.4} parent=47 // pred_check
        %p384 = pneg %p383
      $region50: #{bottom_up_top_down_encoder.4} parent=47 // pred_check_branch
        %386 = sbr.rel (%p384) target = $region52
      $region51: #{bottom_up_top_down_encoder.4} parent=47 // pred_region
        %v387 = vld [vmem:[%s355] sm:$0x7]
        %vm388 = vcmask 256000
        %389 = vst.msk [vmem:[%s381] sm:$0x7] %vm388, %v387
      $region52: #{bottom_up_top_down_encoder.4} parent=47 // pred_fallthru
        _
      %v390 = vld [vmem:[%s381] sm:$0x7]
      %v391 = vpack.c.bf16 %v390, %v390
      %v392 = vld [vmem:[%s360] sm:$0xf]
      %v393 = vld [vmem:[%s360 + $0x4] sm:$0xf]
      %v394 = vld [vmem:[%s360 + $0x8] sm:$0xf]
      %v395 = vld [vmem:[%s360 + $0xc] sm:$0xf]
      %v396 = vld [vmem:[%s363] sm:$0x1]
      %v398 = vlaneseq
      %v399 = vshrl.u32 %v398, 7
      %v400 = vsub.s32 0, %v399
      %v401 = vrot.slane %v396, %v400
      %v407 = vunpack.c.l.b16 %v392
      %v408 = vunpack.c.l.b16 %v393
      %v409 = vunpack.c.l.b16 %v394
      %v410 = vunpack.c.l.b16 %v395
      %v411 = vpack.c.b16 %v408, %v407
      %v412 = vpack.c.b16 %v410, %v409
      %vm415 = vcmask 261120
      %v417 = vsel %vm415, %v391, 0
      %419 = vmatprep.subr.bf16.mxu0 0
      %420 = vmatpush1.bf16.msra.mxu0 0
      %421 = vmatprep.subr.bf16.mxu0 0
      %422 = vmatpush1.bf16.msra.mxu0 0
      %423 = vmatprep.subr.bf16.mxu0 0
      %424 = vmatpush1.bf16.msra.mxu0 0
      %425 = vmatprep.subr.bf16.mxu0 0
      %426 = vmatpush1.bf16.msra.mxu0 0
      %427 = vmatprep.subr.bf16.mxu0 0
      %428 = vmatpush1.bf16.msra.mxu0 0
      %429 = vmatprep.subr.bf16.mxu0 0
      %430 = vmatpush1.bf16.msra.mxu0 0
      %431 = vmatprep.subr.bf16.mxu0 0
      %432 = vmatpush1.bf16.msra.mxu0 %v412
      %433 = vmatprep.subr.bf16.mxu0 0
      %434 = vmatpush1.bf16.msra.mxu0 %v411
      %435 = vmatprep.subr.bf16.mxu0 0
      %436 = vmatpush2.bf16.msra.mxu0 0
      %437 = vmatprep.subr.bf16.mxu0 0
      %438 = vmatpush2.bf16.msra.mxu0 0
      %439 = vmatprep.subr.bf16.mxu0 0
      %440 = vmatpush2.bf16.msra.mxu0 0
      %441 = vmatprep.subr.bf16.mxu0 0
      %442 = vmatpush2.bf16.msra.mxu0 0
      %443 = vmatprep.subr.bf16.mxu0 0
      %444 = vmatpush2.bf16.msra.mxu0 0
      %445 = vmatprep.subr.bf16.mxu0 0
      %446 = vmatpush2.bf16.msra.mxu0 0
      %447 = vmatprep.subr.bf16.mxu0 0
      %448 = vmatpush2.bf16.msra.mxu0 0
      %449 = vmatprep.subr.bf16.mxu0 0
      %450 = vmatpush2.bf16.msra.mxu0 0
      %451 = vmatprep.mubr.bf16.mxu0 0
      %452 = vmatmul.mubr.bf16.gmra.mxu0 %v417
      %v453 = vpop.f32.mrf.mxu0
      %v454 = vadd.f32 %v401, %v453
      %v455 = vpop.f32.mrf.mxu0
      %v456 = vpop.f32.mrf.mxu0
      %v457 = vpop.f32.mrf.mxu0
      %458 = vdwg.mxu0
      %v459 = vpack.c.bf16 %v454, %v454
      %461 = vrot.lane.b32.xlu0 %v459, 96
      %v462 = vpop.permute.xlu0 %461
      %vm463 = vcmask 64512
      %v465 = vsel %vm463, %v459, 0
      %v468 = vsel %vm463, %v462, 0
      %470 = vmatprep.subr.bf16.mxu0 0
      %471 = vmatpush1.bf16.xpose.msra.mxu0 0
      %472 = vmatprep.subr.bf16.mxu0 0
      %473 = vmatpush1.bf16.xpose.msra.mxu0 0
      %474 = vmatprep.subr.bf16.mxu0 0
      %475 = vmatpush1.bf16.xpose.msra.mxu0 0
      %476 = vmatprep.subr.bf16.mxu0 0
      %477 = vmatpush1.bf16.xpose.msra.mxu0 0
      %478 = vmatprep.subr.bf16.mxu0 0
      %479 = vmatpush1.bf16.xpose.msra.mxu0 0
      %480 = vmatprep.subr.bf16.mxu0 0
      %481 = vmatpush1.bf16.xpose.msra.mxu0 0
      %482 = vmatprep.subr.bf16.mxu0 0
      %483 = vmatpush1.bf16.xpose.msra.mxu0 0
      %484 = vmatprep.subr.bf16.mxu0 0
      %485 = vmatpush1.bf16.xpose.msra.mxu0 %v468
      %486 = vmatprep.subr.bf16.mxu0 0
      %487 = vmatpush2.bf16.xpose.msra.mxu0 0
      %488 = vmatprep.subr.bf16.mxu0 0
      %489 = vmatpush2.bf16.xpose.msra.mxu0 0
      %490 = vmatprep.subr.bf16.mxu0 0
      %491 = vmatpush2.bf16.xpose.msra.mxu0 0
      %492 = vmatprep.subr.bf16.mxu0 0
      %493 = vmatpush2.bf16.xpose.msra.mxu0 0
      %494 = vmatprep.subr.bf16.mxu0 0
      %495 = vmatpush2.bf16.xpose.msra.mxu0 0
      %496 = vmatprep.subr.bf16.mxu0 0
      %497 = vmatpush2.bf16.xpose.msra.mxu0 0
      %498 = vmatprep.subr.bf16.mxu0 0
      %499 = vmatpush2.bf16.xpose.msra.mxu0 0
      %500 = vmatprep.subr.bf16.mxu0 0
      %501 = vmatpush2.bf16.xpose.msra.mxu0 0
      %502 = vmatprep.mubr.bf16.mxu0 0
      %503 = vmatmul.mubr.bf16.gmra.mxu0 %v465
      %v504 = vpop.f32.mrf.mxu0
      %v505 = vadd.f32 0.0, %v504
      %v506 = vpop.f32.mrf.mxu0
      %v507 = vpop.f32.mrf.mxu0
      %v508 = vpop.f32.mrf.mxu0
      %509 = vdwg.mxu0
      %vm510 = vcmask 18432
      %v511 = vsel %vm510, %v505, -inf
      %512 = vmax.xlane.f32.xlu0 %v511
      %v513 = vpop.xlane.xlu0 %512
      %v514 = vsub.f32 %v505, %v513
      %v515 = vmul.f32 %v514, 1.442695
      %v516 = vpow.pop %v515
      %v517 = vsel %vm510, %v516, 0.0
      %518 = vadd.xlane.f32.xlu0 %v517
      %v519 = vpop.xlane.xlu0 %518
      %v520 = vrcp.pop %v519
      %v521 = vmul.f32 %v516, %v520
      %v522 = vpack.c.bf16 %v521, %v521
      %523 = vrot.lane.b32.xlu0 %v459, 64
      %v524 = vpop.permute.xlu0 %523
      %vm525 = vcmask 23552
      %v527 = vsel %vm525, %v522, 0
      %vm529 = vcmask 1040384
      %vm530 = vcmask 1041408
      %v531 = vsel %vm529, 4294967295, 65535
      %v532 = vsel %vm530, %v531, 0
      %v534 = vand.u32 %v524, %v532
      %536 = vmatprep.subr.bf16.mxu0 0
      %537 = vmatpush1.bf16.msra.mxu0 0
      %538 = vmatprep.subr.bf16.mxu0 0
      %539 = vmatpush1.bf16.msra.mxu0 0
      %540 = vmatprep.subr.bf16.mxu0 0
      %541 = vmatpush1.bf16.msra.mxu0 0
      %542 = vmatprep.subr.bf16.mxu0 0
      %543 = vmatpush1.bf16.msra.mxu0 0
      %544 = vmatprep.subr.bf16.mxu0 0
      %545 = vmatpush1.bf16.msra.mxu0 0
      %546 = vmatprep.subr.bf16.mxu0 0
      %547 = vmatpush1.bf16.msra.mxu0 0
      %548 = vmatprep.subr.bf16.mxu0 0
      %549 = vmatpush1.bf16.msra.mxu0 0
      %550 = vmatprep.subr.bf16.mxu0 0
      %551 = vmatpush1.bf16.msra.mxu0 %v534
      %552 = vmatprep.subr.bf16.mxu0 0
      %553 = vmatpush2.bf16.msra.mxu0 0
      %554 = vmatprep.subr.bf16.mxu0 0
      %555 = vmatpush2.bf16.msra.mxu0 0
      %556 = vmatprep.subr.bf16.mxu0 0
      %557 = vmatpush2.bf16.msra.mxu0 0
      %558 = vmatprep.subr.bf16.mxu0 0
      %559 = vmatpush2.bf16.msra.mxu0 0
      %560 = vmatprep.subr.bf16.mxu0 0
      %561 = vmatpush2.bf16.msra.mxu0 0
      %562 = vmatprep.subr.bf16.mxu0 0
      %563 = vmatpush2.bf16.msra.mxu0 0
      %564 = vmatprep.subr.bf16.mxu0 0
      %565 = vmatpush2.bf16.msra.mxu0 0
      %566 = vmatprep.subr.bf16.mxu0 0
      %567 = vmatpush2.bf16.msra.mxu0 0
      %568 = vmatprep.mubr.bf16.mxu0 0
      %569 = vmatmul.mubr.bf16.gmra.mxu0 %v527
      %v570 = vpop.f32.mrf.mxu0
      %v571 = vadd.f32 0.0, %v570
      %v572 = vpop.f32.mrf.mxu0
      %v573 = vpop.f32.mrf.mxu0
      %v574 = vpop.f32.mrf.mxu0
      %575 = vdwg.mxu0
      %576 = vrot.lane.b32.xlu0 %v459, 120
      %v577 = vpop.permute.xlu0 %576
      %578 = vrot.lane.b32.xlu0 %v459, 88
      %v579 = vpop.permute.xlu0 %578
      %v581 = vsel %vm463, %v577, 0
      %v584 = vsel %vm463, %v579, 0
      %586 = vmatprep.subr.bf16.mxu0 0
      %587 = vmatpush1.bf16.xpose.msra.mxu0 0
      %588 = vmatprep.subr.bf16.mxu0 0
      %589 = vmatpush1.bf16.xpose.msra.mxu0 0
      %590 = vmatprep.subr.bf16.mxu0 0
      %591 = vmatpush1.bf16.xpose.msra.mxu0 0
      %592 = vmatprep.subr.bf16.mxu0 0
      %593 = vmatpush1.bf16.xpose.msra.mxu0 0
      %594 = vmatprep.subr.bf16.mxu0 0
      %595 = vmatpush1.bf16.xpose.msra.mxu0 0
      %596 = vmatprep.subr.bf16.mxu0 0
      %597 = vmatpush1.bf16.xpose.msra.mxu0 0
      %598 = vmatprep.subr.bf16.mxu0 0
      %599 = vmatpush1.bf16.xpose.msra.mxu0 0
      %600 = vmatprep.subr.bf16.mxu0 0
      %601 = vmatpush1.bf16.xpose.msra.mxu0 %v584
      %602 = vmatprep.subr.bf16.mxu0 0
      %603 = vmatpush2.bf16.xpose.msra.mxu0 0
      %604 = vmatprep.subr.bf16.mxu0 0
      %605 = vmatpush2.bf16.xpose.msra.mxu0 0
      %606 = vmatprep.subr.bf16.mxu0 0
      %607 = vmatpush2.bf16.xpose.msra.mxu0 0
      %608 = vmatprep.subr.bf16.mxu0 0
      %609 = vmatpush2.bf16.xpose.msra.mxu0 0
      %610 = vmatprep.subr.bf16.mxu0 0
      %611 = vmatpush2.bf16.xpose.msra.mxu0 0
      %612 = vmatprep.subr.bf16.mxu0 0
      %613 = vmatpush2.bf16.xpose.msra.mxu0 0
      %614 = vmatprep.subr.bf16.mxu0 0
      %615 = vmatpush2.bf16.xpose.msra.mxu0 0
      %616 = vmatprep.subr.bf16.mxu0 0
      %617 = vmatpush2.bf16.xpose.msra.mxu0 0
      %618 = vmatprep.mubr.bf16.mxu0 0
      %619 = vmatmul.mubr.bf16.gmra.mxu0 %v581
      %v620 = vpop.f32.mrf.mxu0
      %v621 = vadd.f32 0.0, %v620
      %v622 = vpop.f32.mrf.mxu0
      %v623 = vpop.f32.mrf.mxu0
      %v624 = vpop.f32.mrf.mxu0
      %625 = vdwg.mxu0
      %v626 = vsel %vm510, %v621, -inf
      %627 = vmax.xlane.f32.xlu0 %v626
      %v628 = vpop.xlane.xlu0 %627
      %v629 = vsub.f32 %v621, %v628
      %v630 = vmul.f32 %v629, 1.442695
      %v631 = vpow.pop %v630
      %v632 = vsel %vm510, %v631, 0.0
      %633 = vadd.xlane.f32.xlu0 %v632
      %v634 = vpop.xlane.xlu0 %633
      %v635 = vrcp.pop %v634
      %v636 = vmul.f32 %v631, %v635
      %v637 = vpack.c.bf16 %v636, %v636
      %638 = vrot.lane.b32.xlu0 %v459, 56
      %v639 = vpop.permute.xlu0 %638
      %v641 = vsel %vm525, %v637, 0
      %v644 = vand.u32 %v639, %v532
      %646 = vmatprep.subr.bf16.mxu0 0
      %647 = vmatpush1.bf16.msra.mxu0 0
      %648 = vmatprep.subr.bf16.mxu0 0
      %649 = vmatpush1.bf16.msra.mxu0 0
      %650 = vmatprep.subr.bf16.mxu0 0
      %651 = vmatpush1.bf16.msra.mxu0 0
      %652 = vmatprep.subr.bf16.mxu0 0
      %653 = vmatpush1.bf16.msra.mxu0 0
      %654 = vmatprep.subr.bf16.mxu0 0
      %655 = vmatpush1.bf16.msra.mxu0 0
      %656 = vmatprep.subr.bf16.mxu0 0
      %657 = vmatpush1.bf16.msra.mxu0 0
      %658 = vmatprep.subr.bf16.mxu0 0
      %659 = vmatpush1.bf16.msra.mxu0 0
      %660 = vmatprep.subr.bf16.mxu0 0
      %661 = vmatpush1.bf16.msra.mxu0 %v644
      %662 = vmatprep.subr.bf16.mxu0 0
      %663 = vmatpush2.bf16.msra.mxu0 0
      %664 = vmatprep.subr.bf16.mxu0 0
      %665 = vmatpush2.bf16.msra.mxu0 0
      %666 = vmatprep.subr.bf16.mxu0 0
      %667 = vmatpush2.bf16.msra.mxu0 0
      %668 = vmatprep.subr.bf16.mxu0 0
      %669 = vmatpush2.bf16.msra.mxu0 0
      %670 = vmatprep.subr.bf16.mxu0 0
      %671 = vmatpush2.bf16.msra.mxu0 0
      %672 = vmatprep.subr.bf16.mxu0 0
      %673 = vmatpush2.bf16.msra.mxu0 0
      %674 = vmatprep.subr.bf16.mxu0 0
      %675 = vmatpush2.bf16.msra.mxu0 0
      %676 = vmatprep.subr.bf16.mxu0 0
      %677 = vmatpush2.bf16.msra.mxu0 0
      %678 = vmatprep.mubr.bf16.mxu0 0
      %679 = vmatmul.mubr.bf16.gmra.mxu0 %v641
      %v680 = vpop.f32.mrf.mxu0
      %v681 = vadd.f32 0.0, %v680
      %v682 = vpop.f32.mrf.mxu0
      %v683 = vpop.f32.mrf.mxu0
      %v684 = vpop.f32.mrf.mxu0
      %685 = vdwg.mxu0
      %686 = vrot.lane.b32.xlu0 %v459, 112
      %v687 = vpop.permute.xlu0 %686
      %688 = vrot.lane.b32.xlu0 %v459, 80
      %v689 = vpop.permute.xlu0 %688
      %v691 = vsel %vm463, %v687, 0
      %v694 = vsel %vm463, %v689, 0
      %696 = vmatprep.subr.bf16.mxu0 0
      %697 = vmatpush1.bf16.xpose.msra.mxu0 0
      %698 = vmatprep.subr.bf16.mxu0 0
      %699 = vmatpush1.bf16.xpose.msra.mxu0 0
      %700 = vmatprep.subr.bf16.mxu0 0
      %701 = vmatpush1.bf16.xpose.msra.mxu0 0
      %702 = vmatprep.subr.bf16.mxu0 0
      %703 = vmatpush1.bf16.xpose.msra.mxu0 0
      %704 = vmatprep.subr.bf16.mxu0 0
      %705 = vmatpush1.bf16.xpose.msra.mxu0 0
      %706 = vmatprep.subr.bf16.mxu0 0
      %707 = vmatpush1.bf16.xpose.msra.mxu0 0
      %708 = vmatprep.subr.bf16.mxu0 0
      %709 = vmatpush1.bf16.xpose.msra.mxu0 0
      %710 = vmatprep.subr.bf16.mxu0 0
      %711 = vmatpush1.bf16.xpose.msra.mxu0 %v694
      %712 = vmatprep.subr.bf16.mxu0 0
      %713 = vmatpush2.bf16.xpose.msra.mxu0 0
      %714 = vmatprep.subr.bf16.mxu0 0
      %715 = vmatpush2.bf16.xpose.msra.mxu0 0
      %716 = vmatprep.subr.bf16.mxu0 0
      %717 = vmatpush2.bf16.xpose.msra.mxu0 0
      %718 = vmatprep.subr.bf16.mxu0 0
      %719 = vmatpush2.bf16.xpose.msra.mxu0 0
      %720 = vmatprep.subr.bf16.mxu0 0
      %721 = vmatpush2.bf16.xpose.msra.mxu0 0
      %722 = vmatprep.subr.bf16.mxu0 0
      %723 = vmatpush2.bf16.xpose.msra.mxu0 0
      %724 = vmatprep.subr.bf16.mxu0 0
      %725 = vmatpush2.bf16.xpose.msra.mxu0 0
      %726 = vmatprep.subr.bf16.mxu0 0
      %727 = vmatpush2.bf16.xpose.msra.mxu0 0
      %728 = vmatprep.mubr.bf16.mxu0 0
      %729 = vmatmul.mubr.bf16.gmra.mxu0 %v691
      %v730 = vpop.f32.mrf.mxu0
      %v731 = vadd.f32 0.0, %v730
      %v732 = vpop.f32.mrf.mxu0
      %v733 = vpop.f32.mrf.mxu0
      %v734 = vpop.f32.mrf.mxu0
      %735 = vdwg.mxu0
      %v736 = vsel %vm510, %v731, -inf
      %737 = vmax.xlane.f32.xlu0 %v736
      %v738 = vpop.xlane.xlu0 %737
      %v739 = vsub.f32 %v731, %v738
      %v740 = vmul.f32 %v739, 1.442695
      %v741 = vpow.pop %v740
      %v742 = vsel %vm510, %v741, 0.0
      %743 = vadd.xlane.f32.xlu0 %v742
      %v744 = vpop.xlane.xlu0 %743
      %v745 = vrcp.pop %v744
      %v746 = vmul.f32 %v741, %v745
      %v747 = vpack.c.bf16 %v746, %v746
      %748 = vrot.lane.b32.xlu0 %v459, 48
      %v749 = vpop.permute.xlu0 %748
      %v751 = vsel %vm525, %v747, 0
      %v754 = vand.u32 %v749, %v532
      %756 = vmatprep.subr.bf16.mxu0 0
      %757 = vmatpush1.bf16.msra.mxu0 0
      %758 = vmatprep.subr.bf16.mxu0 0
      %759 = vmatpush1.bf16.msra.mxu0 0
      %760 = vmatprep.subr.bf16.mxu0 0
      %761 = vmatpush1.bf16.msra.mxu0 0
      %762 = vmatprep.subr.bf16.mxu0 0
      %763 = vmatpush1.bf16.msra.mxu0 0
      %764 = vmatprep.subr.bf16.mxu0 0
      %765 = vmatpush1.bf16.msra.mxu0 0
      %766 = vmatprep.subr.bf16.mxu0 0
      %767 = vmatpush1.bf16.msra.mxu0 0
      %768 = vmatprep.subr.bf16.mxu0 0
      %769 = vmatpush1.bf16.msra.mxu0 0
      %770 = vmatprep.subr.bf16.mxu0 0
      %771 = vmatpush1.bf16.msra.mxu0 %v754
      %772 = vmatprep.subr.bf16.mxu0 0
      %773 = vmatpush2.bf16.msra.mxu0 0
      %774 = vmatprep.subr.bf16.mxu0 0
      %775 = vmatpush2.bf16.msra.mxu0 0
      %776 = vmatprep.subr.bf16.mxu0 0
      %777 = vmatpush2.bf16.msra.mxu0 0
      %778 = vmatprep.subr.bf16.mxu0 0
      %779 = vmatpush2.bf16.msra.mxu0 0
      %780 = vmatprep.subr.bf16.mxu0 0
      %781 = vmatpush2.bf16.msra.mxu0 0
      %782 = vmatprep.subr.bf16.mxu0 0
      %783 = vmatpush2.bf16.msra.mxu0 0
      %784 = vmatprep.subr.bf16.mxu0 0
      %785 = vmatpush2.bf16.msra.mxu0 0
      %786 = vmatprep.subr.bf16.mxu0 0
      %787 = vmatpush2.bf16.msra.mxu0 0
      %788 = vmatprep.mubr.bf16.mxu0 0
      %789 = vmatmul.mubr.bf16.gmra.mxu0 %v751
      %v790 = vpop.f32.mrf.mxu0
      %v791 = vadd.f32 0.0, %v790
      %v792 = vpop.f32.mrf.mxu0
      %v793 = vpop.f32.mrf.mxu0
      %v794 = vpop.f32.mrf.mxu0
      %795 = vdwg.mxu0
      %796 = vrot.lane.b32.xlu0 %v459, 104
      %v797 = vpop.permute.xlu0 %796
      %798 = vrot.lane.b32.xlu0 %v459, 72
      %v799 = vpop.permute.xlu0 %798
      %v801 = vsel %vm463, %v797, 0
      %v804 = vsel %vm463, %v799, 0
      %806 = vmatprep.subr.bf16.mxu0 0
      %807 = vmatpush1.bf16.xpose.msra.mxu0 0
      %808 = vmatprep.subr.bf16.mxu0 0
      %809 = vmatpush1.bf16.xpose.msra.mxu0 0
      %810 = vmatprep.subr.bf16.mxu0 0
      %811 = vmatpush1.bf16.xpose.msra.mxu0 0
      %812 = vmatprep.subr.bf16.mxu0 0
      %813 = vmatpush1.bf16.xpose.msra.mxu0 0
      %814 = vmatprep.subr.bf16.mxu0 0
      %815 = vmatpush1.bf16.xpose.msra.mxu0 0
      %816 = vmatprep.subr.bf16.mxu0 0
      %817 = vmatpush1.bf16.xpose.msra.mxu0 0
      %818 = vmatprep.subr.bf16.mxu0 0
      %819 = vmatpush1.bf16.xpose.msra.mxu0 0
      %820 = vmatprep.subr.bf16.mxu0 0
      %821 = vmatpush1.bf16.xpose.msra.mxu0 %v804
      %822 = vmatprep.subr.bf16.mxu0 0
      %823 = vmatpush2.bf16.xpose.msra.mxu0 0
      %824 = vmatprep.subr.bf16.mxu0 0
      %825 = vmatpush2.bf16.xpose.msra.mxu0 0
      %826 = vmatprep.subr.bf16.mxu0 0
      %827 = vmatpush2.bf16.xpose.msra.mxu0 0
      %828 = vmatprep.subr.bf16.mxu0 0
      %829 = vmatpush2.bf16.xpose.msra.mxu0 0
      %830 = vmatprep.subr.bf16.mxu0 0
      %831 = vmatpush2.bf16.xpose.msra.mxu0 0
      %832 = vmatprep.subr.bf16.mxu0 0
      %833 = vmatpush2.bf16.xpose.msra.mxu0 0
      %834 = vmatprep.subr.bf16.mxu0 0
      %835 = vmatpush2.bf16.xpose.msra.mxu0 0
      %836 = vmatprep.subr.bf16.mxu0 0
      %837 = vmatpush2.bf16.xpose.msra.mxu0 0
      %838 = vmatprep.mubr.bf16.mxu0 0
      %839 = vmatmul.mubr.bf16.gmra.mxu0 %v801
      %v840 = vpop.f32.mrf.mxu0
      %v841 = vadd.f32 0.0, %v840
      %v842 = vpop.f32.mrf.mxu0
      %v843 = vpop.f32.mrf.mxu0
      %v844 = vpop.f32.mrf.mxu0
      %845 = vdwg.mxu0
      %v846 = vsel %vm510, %v841, -inf
      %847 = vmax.xlane.f32.xlu0 %v846
      %v848 = vpop.xlane.xlu0 %847
      %v849 = vsub.f32 %v841, %v848
      %v850 = vmul.f32 %v849, 1.442695
      %v851 = vpow.pop %v850
      %v852 = vsel %vm510, %v851, 0.0
      %853 = vadd.xlane.f32.xlu0 %v852
      %v854 = vpop.xlane.xlu0 %853
      %v855 = vrcp.pop %v854
      %v856 = vmul.f32 %v851, %v855
      %v857 = vpack.c.bf16 %v856, %v856
      %858 = vrot.lane.b32.xlu0 %v459, 40
      %v859 = vpop.permute.xlu0 %858
      %v861 = vsel %vm525, %v857, 0
      %v864 = vand.u32 %v859, %v532
      %866 = vmatprep.subr.bf16.mxu0 0
      %867 = vmatpush1.bf16.msra.mxu0 0
      %868 = vmatprep.subr.bf16.mxu0 0
      %869 = vmatpush1.bf16.msra.mxu0 0
      %870 = vmatprep.subr.bf16.mxu0 0
      %871 = vmatpush1.bf16.msra.mxu0 0
      %872 = vmatprep.subr.bf16.mxu0 0
      %873 = vmatpush1.bf16.msra.mxu0 0
      %874 = vmatprep.subr.bf16.mxu0 0
      %875 = vmatpush1.bf16.msra.mxu0 0
      %876 = vmatprep.subr.bf16.mxu0 0
      %877 = vmatpush1.bf16.msra.mxu0 0
      %878 = vmatprep.subr.bf16.mxu0 0
      %879 = vmatpush1.bf16.msra.mxu0 0
      %880 = vmatprep.subr.bf16.mxu0 0
      %881 = vmatpush1.bf16.msra.mxu0 %v864
      %882 = vmatprep.subr.bf16.mxu0 0
      %883 = vmatpush2.bf16.msra.mxu0 0
      %884 = vmatprep.subr.bf16.mxu0 0
      %885 = vmatpush2.bf16.msra.mxu0 0
      %886 = vmatprep.subr.bf16.mxu0 0
      %887 = vmatpush2.bf16.msra.mxu0 0
      %888 = vmatprep.subr.bf16.mxu0 0
      %889 = vmatpush2.bf16.msra.mxu0 0
      %890 = vmatprep.subr.bf16.mxu0 0
      %891 = vmatpush2.bf16.msra.mxu0 0
      %892 = vmatprep.subr.bf16.mxu0 0
      %893 = vmatpush2.bf16.msra.mxu0 0
      %894 = vmatprep.subr.bf16.mxu0 0
      %895 = vmatpush2.bf16.msra.mxu0 0
      %896 = vmatprep.subr.bf16.mxu0 0
      %897 = vmatpush2.bf16.msra.mxu0 0
      %898 = vmatprep.mubr.bf16.mxu0 0
      %899 = vmatmul.mubr.bf16.gmra.mxu0 %v861
      %v900 = vpop.f32.mrf.mxu0
      %v901 = vadd.f32 0.0, %v900
      %v902 = vpop.f32.mrf.mxu0
      %v903 = vpop.f32.mrf.mxu0
      %v904 = vpop.f32.mrf.mxu0
      %905 = vdwg.mxu0
      %907 = vrot.lane.b32.xlu0 %v681, 8
      %v908 = vpop.permute.xlu0 %907
      %911 = vrot.lane.b32.xlu0 %v791, 16
      %v912 = vpop.permute.xlu0 %911
      %915 = vrot.lane.b32.xlu0 %v901, 24
      %v916 = vpop.permute.xlu0 %915
      %v918 = vsel %vm463, %v571, %v908
      %vm919 = vcmask 130048
      %v920 = vsel %vm919, %v918, %v912
      %vm921 = vcmask 195584
      %v922 = vsel %vm921, %v920, %v916
      %v923 = vpack.c.bf16 %v922, %v922
      %v924 = vld [vmem:[%s368] sm:$0xf]
      %v925 = vld [vmem:[%s368 + $0x4] sm:$0xf]
      %v926 = vld [vmem:[%s368 + $0x8] sm:$0xf]
      %v927 = vld [vmem:[%s368 + $0xc] sm:$0xf]
      %v928 = vld [vmem:[%s371] sm:$0x1]
      %v930 = vlaneseq
      %v931 = vshrl.u32 %v930, 7
      %v932 = vsub.s32 0, %v931
      %v933 = vrot.slane %v928, %v932
      %v939 = vunpack.c.l.b16 %v924
      %v940 = vunpack.c.l.b16 %v925
      %v941 = vunpack.c.l.b16 %v926
      %v942 = vunpack.c.l.b16 %v927
      %v943 = vpack.c.b16 %v940, %v939
      %v944 = vpack.c.b16 %v942, %v941
      %v948 = vsel %vm415, %v923, 0
      %950 = vmatprep.subr.bf16.mxu0 0
      %951 = vmatpush1.bf16.msra.mxu0 0
      %952 = vmatprep.subr.bf16.mxu0 0
      %953 = vmatpush1.bf16.msra.mxu0 0
      %954 = vmatprep.subr.bf16.mxu0 0
      %955 = vmatpush1.bf16.msra.mxu0 0
      %956 = vmatprep.subr.bf16.mxu0 0
      %957 = vmatpush1.bf16.msra.mxu0 0
      %958 = vmatprep.subr.bf16.mxu0 0
      %959 = vmatpush1.bf16.msra.mxu0 0
      %960 = vmatprep.subr.bf16.mxu0 0
      %961 = vmatpush1.bf16.msra.mxu0 0
      %962 = vmatprep.subr.bf16.mxu0 0
      %963 = vmatpush1.bf16.msra.mxu0 %v944
      %964 = vmatprep.subr.bf16.mxu0 0
      %965 = vmatpush1.bf16.msra.mxu0 %v943
      %966 = vmatprep.subr.bf16.mxu0 0
      %967 = vmatpush2.bf16.msra.mxu0 0
      %968 = vmatprep.subr.bf16.mxu0 0
      %969 = vmatpush2.bf16.msra.mxu0 0
      %970 = vmatprep.subr.bf16.mxu0 0
      %971 = vmatpush2.bf16.msra.mxu0 0
      %972 = vmatprep.subr.bf16.mxu0 0
      %973 = vmatpush2.bf16.msra.mxu0 0
      %974 = vmatprep.subr.bf16.mxu0 0
      %975 = vmatpush2.bf16.msra.mxu0 0
      %976 = vmatprep.subr.bf16.mxu0 0
      %977 = vmatpush2.bf16.msra.mxu0 0
      %978 = vmatprep.subr.bf16.mxu0 0
      %979 = vmatpush2.bf16.msra.mxu0 0
      %980 = vmatprep.subr.bf16.mxu0 0
      %981 = vmatpush2.bf16.msra.mxu0 0
      %982 = vmatprep.mubr.bf16.mxu0 0
      %983 = vmatmul.mubr.bf16.gmra.mxu0 %v948
      %v984 = vpop.f32.mrf.mxu0
      %v985 = vadd.f32 %v933, %v984
      %v986 = vpop.f32.mrf.mxu0
      %v987 = vpop.f32.mrf.mxu0
      %v988 = vpop.f32.mrf.mxu0
      %989 = vdwg.mxu0
      %v990 = vadd.f32 %v390, %v985
      %v991 = vld [vmem:[%s374] sm:$0x1]
      %v992 = vld [vmem:[%s377] sm:$0x1]
      %vm993 = vcmask 256000
      %v994 = vsel %vm993, %v990, 0.0
      %995 = vadd.xlane.f32.xlu0 %v994
      %v996 = vpop.xlane.xlu0 %995
      %v997 = vrcp.pop 32.0
      %v998 = vmul.f32 %v996, %v997
      %v999 = vsub.f32 %v990, %v998
      %v1000 = vmul.f32 %v999, %v999
      %v1001 = vsel %vm993, %v1000, 0.0
      %1002 = vadd.xlane.f32.xlu0 %v1001
      %v1003 = vpop.xlane.xlu0 %1002
      %v1004 = vmul.f32 %v1003, %v997
      %v1005 = vadd.f32 %v1004, 1e-05
      %v1006 = vrsqrt.pop %v1005
      %v1007 = vmul.f32 %v999, %v1006
      %v1009 = vlaneseq
      %v1010 = vshrl.u32 %v1009, 7
      %v1011 = vsub.s32 0, %v1010
      %v1012 = vrot.slane %v991, %v1011
      %v1014 = vmul.f32 %v1007, %v1012
      %v1016 = vlaneseq
      %v1017 = vshrl.u32 %v1016, 7
      %v1018 = vsub.s32 0, %v1017
      %v1019 = vrot.slane %v992, %v1018
      %v1021 = vadd.f32 %v1014, %v1019
      %1022 = vst.msk [vmem:[%s381] sm:$0x7] %vm993, %v1021
      %p1023 = scmp.lt.s32.totalorder %s22, 1
      %s1024 = scalar_select %p1023, %s22, 1
      %s1025 = smul.addr %s1024, 4
      %s1026 = scalar_lea.vmem %s7, %s1025
      // Predicated region
      $region53: #{bottom_up_top_down_encoder.4} parent=47 // pred_check
        %p1027 = pneg %p230
      $region54: #{bottom_up_top_down_encoder.4} parent=47 // pred_check_branch
        %1029 = sbr.rel (%p1027) target = $region56
      $region55: #{bottom_up_top_down_encoder.4} parent=47 // pred_region
        _
      $region56: #{bottom_up_top_down_encoder.4} parent=47 // pred_fallthru
        _
    $region48: #{bottom_up_top_down_encoder.4} parent=5 // pred_fallthru
      _
    %p1030 = scmp.le.s32.totalorder 2, %s13
    // Predicated region
    $region57: #{bottom_up_top_down_encoder.4} parent=5 // pred_check
      %p1031 = pneg %p1030
    $region58: #{bottom_up_top_down_encoder.4} parent=5 // pred_check_branch
      %1033 = sbr.rel (%p1031) target = $region60
    $region59: #{bottom_up_top_down_encoder.4} parent=5 // pred_region
      %s1034 = ssub.s32 %s13, 2
      // Predicated region
      $region61: #{bottom_up_top_down_encoder.4} parent=59 // pred_check
        %p1035 = pneg %p236
      $region62: #{bottom_up_top_down_encoder.4} parent=59 // pred_check_branch
        %1037 = sbr.rel (%p1035) target = $region64
      $region63: #{bottom_up_top_down_encoder.4} parent=59 // pred_region
        %p1038 = scmp.lt.s32.totalorder %s24, 1
        %s1039 = scalar_select %p1038, %s24, 1
        %s1040 = smul.addr %s1039, 4
        %s1041 = scalar_lea.vmem %s7, %s1040
      $region64: #{bottom_up_top_down_encoder.4} parent=59 // pred_fallthru
        _
    $region60: #{bottom_up_top_down_encoder.4} parent=5 // pred_fallthru
      _
  $region6: #{bottom_up_top_down_encoder.4} parent=0 // loop_footer
    %s17 = sadd.s32 1, %s13
  $region7: #{bottom_up_top_down_encoder.4} parent=0 // loop_footer_branch
    %12 = sbr.rel target = $region3
  $region8: #{bottom_up_top_down_encoder.4} parent=0 // loop_exit
    _

// kernel: bottom_up_top_down_encoder.5
$region0: #{bottom_up_top_down_encoder.5}
  #allocation0 [shape = 'u32[]', space=smem, size = 0x4, offset = 0x4, fixed_abs, tag = 'smem constant byte address 0x4 - core index']
  #allocation1 [shape = 'u32[144,128]{1,0:T(1,128)}', space=vmem, size = 0x12000, scoped, tag = 'internal scratch']
  %s0 = inlined_call_operand.vmem [shape: f32[2,16,32], index: 0, kind: input, shape index: {}]
  %s1 = inlined_call_operand.vmem [shape: f32[2,3,32], index: 1, kind: input, shape index: {}]
  %s2 = inlined_call_operand.vmem [shape: bf16[2,32,96], index: 2, kind: input, shape index: {}]
  %s3 = inlined_call_operand.vmem [shape: f32[2,1,96], index: 3, kind: input, shape index: {}]
  %s4 = inlined_call_operand.vmem [shape: bf16[2,32,32], index: 4, kind: input, shape index: {}]
  %s5 = inlined_call_operand.vmem [shape: f32[2,1,32], index: 5, kind: input, shape index: {}]
  %s6 = inlined_call_operand.vmem [shape: bf16[2,32,64], index: 6, kind: input, shape index: {}]
  %s7 = inlined_call_operand.vmem [shape: f32[2,1,64], index: 7, kind: input, shape index: {}]
  %s8 = inlined_call_operand.vmem [shape: bf16[2,32,32], index: 8, kind: input, shape index: {}]
  %s9 = inlined_call_operand.vmem [shape: f32[2,1,32], index: 9, kind: input, shape index: {}]
  %s10 = inlined_call_operand.vmem [shape: f32[2,1,32], index: 10, kind: input, shape index: {}]
  %s11 = inlined_call_operand.vmem [shape: f32[2,1,32], index: 11, kind: input, shape index: {}]
  %s12 = inlined_call_operand.vmem [shape: bf16[2,32,64], index: 12, kind: input, shape index: {}]
  %s13 = inlined_call_operand.vmem [shape: f32[2,1,64], index: 13, kind: input, shape index: {}]
  %s14 = inlined_call_operand.vmem [shape: bf16[2,64,32], index: 14, kind: input, shape index: {}]
  %s15 = inlined_call_operand.vmem [shape: f32[2,1,32], index: 15, kind: input, shape index: {}]
  %s16 = inlined_call_operand.vmem [shape: f32[2,1,32], index: 16, kind: input, shape index: {}]
  %s17 = inlined_call_operand.vmem [shape: f32[2,1,32], index: 17, kind: input, shape index: {}]
  %s18 = inlined_call_operand.vmem [shape: f32[2,16,32], index: 18, kind: output, shape index: {}]
  %s19 = sld [smem:[#allocation0]]
  $region109: #{bottom_up_top_down_encoder.5} parent=0
    _
  %s21 = ssub.s32 1, %s19
  %s22 = scalar_select 0, %s21, %s19
  loop: start=0, step=1, limit=6
  $region2: #{bottom_up_top_down_encoder.5} parent=0 // loop_pre_header
    _
  $region3: #{bottom_up_top_down_encoder.5} parent=0 // loop_header
    %s24 = sphi 0, %s28
    %p25 = scmp.ge.s32.totalorder %s24, 6
    %s31 = sphi 0, %s43
    %s32 = sphi 0, %s39
    %s33 = sphi 0, %s31
    %s34 = sphi 0, %s32
    %s35 = sphi 0, %s33
    %s36 = sphi 0, %s34
    %s46 = sphi 0, %s48
    %s49 = sphi 0, %s46
    %s50 = sphi 0, %s49
    %s66 = sphi 0, %s50
    %s72 = sphi 0, %s74
    %s75 = sphi 0, %s72
    %s76 = sphi 0, %s75
    %s92 = sphi 0, %s76
    %s98 = sphi 0, %s100
    %s101 = sphi 0, %s98
    %s102 = sphi 0, %s101
    %s118 = sphi 0, %s102
    %s124 = sphi 0, %s126
    %s127 = sphi 0, %s124
    %s128 = sphi 0, %s127
    %s144 = sphi 0, %s128
    %s150 = sphi 0, %s152
    %s153 = sphi 0, %s150
    %s154 = sphi 0, %s153
    %s170 = sphi 0, %s154
    %s176 = sphi 0, %s178
    %s179 = sphi 0, %s176
    %s180 = sphi 0, %s179
    %s196 = sphi 0, %s180
    %s202 = sphi 0, %s204
    %s205 = sphi 0, %s202
    %s206 = sphi 0, %s205
    %s222 = sphi 0, %s206
    %s228 = sphi 0, %s230
    %s231 = sphi 0, %s228
    %s232 = sphi 0, %s231
    %s248 = sphi 0, %s232
    %s254 = sphi 0, %s256
    %s257 = sphi 0, %s254
    %s258 = sphi 0, %s257
    %s274 = sphi 0, %s258
    %s280 = sphi 0, %s282
    %s283 = sphi 0, %s280
    %s284 = sphi 0, %s283
    %s300 = sphi 0, %s284
    %s306 = sphi 0, %s308
    %s309 = sphi 0, %s306
    %s310 = sphi 0, %s309
    %s326 = sphi 0, %s310
    %s332 = sphi 0, %s334
    %s335 = sphi 0, %s332
    %s336 = sphi 0, %s335
    %s352 = sphi 0, %s336
    %s358 = sphi 0, %s360
    %s361 = sphi 0, %s358
    %s362 = sphi 0, %s361
    %s378 = sphi 0, %s362
    %s384 = sphi 0, %s386
    %s387 = sphi 0, %s384
    %s388 = sphi 0, %s387
    %s404 = sphi 0, %s388
    %s410 = sphi 0, %s412
    %s413 = sphi 0, %s410
    %s414 = sphi 0, %s413
    %s430 = sphi 0, %s414
    %s436 = sphi 0, %s438
    %s439 = sphi 0, %s436
    %s440 = sphi 0, %s439
    %s456 = sphi 0, %s440
    %s462 = sphi 0, %s464
    %s465 = sphi 0, %s462
    %s466 = sphi 0, %s465
    %s482 = sphi 0, %s466
    %s488 = sphi 0, %s490
    %s491 = sphi 0, %s488
    %s492 = sphi 0, %s491
    %s508 = sphi 0, %s492
    %s514 = sphi 0, %s516
    %s517 = sphi 0, %s514
    %s518 = sphi 0, %s517
    %s534 = sphi 0, %s518
  $region4: #{bottom_up_top_down_encoder.5} parent=0 // loop_header_branch
    %27 = sbr.rel (%p25) target = $region8
  $region5: #{bottom_up_top_down_encoder.5} parent=0 // loop_body
    %s29 = ssub.s32 %s24, 1
    %s30 = ssub.s32 %s24, 2
    %s37 = sadd.s32 1, %s32
    %p38 = scmp.ge.s32.totalorder %s37, 2
    %s39 = scalar_select %p38, 0, %s37
    %s40 = sadd.s32 1, %s31
    %s41 = scalar_select %p38, %s40, %s31
    %p42 = scmp.ge.s32.totalorder %s41, 2
    %s43 = scalar_select %p42, 0, %s41
    %s44 = ssub.s32 %s31, %s43
    %p45 = scmp.eq.s32.totalorder %s44, 0
    %s47 = sadd.s32 %s46, 1
    %s48 = scalar_select %p45, %s46, %s47
    %p51 = pneg %p45
    %p52 = scmp.eq.s32.totalorder %s24, 3
    %p53 = por %p51, %p52
    %p54 = scmp.ne.s32.totalorder %s46, %s49
    %p55 = scmp.eq.s32.totalorder %s24, 0
    %p56 = por %p54, %p55
    %p57 = scmp.ne.s32.totalorder %s46, %s49
    %p58 = scmp.eq.s32.totalorder %s29, 3
    %p59 = por %p57, %p58
    %p60 = scmp.ne.s32.totalorder %s49, %s50
    %p61 = scmp.eq.s32.totalorder %s29, 0
    %p62 = por %p60, %p61
    %p63 = scmp.ne.s32.totalorder %s49, %s50
    %p64 = scmp.eq.s32.totalorder %s30, 3
    %p65 = por %p63, %p64
    %p67 = scmp.ne.s32.totalorder %s50, %s66
    %p68 = scmp.eq.s32.totalorder %s30, 0
    %p69 = por %p67, %p68
    %s70 = ssub.s32 %s31, %s43
    %p71 = scmp.eq.s32.totalorder %s70, 0
    %s73 = sadd.s32 %s72, 1
    %s74 = scalar_select %p71, %s72, %s73
    %p77 = pneg %p71
    %p78 = scmp.eq.s32.totalorder %s24, 3
    %p79 = por %p77, %p78
    %p80 = scmp.ne.s32.totalorder %s72, %s75
    %p81 = scmp.eq.s32.totalorder %s24, 0
    %p82 = por %p80, %p81
    %p83 = scmp.ne.s32.totalorder %s72, %s75
    %p84 = scmp.eq.s32.totalorder %s29, 3
    %p85 = por %p83, %p84
    %p86 = scmp.ne.s32.totalorder %s75, %s76
    %p87 = scmp.eq.s32.totalorder %s29, 0
    %p88 = por %p86, %p87
    %p89 = scmp.ne.s32.totalorder %s75, %s76
    %p90 = scmp.eq.s32.totalorder %s30, 3
    %p91 = por %p89, %p90
    %p93 = scmp.ne.s32.totalorder %s76, %s92
    %p94 = scmp.eq.s32.totalorder %s30, 0
    %p95 = por %p93, %p94
    %s96 = ssub.s32 %s32, %s39
    %p97 = scmp.eq.s32.totalorder %s96, 0
    %s99 = sadd.s32 %s98, 1
    %s100 = scalar_select %p97, %s98, %s99
    %p103 = pneg %p97
    %p104 = scmp.eq.s32.totalorder %s24, 3
    %p105 = por %p103, %p104
    %p106 = scmp.ne.s32.totalorder %s98, %s101
    %p107 = scmp.eq.s32.totalorder %s24, 0
    %p108 = por %p106, %p107
    %p109 = scmp.ne.s32.totalorder %s98, %s101
    %p110 = scmp.eq.s32.totalorder %s29, 3
    %p111 = por %p109, %p110
    %p112 = scmp.ne.s32.totalorder %s101, %s102
    %p113 = scmp.eq.s32.totalorder %s29, 0
    %p114 = por %p112, %p113
    %p115 = scmp.ne.s32.totalorder %s101, %s102
    %p116 = scmp.eq.s32.totalorder %s30, 3
    %p117 = por %p115, %p116
    %p119 = scmp.ne.s32.totalorder %s102, %s118
    %p120 = scmp.eq.s32.totalorder %s30, 0
    %p121 = por %p119, %p120
    %s122 = ssub.s32 %s32, %s39
    %p123 = scmp.eq.s32.totalorder %s122, 0
    %s125 = sadd.s32 %s124, 1
    %s126 = scalar_select %p123, %s124, %s125
    %p129 = pneg %p123
    %p130 = scmp.eq.s32.totalorder %s24, 3
    %p131 = por %p129, %p130
    %p132 = scmp.ne.s32.totalorder %s124, %s127
    %p133 = scmp.eq.s32.totalorder %s24, 0
    %p134 = por %p132, %p133
    %p135 = scmp.ne.s32.totalorder %s124, %s127
    %p136 = scmp.eq.s32.totalorder %s29, 3
    %p137 = por %p135, %p136
    %p138 = scmp.ne.s32.totalorder %s127, %s128
    %p139 = scmp.eq.s32.totalorder %s29, 0
    %p140 = por %p138, %p139
    %p141 = scmp.ne.s32.totalorder %s127, %s128
    %p142 = scmp.eq.s32.totalorder %s30, 3
    %p143 = por %p141, %p142
    %p145 = scmp.ne.s32.totalorder %s128, %s144
    %p146 = scmp.eq.s32.totalorder %s30, 0
    %p147 = por %p145, %p146
    %s148 = ssub.s32 %s32, %s39
    %p149 = scmp.eq.s32.totalorder %s148, 0
    %s151 = sadd.s32 %s150, 1
    %s152 = scalar_select %p149, %s150, %s151
    %p155 = pneg %p149
    %p156 = scmp.eq.s32.totalorder %s24, 3
    %p157 = por %p155, %p156
    %p158 = scmp.ne.s32.totalorder %s150, %s153
    %p159 = scmp.eq.s32.totalorder %s24, 0
    %p160 = por %p158, %p159
    %p161 = scmp.ne.s32.totalorder %s150, %s153
    %p162 = scmp.eq.s32.totalorder %s29, 3
    %p163 = por %p161, %p162
    %p164 = scmp.ne.s32.totalorder %s153, %s154
    %p165 = scmp.eq.s32.totalorder %s29, 0
    %p166 = por %p164, %p165
    %p167 = scmp.ne.s32.totalorder %s153, %s154
    %p168 = scmp.eq.s32.totalorder %s30, 3
    %p169 = por %p167, %p168
    %p171 = scmp.ne.s32.totalorder %s154, %s170
    %p172 = scmp.eq.s32.totalorder %s30, 0
    %p173 = por %p171, %p172
    %s174 = ssub.s32 %s32, %s39
    %p175 = scmp.eq.s32.totalorder %s174, 0
    %s177 = sadd.s32 %s176, 1
    %s178 = scalar_select %p175, %s176, %s177
    %p181 = pneg %p175
    %p182 = scmp.eq.s32.totalorder %s24, 3
    %p183 = por %p181, %p182
    %p184 = scmp.ne.s32.totalorder %s176, %s179
    %p185 = scmp.eq.s32.totalorder %s24, 0
    %p186 = por %p184, %p185
    %p187 = scmp.ne.s32.totalorder %s176, %s179
    %p188 = scmp.eq.s32.totalorder %s29, 3
    %p189 = por %p187, %p188
    %p190 = scmp.ne.s32.totalorder %s179, %s180
    %p191 = scmp.eq.s32.totalorder %s29, 0
    %p192 = por %p190, %p191
    %p193 = scmp.ne.s32.totalorder %s179, %s180
    %p194 = scmp.eq.s32.totalorder %s30, 3
    %p195 = por %p193, %p194
    %p197 = scmp.ne.s32.totalorder %s180, %s196
    %p198 = scmp.eq.s32.totalorder %s30, 0
    %p199 = por %p197, %p198
    %s200 = ssub.s32 %s32, %s39
    %p201 = scmp.eq.s32.totalorder %s200, 0
    %s203 = sadd.s32 %s202, 1
    %s204 = scalar_select %p201, %s202, %s203
    %p207 = pneg %p201
    %p208 = scmp.eq.s32.totalorder %s24, 3
    %p209 = por %p207, %p208
    %p210 = scmp.ne.s32.totalorder %s202, %s205
    %p211 = scmp.eq.s32.totalorder %s24, 0
    %p212 = por %p210, %p211
    %p213 = scmp.ne.s32.totalorder %s202, %s205
    %p214 = scmp.eq.s32.totalorder %s29, 3
    %p215 = por %p213, %p214
    %p216 = scmp.ne.s32.totalorder %s205, %s206
    %p217 = scmp.eq.s32.totalorder %s29, 0
    %p218 = por %p216, %p217
    %p219 = scmp.ne.s32.totalorder %s205, %s206
    %p220 = scmp.eq.s32.totalorder %s30, 3
    %p221 = por %p219, %p220
    %p223 = scmp.ne.s32.totalorder %s206, %s222
    %p224 = scmp.eq.s32.totalorder %s30, 0
    %p225 = por %p223, %p224
    %s226 = ssub.s32 %s32, %s39
    %p227 = scmp.eq.s32.totalorder %s226, 0
    %s229 = sadd.s32 %s228, 1
    %s230 = scalar_select %p227, %s228, %s229
    %p233 = pneg %p227
    %p234 = scmp.eq.s32.totalorder %s24, 3
    %p235 = por %p233, %p234
    %p236 = scmp.ne.s32.totalorder %s228, %s231
    %p237 = scmp.eq.s32.totalorder %s24, 0
    %p238 = por %p236, %p237
    %p239 = scmp.ne.s32.totalorder %s228, %s231
    %p240 = scmp.eq.s32.totalorder %s29, 3
    %p241 = por %p239, %p240
    %p242 = scmp.ne.s32.totalorder %s231, %s232
    %p243 = scmp.eq.s32.totalorder %s29, 0
    %p244 = por %p242, %p243
    %p245 = scmp.ne.s32.totalorder %s231, %s232
    %p246 = scmp.eq.s32.totalorder %s30, 3
    %p247 = por %p245, %p246
    %p249 = scmp.ne.s32.totalorder %s232, %s248
    %p250 = scmp.eq.s32.totalorder %s30, 0
    %p251 = por %p249, %p250
    %s252 = ssub.s32 %s32, %s39
    %p253 = scmp.eq.s32.totalorder %s252, 0
    %s255 = sadd.s32 %s254, 1
    %s256 = scalar_select %p253, %s254, %s255
    %p259 = pneg %p253
    %p260 = scmp.eq.s32.totalorder %s24, 3
    %p261 = por %p259, %p260
    %p262 = scmp.ne.s32.totalorder %s254, %s257
    %p263 = scmp.eq.s32.totalorder %s24, 0
    %p264 = por %p262, %p263
    %p265 = scmp.ne.s32.totalorder %s254, %s257
    %p266 = scmp.eq.s32.totalorder %s29, 3
    %p267 = por %p265, %p266
    %p268 = scmp.ne.s32.totalorder %s257, %s258
    %p269 = scmp.eq.s32.totalorder %s29, 0
    %p270 = por %p268, %p269
    %p271 = scmp.ne.s32.totalorder %s257, %s258
    %p272 = scmp.eq.s32.totalorder %s30, 3
    %p273 = por %p271, %p272
    %p275 = scmp.ne.s32.totalorder %s258, %s274
    %p276 = scmp.eq.s32.totalorder %s30, 0
    %p277 = por %p275, %p276
    %s278 = ssub.s32 %s32, %s39
    %p279 = scmp.eq.s32.totalorder %s278, 0
    %s281 = sadd.s32 %s280, 1
    %s282 = scalar_select %p279, %s280, %s281
    %p285 = pneg %p279
    %p286 = scmp.eq.s32.totalorder %s24, 3
    %p287 = por %p285, %p286
    %p288 = scmp.ne.s32.totalorder %s280, %s283
    %p289 = scmp.eq.s32.totalorder %s24, 0
    %p290 = por %p288, %p289
    %p291 = scmp.ne.s32.totalorder %s280, %s283
    %p292 = scmp.eq.s32.totalorder %s29, 3
    %p293 = por %p291, %p292
    %p294 = scmp.ne.s32.totalorder %s283, %s284
    %p295 = scmp.eq.s32.totalorder %s29, 0
    %p296 = por %p294, %p295
    %p297 = scmp.ne.s32.totalorder %s283, %s284
    %p298 = scmp.eq.s32.totalorder %s30, 3
    %p299 = por %p297, %p298
    %p301 = scmp.ne.s32.totalorder %s284, %s300
    %p302 = scmp.eq.s32.totalorder %s30, 0
    %p303 = por %p301, %p302
    %s304 = ssub.s32 %s32, %s39
    %p305 = scmp.eq.s32.totalorder %s304, 0
    %s307 = sadd.s32 %s306, 1
    %s308 = scalar_select %p305, %s306, %s307
    %p311 = pneg %p305
    %p312 = scmp.eq.s32.totalorder %s24, 3
    %p313 = por %p311, %p312
    %p314 = scmp.ne.s32.totalorder %s306, %s309
    %p315 = scmp.eq.s32.totalorder %s24, 0
    %p316 = por %p314, %p315
    %p317 = scmp.ne.s32.totalorder %s306, %s309
    %p318 = scmp.eq.s32.totalorder %s29, 3
    %p319 = por %p317, %p318
    %p320 = scmp.ne.s32.totalorder %s309, %s310
    %p321 = scmp.eq.s32.totalorder %s29, 0
    %p322 = por %p320, %p321
    %p323 = scmp.ne.s32.totalorder %s309, %s310
    %p324 = scmp.eq.s32.totalorder %s30, 3
    %p325 = por %p323, %p324
    %p327 = scmp.ne.s32.totalorder %s310, %s326
    %p328 = scmp.eq.s32.totalorder %s30, 0
    %p329 = por %p327, %p328
    %s330 = ssub.s32 %s32, %s39
    %p331 = scmp.eq.s32.totalorder %s330, 0
    %s333 = sadd.s32 %s332, 1
    %s334 = scalar_select %p331, %s332, %s333
    %p337 = pneg %p331
    %p338 = scmp.eq.s32.totalorder %s24, 3
    %p339 = por %p337, %p338
    %p340 = scmp.ne.s32.totalorder %s332, %s335
    %p341 = scmp.eq.s32.totalorder %s24, 0
    %p342 = por %p340, %p341
    %p343 = scmp.ne.s32.totalorder %s332, %s335
    %p344 = scmp.eq.s32.totalorder %s29, 3
    %p345 = por %p343, %p344
    %p346 = scmp.ne.s32.totalorder %s335, %s336
    %p347 = scmp.eq.s32.totalorder %s29, 0
    %p348 = por %p346, %p347
    %p349 = scmp.ne.s32.totalorder %s335, %s336
    %p350 = scmp.eq.s32.totalorder %s30, 3
    %p351 = por %p349, %p350
    %p353 = scmp.ne.s32.totalorder %s336, %s352
    %p354 = scmp.eq.s32.totalorder %s30, 0
    %p355 = por %p353, %p354
    %s356 = ssub.s32 %s32, %s39
    %p357 = scmp.eq.s32.totalorder %s356, 0
    %s359 = sadd.s32 %s358, 1
    %s360 = scalar_select %p357, %s358, %s359
    %p363 = pneg %p357
    %p364 = scmp.eq.s32.totalorder %s24, 3
    %p365 = por %p363, %p364
    %p366 = scmp.ne.s32.totalorder %s358, %s361
    %p367 = scmp.eq.s32.totalorder %s24, 0
    %p368 = por %p366, %p367
    %p369 = scmp.ne.s32.totalorder %s358, %s361
    %p370 = scmp.eq.s32.totalorder %s29, 3
    %p371 = por %p369, %p370
    %p372 = scmp.ne.s32.totalorder %s361, %s362
    %p373 = scmp.eq.s32.totalorder %s29, 0
    %p374 = por %p372, %p373
    %p375 = scmp.ne.s32.totalorder %s361, %s362
    %p376 = scmp.eq.s32.totalorder %s30, 3
    %p377 = por %p375, %p376
    %p379 = scmp.ne.s32.totalorder %s362, %s378
    %p380 = scmp.eq.s32.totalorder %s30, 0
    %p381 = por %p379, %p380
    %s382 = ssub.s32 %s32, %s39
    %p383 = scmp.eq.s32.totalorder %s382, 0
    %s385 = sadd.s32 %s384, 1
    %s386 = scalar_select %p383, %s384, %s385
    %p389 = pneg %p383
    %p390 = scmp.eq.s32.totalorder %s24, 3
    %p391 = por %p389, %p390
    %p392 = scmp.ne.s32.totalorder %s384, %s387
    %p393 = scmp.eq.s32.totalorder %s24, 0
    %p394 = por %p392, %p393
    %p395 = scmp.ne.s32.totalorder %s384, %s387
    %p396 = scmp.eq.s32.totalorder %s29, 3
    %p397 = por %p395, %p396
    %p398 = scmp.ne.s32.totalorder %s387, %s388
    %p399 = scmp.eq.s32.totalorder %s29, 0
    %p400 = por %p398, %p399
    %p401 = scmp.ne.s32.totalorder %s387, %s388
    %p402 = scmp.eq.s32.totalorder %s30, 3
    %p403 = por %p401, %p402
    %p405 = scmp.ne.s32.totalorder %s388, %s404
    %p406 = scmp.eq.s32.totalorder %s30, 0
    %p407 = por %p405, %p406
    %s408 = ssub.s32 %s32, %s39
    %p409 = scmp.eq.s32.totalorder %s408, 0
    %s411 = sadd.s32 %s410, 1
    %s412 = scalar_select %p409, %s410, %s411
    %p415 = pneg %p409
    %p416 = scmp.eq.s32.totalorder %s24, 3
    %p417 = por %p415, %p416
    %p418 = scmp.ne.s32.totalorder %s410, %s413
    %p419 = scmp.eq.s32.totalorder %s24, 0
    %p420 = por %p418, %p419
    %p421 = scmp.ne.s32.totalorder %s410, %s413
    %p422 = scmp.eq.s32.totalorder %s29, 3
    %p423 = por %p421, %p422
    %p424 = scmp.ne.s32.totalorder %s413, %s414
    %p425 = scmp.eq.s32.totalorder %s29, 0
    %p426 = por %p424, %p425
    %p427 = scmp.ne.s32.totalorder %s413, %s414
    %p428 = scmp.eq.s32.totalorder %s30, 3
    %p429 = por %p427, %p428
    %p431 = scmp.ne.s32.totalorder %s414, %s430
    %p432 = scmp.eq.s32.totalorder %s30, 0
    %p433 = por %p431, %p432
    %s434 = ssub.s32 %s32, %s39
    %p435 = scmp.eq.s32.totalorder %s434, 0
    %s437 = sadd.s32 %s436, 1
    %s438 = scalar_select %p435, %s436, %s437
    %p441 = pneg %p435
    %p442 = scmp.eq.s32.totalorder %s24, 3
    %p443 = por %p441, %p442
    %p444 = scmp.ne.s32.totalorder %s436, %s439
    %p445 = scmp.eq.s32.totalorder %s24, 0
    %p446 = por %p444, %p445
    %p447 = scmp.ne.s32.totalorder %s436, %s439
    %p448 = scmp.eq.s32.totalorder %s29, 3
    %p449 = por %p447, %p448
    %p450 = scmp.ne.s32.totalorder %s439, %s440
    %p451 = scmp.eq.s32.totalorder %s29, 0
    %p452 = por %p450, %p451
    %p453 = scmp.ne.s32.totalorder %s439, %s440
    %p454 = scmp.eq.s32.totalorder %s30, 3
    %p455 = por %p453, %p454
    %p457 = scmp.ne.s32.totalorder %s440, %s456
    %p458 = scmp.eq.s32.totalorder %s30, 0
    %p459 = por %p457, %p458
    %s460 = ssub.s32 %s32, %s39
    %p461 = scmp.eq.s32.totalorder %s460, 0
    %s463 = sadd.s32 %s462, 1
    %s464 = scalar_select %p461, %s462, %s463
    %p467 = pneg %p461
    %p468 = scmp.eq.s32.totalorder %s24, 3
    %p469 = por %p467, %p468
    %p470 = scmp.ne.s32.totalorder %s462, %s465
    %p471 = scmp.eq.s32.totalorder %s24, 0
    %p472 = por %p470, %p471
    %p473 = scmp.ne.s32.totalorder %s462, %s465
    %p474 = scmp.eq.s32.totalorder %s29, 3
    %p475 = por %p473, %p474
    %p476 = scmp.ne.s32.totalorder %s465, %s466
    %p477 = scmp.eq.s32.totalorder %s29, 0
    %p478 = por %p476, %p477
    %p479 = scmp.ne.s32.totalorder %s465, %s466
    %p480 = scmp.eq.s32.totalorder %s30, 3
    %p481 = por %p479, %p480
    %p483 = scmp.ne.s32.totalorder %s466, %s482
    %p484 = scmp.eq.s32.totalorder %s30, 0
    %p485 = por %p483, %p484
    %s486 = ssub.s32 %s32, %s39
    %p487 = scmp.eq.s32.totalorder %s486, 0
    %s489 = sadd.s32 %s488, 1
    %s490 = scalar_select %p487, %s488, %s489
    %p493 = pneg %p487
    %p494 = scmp.eq.s32.totalorder %s24, 3
    %p495 = por %p493, %p494
    %p496 = scmp.ne.s32.totalorder %s488, %s491
    %p497 = scmp.eq.s32.totalorder %s24, 0
    %p498 = por %p496, %p497
    %p499 = scmp.ne.s32.totalorder %s488, %s491
    %p500 = scmp.eq.s32.totalorder %s29, 3
    %p501 = por %p499, %p500
    %p502 = scmp.ne.s32.totalorder %s491, %s492
    %p503 = scmp.eq.s32.totalorder %s29, 0
    %p504 = por %p502, %p503
    %p505 = scmp.ne.s32.totalorder %s491, %s492
    %p506 = scmp.eq.s32.totalorder %s30, 3
    %p507 = por %p505, %p506
    %p509 = scmp.ne.s32.totalorder %s492, %s508
    %p510 = scmp.eq.s32.totalorder %s30, 0
    %p511 = por %p509, %p510
    %s512 = ssub.s32 %s31, %s43
    %p513 = scmp.eq.s32.totalorder %s512, 0
    %s515 = sadd.s32 %s514, 1
    %s516 = scalar_select %p513, %s514, %s515
    %p519 = pneg %p513
    %p520 = scmp.eq.s32.totalorder %s24, 3
    %p521 = por %p519, %p520
    %p522 = scmp.ne.s32.totalorder %s514, %s517
    %p523 = scmp.eq.s32.totalorder %s24, 0
    %p524 = por %p522, %p523
    %p525 = scmp.ne.s32.totalorder %s514, %s517
    %p526 = scmp.eq.s32.totalorder %s29, 3
    %p527 = por %p525, %p526
    %p528 = scmp.ne.s32.totalorder %s517, %s518
    %p529 = scmp.eq.s32.totalorder %s29, 0
    %p530 = por %p528, %p529
    %p531 = scmp.ne.s32.totalorder %s517, %s518
    %p532 = scmp.eq.s32.totalorder %s30, 3
    %p533 = por %p531, %p532
    %p535 = scmp.ne.s32.totalorder %s518, %s534
    %p536 = scmp.eq.s32.totalorder %s30, 0
    %p537 = por %p535, %p536
    %p538 = scmp.le.s32.totalorder 1, %s24
    %p539 = scmp.lt.s32.totalorder %s24, 5
    %p540 = pnand %p538, %p539
    %p541 = pneg %p540
    // Predicated region
    $region9: #{bottom_up_top_down_encoder.5} parent=5 // pred_check
      _
    $region10: #{bottom_up_top_down_encoder.5} parent=5 // pred_check_branch
      %543 = sbr.rel (%p540) target = $region12
    $region11: #{bottom_up_top_down_encoder.5} parent=5 // pred_region
      %s544 = ssub.s32 %s24, 1
    $region12: #{bottom_up_top_down_encoder.5} parent=5 // pred_fallthru
      _
    %p545 = scmp.lt.s32.totalorder %s24, 4
    // Predicated region
    $region13: #{bottom_up_top_down_encoder.5} parent=5 // pred_check
      %p546 = pneg %p545
    $region14: #{bottom_up_top_down_encoder.5} parent=5 // pred_check_branch
      %548 = sbr.rel (%p546) target = $region16
    $region15: #{bottom_up_top_down_encoder.5} parent=5 // pred_region
      // Predicated region
      $region17: #{bottom_up_top_down_encoder.5} parent=15 // pred_check
        %p549 = pneg %p56
      $region18: #{bottom_up_top_down_encoder.5} parent=15 // pred_check_branch
        %551 = sbr.rel (%p549) target = $region20
      $region19: #{bottom_up_top_down_encoder.5} parent=15 // pred_region
        %p552 = scmp.lt.s32.totalorder %s31, 1
        %s553 = scalar_select %p552, %s31, 1
        %s554 = smul.addr %s553, 2
        %s555 = smul.addr %s554, 8
        %s556 = scalar_lea.vmem %s0, %s555
      $region20: #{bottom_up_top_down_encoder.5} parent=15 // pred_fallthru
        _
      // Predicated region
      $region21: #{bottom_up_top_down_encoder.5} parent=15 // pred_check
        %p557 = pneg %p82
      $region22: #{bottom_up_top_down_encoder.5} parent=15 // pred_check_branch
        %559 = sbr.rel (%p557) target = $region24
      $region23: #{bottom_up_top_down_encoder.5} parent=15 // pred_region
        %p560 = scmp.lt.s32.totalorder %s31, 1
        %s561 = scalar_select %p560, %s31, 1
        %s562 = smul.addr %s561, 4
        %s563 = scalar_lea.vmem %s1, %s562
      $region24: #{bottom_up_top_down_encoder.5} parent=15 // pred_fallthru
        _
      // Predicated region
      $region25: #{bottom_up_top_down_encoder.5} parent=15 // pred_check
        %p564 = pneg %p108
      $region26: #{bottom_up_top_down_encoder.5} parent=15 // pred_check_branch
        %566 = sbr.rel (%p564) target = $region28
      $region27: #{bottom_up_top_down_encoder.5} parent=15 // pred_region
        %p567 = scmp.lt.s32.totalorder %s32, 1
        %s568 = scalar_select %p567, %s32, 1
        %s569 = smul.addr %s568, 4
        %s570 = smul.addr %s569, 4
        %s571 = scalar_lea.vmem %s2, %s570
      $region28: #{bottom_up_top_down_encoder.5} parent=15 // pred_fallthru
        _
      // Predicated region
      $region29: #{bottom_up_top_down_encoder.5} parent=15 // pred_check
        %p572 = pneg %p134
      $region30: #{bottom_up_top_down_encoder.5} parent=15 // pred_check_branch
        %574 = sbr.rel (%p572) target = $region32
      $region31: #{bottom_up_top_down_encoder.5} parent=15 // pred_region
        %p575 = scmp.lt.s32.totalorder %s32, 1
        %s576 = scalar_select %p575, %s32, 1
        %s577 = scalar_lea.vmem %s3, %s576
      $region32: #{bottom_up_top_down_encoder.5} parent=15 // pred_fallthru
        _
      // Predicated region
      $region33: #{bottom_up_top_down_encoder.5} parent=15 // pred_check
        %p578 = pneg %p160
      $region34: #{bottom_up_top_down_encoder.5} parent=15 // pred_check_branch
        %580 = sbr.rel (%p578) target = $region36
      $region35: #{bottom_up_top_down_encoder.5} parent=15 // pred_region
        %p581 = scmp.lt.s32.totalorder %s32, 1
        %s582 = scalar_select %p581, %s32, 1
        %s583 = smul.addr %s582, 4
        %s584 = smul.addr %s583, 4
        %s585 = scalar_lea.vmem %s4, %s584
      $region36: #{bottom_up_top_down_encoder.5} parent=15 // pred_fallthru
        _
      // Predicated region
      $region37: #{bottom_up_top_down_encoder.5} parent=15 // pred_check
        %p586 = pneg %p186
      $region38: #{bottom_up_top_down_encoder.5} parent=15 // pred_check_branch
        %588 = sbr.rel (%p586) target = $region40
      $region39: #{bottom_up_top_down_encoder.5} parent=15 // pred_region
        %p589 = scmp.lt.s32.totalorder %s32, 1
        %s590 = scalar_select %p589, %s32, 1
        %s591 = scalar_lea.vmem %s5, %s590
      $region40: #{bottom_up_top_down_encoder.5} parent=15 // pred_fallthru
        _
      // Predicated region
      $region41: #{bottom_up_top_down_encoder.5} parent=15 // pred_check
        %p592 = pneg %p212
      $region42: #{bottom_up_top_down_encoder.5} parent=15 // pred_check_branch
        %594 = sbr.rel (%p592) target = $region44
      $region43: #{bottom_up_top_down_encoder.5} parent=15 // pred_region
        %p595 = scmp.lt.s32.totalorder %s32, 1
        %s596 = scalar_select %p595, %s32, 1
        %s597 = smul.addr %s596, 4
        %s598 = smul.addr %s597, 4
        %s599 = scalar_lea.vmem %s6, %s598
      $region44: #{bottom_up_top_down_encoder.5} parent=15 // pred_fallthru
        _
      // Predicated region
      $region45: #{bottom_up_top_down_encoder.5} parent=15 // pred_check
        %p600 = pneg %p238
      $region46: #{bottom_up_top_down_encoder.5} parent=15 // pred_check_branch
        %602 = sbr.rel (%p600) target = $region48
      $region47: #{bottom_up_top_down_encoder.5} parent=15 // pred_region
        %p603 = scmp.lt.s32.totalorder %s32, 1
        %s604 = scalar_select %p603, %s32, 1
        %s605 = scalar_lea.vmem %s7, %s604
      $region48: #{bottom_up_top_down_encoder.5} parent=15 // pred_fallthru
        _
      // Predicated region
      $region49: #{bottom_up_top_down_encoder.5} parent=15 // pred_check
        %p606 = pneg %p264
      $region50: #{bottom_up_top_down_encoder.5} parent=15 // pred_check_branch
        %608 = sbr.rel (%p606) target = $region52
      $region51: #{bottom_up_top_down_encoder.5} parent=15 // pred_region
        %p609 = scmp.lt.s32.totalorder %s32, 1
        %s610 = scalar_select %p609, %s32, 1
        %s611 = smul.addr %s610, 4
        %s612 = smul.addr %s611, 4
        %s613 = scalar_lea.vmem %s8, %s612
      $region52: #{bottom_up_top_down_encoder.5} parent=15 // pred_fallthru
        _
      // Predicated region
      $region53: #{bottom_up_top_down_encoder.5} parent=15 // pred_check
        %p614 = pneg %p290
      $region54: #{bottom_up_top_down_encoder.5} parent=15 // pred_check_branch
        %616 = sbr.rel (%p614) target = $region56
      $region55: #{bottom_up_top_down_encoder.5} parent=15 // pred_region
        %p617 = scmp.lt.s32.totalorder %s32, 1
        %s618 = scalar_select %p617, %s32, 1
        %s619 = scalar_lea.vmem %s9, %s618
      $region56: #{bottom_up_top_down_encoder.5} parent=15 // pred_fallthru
        _
      // Predicated region
      $region57: #{bottom_up_top_down_encoder.5} parent=15 // pred_check
        %p620 = pneg %p316
      $region58: #{bottom_up_top_down_encoder.5} parent=15 // pred_check_branch
        %622 = sbr.rel (%p620) target = $region60
      $region59: #{bottom_up_top_down_encoder.5} parent=15 // pred_region
        %p623 = scmp.lt.s32.totalorder %s32, 1
        %s624 = scalar_select %p623, %s32, 1
        %s625 = scalar_lea.vmem %s10, %s624
      $region60: #{bottom_up_top_down_encoder.5} parent=15 // pred_fallthru
        _
      // Predicated region
      $region61: #{bottom_up_top_down_encoder.5} parent=15 // pred_check
        %p626 = pneg %p342
      $region62: #{bottom_up_top_down_encoder.5} parent=15 // pred_check_branch
        %628 = sbr.rel (%p626) target = $region64
      $region63: #{bottom_up_top_down_encoder.5} parent=15 // pred_region
        %p629 = scmp.lt.s32.totalorder %s32, 1
        %s630 = scalar_select %p629, %s32, 1
        %s631 = scalar_lea.vmem %s11, %s630
      $region64: #{bottom_up_top_down_encoder.5} parent=15 // pred_fallthru
        _
      // Predicated region
      $region65: #{bottom_up_top_down_encoder.5} parent=15 // pred_check
        %p632 = pneg %p368
      $region66: #{bottom_up_top_down_encoder.5} parent=15 // pred_check_branch
        %634 = sbr.rel (%p632) target = $region68
      $region67: #{bottom_up_top_down_encoder.5} parent=15 // pred_region
        %p635 = scmp.lt.s32.totalorder %s32, 1
        %s636 = scalar_select %p635, %s32, 1
        %s637 = smul.addr %s636, 4
        %s638 = smul.addr %s637, 4
        %s639 = scalar_lea.vmem %s12, %s638
      $region68: #{bottom_up_top_down_encoder.5} parent=15 // pred_fallthru
        _
      // Predicated region
      $region69: #{bottom_up_top_down_encoder.5} parent=15 // pred_check
        %p640 = pneg %p394
      $region70: #{bottom_up_top_down_encoder.5} parent=15 // pred_check_branch
        %642 = sbr.rel (%p640) target = $region72
      $region71: #{bottom_up_top_down_encoder.5} parent=15 // pred_region
        %p643 = scmp.lt.s32.totalorder %s32, 1
        %s644 = scalar_select %p643, %s32, 1
        %s645 = scalar_lea.vmem %s13, %s644
      $region72: #{bottom_up_top_down_encoder.5} parent=15 // pred_fallthru
        _
      // Predicated region
      $region73: #{bottom_up_top_down_encoder.5} parent=15 // pred_check
        %p646 = pneg %p420
      $region74: #{bottom_up_top_down_encoder.5} parent=15 // pred_check_branch
        %648 = sbr.rel (%p646) target = $region76
      $region75: #{bottom_up_top_down_encoder.5} parent=15 // pred_region
        %p649 = scmp.lt.s32.totalorder %s32, 1
        %s650 = scalar_select %p649, %s32, 1
        %s651 = smul.addr %s650, 8
        %s652 = smul.addr %s651, 4
        %s653 = scalar_lea.vmem %s14, %s652
      $region76: #{bottom_up_top_down_encoder.5} parent=15 // pred_fallthru
        _
      // Predicated region
      $region77: #{bottom_up_top_down_encoder.5} parent=15 // pred_check
        %p654 = pneg %p446
      $region78: #{bottom_up_top_down_encoder.5} parent=15 // pred_check_branch
        %656 = sbr.rel (%p654) target = $region80
      $region79: #{bottom_up_top_down_encoder.5} parent=15 // pred_region
        %p657 = scmp.lt.s32.totalorder %s32, 1
        %s658 = scalar_select %p657, %s32, 1
        %s659 = scalar_lea.vmem %s15, %s658
      $region80: #{bottom_up_top_down_encoder.5} parent=15 // pred_fallthru
        _
      // Predicated region
      $region81: #{bottom_up_top_down_encoder.5} parent=15 // pred_check
        %p660 = pneg %p472
      $region82: #{bottom_up_top_down_encoder.5} parent=15 // pred_check_branch
        %662 = sbr.rel (%p660) target = $region84
      $region83: #{bottom_up_top_down_encoder.5} parent=15 // pred_region
        %p663 = scmp.lt.s32.totalorder %s32, 1
        %s664 = scalar_select %p663, %s32, 1
        %s665 = scalar_lea.vmem %s16, %s664
      $region84: #{bottom_up_top_down_encoder.5} parent=15 // pred_fallthru
        _
      // Predicated region
      $region85: #{bottom_up_top_down_encoder.5} parent=15 // pred_check
        %p666 = pneg %p498
      $region86: #{bottom_up_top_down_encoder.5} parent=15 // pred_check_branch
        %668 = sbr.rel (%p666) target = $region88
      $region87: #{bottom_up_top_down_encoder.5} parent=15 // pred_region
        %p669 = scmp.lt.s32.totalorder %s32, 1
        %s670 = scalar_select %p669, %s32, 1
        %s671 = scalar_lea.vmem %s17, %s670
      $region88: #{bottom_up_top_down_encoder.5} parent=15 // pred_fallthru
        _
    $region16: #{bottom_up_top_down_encoder.5} parent=5 // pred_fallthru
      _
    %p672 = scmp.le.s32.totalorder 1, %s24
    %p673 = scmp.lt.s32.totalorder %s24, 5
    %p674 = pnand %p672, %p673
    %p675 = pneg %p674
    // Predicated region
    $region89: #{bottom_up_top_down_encoder.5} parent=5 // pred_check
      _
    $region90: #{bottom_up_top_down_encoder.5} parent=5 // pred_check_branch
      %677 = sbr.rel (%p674) target = $region92
    $region91: #{bottom_up_top_down_encoder.5} parent=5 // pred_region
      %s678 = ssub.s32 %s24, 1
      %p679 = scmp.lt.s32.totalorder %s33, 1
      %s680 = scalar_select %p679, %s33, 1
      %s681 = smul.addr %s680, 2
      %s682 = smul.addr %s681, 8
      %s683 = scalar_lea.vmem %s0, %s682
      %p684 = pneg %p62
      %p685 = pneg %p59
      %p686 = scmp.lt.s32.totalorder %s33, 1
      %s687 = scalar_select %p686, %s33, 1
      %s688 = smul.addr %s687, 4
      %s689 = scalar_lea.vmem %s1, %s688
      %p690 = pneg %p88
      %p691 = pneg %p85
      %p692 = scmp.lt.s32.totalorder %s34, 1
      %s693 = scalar_select %p692, %s34, 1
      %s694 = smul.addr %s693, 4
      %s695 = smul.addr %s694, 4
      %s696 = scalar_lea.vmem %s2, %s695
      %p697 = pneg %p114
      %p698 = pneg %p111
      %p699 = scmp.lt.s32.totalorder %s34, 1
      %s700 = scalar_select %p699, %s34, 1
      %s701 = scalar_lea.vmem %s3, %s700
      %p702 = pneg %p140
      %p703 = pneg %p137
      %p704 = scmp.lt.s32.totalorder %s34, 1
      %s705 = scalar_select %p704, %s34, 1
      %s706 = smul.addr %s705, 4
      %s707 = smul.addr %s706, 4
      %s708 = scalar_lea.vmem %s4, %s707
      %p709 = pneg %p166
      %p710 = pneg %p163
      %p711 = scmp.lt.s32.totalorder %s34, 1
      %s712 = scalar_select %p711, %s34, 1
      %s713 = scalar_lea.vmem %s5, %s712
      %p714 = pneg %p192
      %p715 = pneg %p189
      %p716 = scmp.lt.s32.totalorder %s34, 1
      %s717 = scalar_select %p716, %s34, 1
      %s718 = smul.addr %s717, 4
      %s719 = smul.addr %s718, 4
      %s720 = scalar_lea.vmem %s6, %s719
      %p721 = pneg %p218
      %p722 = pneg %p215
      %p723 = scmp.lt.s32.totalorder %s34, 1
      %s724 = scalar_select %p723, %s34, 1
      %s725 = scalar_lea.vmem %s7, %s724
      %p726 = pneg %p244
      %p727 = pneg %p241
      %p728 = scmp.lt.s32.totalorder %s34, 1
      %s729 = scalar_select %p728, %s34, 1
      %s730 = smul.addr %s729, 4
      %s731 = smul.addr %s730, 4
      %s732 = scalar_lea.vmem %s8, %s731
      %p733 = pneg %p270
      %p734 = pneg %p267
      %p735 = scmp.lt.s32.totalorder %s34, 1
      %s736 = scalar_select %p735, %s34, 1
      %s737 = scalar_lea.vmem %s9, %s736
      %p738 = pneg %p296
      %p739 = pneg %p293
      %p740 = scmp.lt.s32.totalorder %s34, 1
      %s741 = scalar_select %p740, %s34, 1
      %s742 = scalar_lea.vmem %s10, %s741
      %p743 = pneg %p322
      %p744 = pneg %p319
      %p745 = scmp.lt.s32.totalorder %s34, 1
      %s746 = scalar_select %p745, %s34, 1
      %s747 = scalar_lea.vmem %s11, %s746
      %p748 = pneg %p348
      %p749 = pneg %p345
      %p750 = scmp.lt.s32.totalorder %s34, 1
      %s751 = scalar_select %p750, %s34, 1
      %s752 = smul.addr %s751, 4
      %s753 = smul.addr %s752, 4
      %s754 = scalar_lea.vmem %s12, %s753
      %p755 = pneg %p374
      %p756 = pneg %p371
      %p757 = scmp.lt.s32.totalorder %s34, 1
      %s758 = scalar_select %p757, %s34, 1
      %s759 = scalar_lea.vmem %s13, %s758
      %p760 = pneg %p400
      %p761 = pneg %p397
      %p762 = scmp.lt.s32.totalorder %s34, 1
      %s763 = scalar_select %p762, %s34, 1
      %s764 = smul.addr %s763, 8
      %s765 = smul.addr %s764, 4
      %s766 = scalar_lea.vmem %s14, %s765
      %p767 = pneg %p426
      %p768 = pneg %p423
      %p769 = scmp.lt.s32.totalorder %s34, 1
      %s770 = scalar_select %p769, %s34, 1
      %s771 = scalar_lea.vmem %s15, %s770
      %p772 = pneg %p452
      %p773 = pneg %p449
      %p774 = scmp.lt.s32.totalorder %s34, 1
      %s775 = scalar_select %p774, %s34, 1
      %s776 = scalar_lea.vmem %s16, %s775
      %p777 = pneg %p478
      %p778 = pneg %p475
      %p779 = scmp.lt.s32.totalorder %s34, 1
      %s780 = scalar_select %p779, %s34, 1
      %s781 = scalar_lea.vmem %s17, %s780
      %p782 = pneg %p504
      %p783 = pneg %p501
      %p784 = pneg %p530
      %p785 = pneg %p527
      %p786 = scmp.lt.s32.totalorder %s33, 1
      %s787 = scalar_select %p786, %s33, 1
      %s788 = smul.addr %s787, 2
      %s789 = smul.addr %s788, 8
      %s790 = scalar_lea.vmem %s18, %s789
      %p791 = scmp.lt.s32.totalorder %s33, 1
      %s792 = scalar_select %p791, %s33, 1
      %s793 = smul.addr %s792, 2
      %s794 = smul.addr %s793, 8
      %s795 = scalar_lea.vmem %s0, %s794
      %p796 = scmp.lt.s32.totalorder %s33, 1
      %s797 = scalar_select %p796, %s33, 1
      %s798 = smul.addr %s797, 4
      %s799 = scalar_lea.vmem %s1, %s798
      %p800 = scmp.lt.s32.totalorder %s34, 1
      %s801 = scalar_select %p800, %s34, 1
      %s802 = smul.addr %s801, 4
      %s803 = smul.addr %s802, 4
      %s804 = scalar_lea.vmem %s2, %s803
      %p805 = scmp.lt.s32.totalorder %s34, 1
      %s806 = scalar_select %p805, %s34, 1
      %s807 = scalar_lea.vmem %s3, %s806
      %p808 = scmp.lt.s32.totalorder %s34, 1
      %s809 = scalar_select %p808, %s34, 1
      %s810 = smul.addr %s809, 4
      %s811 = smul.addr %s810, 4
      %s812 = scalar_lea.vmem %s4, %s811
      %p813 = scmp.lt.s32.totalorder %s34, 1
      %s814 = scalar_select %p813, %s34, 1
      %s815 = scalar_lea.vmem %s5, %s814
      %p816 = scmp.lt.s32.totalorder %s34, 1
      %s817 = scalar_select %p816, %s34, 1
      %s818 = smul.addr %s817, 4
      %s819 = smul.addr %s818, 4
      %s820 = scalar_lea.vmem %s6, %s819
      %p821 = scmp.lt.s32.totalorder %s34, 1
      %s822 = scalar_select %p821, %s34, 1
      %s823 = scalar_lea.vmem %s7, %s822
      %p824 = scmp.lt.s32.totalorder %s34, 1
      %s825 = scalar_select %p824, %s34, 1
      %s826 = smul.addr %s825, 4
      %s827 = smul.addr %s826, 4
      %s828 = scalar_lea.vmem %s8, %s827
      %p829 = scmp.lt.s32.totalorder %s34, 1
      %s830 = scalar_select %p829, %s34, 1
      %s831 = scalar_lea.vmem %s9, %s830
      %p832 = scmp.lt.s32.totalorder %s34, 1
      %s833 = scalar_select %p832, %s34, 1
      %s834 = scalar_lea.vmem %s10, %s833
      %p835 = scmp.lt.s32.totalorder %s34, 1
      %s836 = scalar_select %p835, %s34, 1
      %s837 = scalar_lea.vmem %s11, %s836
      %p838 = scmp.lt.s32.totalorder %s34, 1
      %s839 = scalar_select %p838, %s34, 1
      %s840 = smul.addr %s839, 4
      %s841 = smul.addr %s840, 4
      %s842 = scalar_lea.vmem %s12, %s841
      %p843 = scmp.lt.s32.totalorder %s34, 1
      %s844 = scalar_select %p843, %s34, 1
      %s845 = scalar_lea.vmem %s13, %s844
      %p846 = scmp.lt.s32.totalorder %s34, 1
      %s847 = scalar_select %p846, %s34, 1
      %s848 = smul.addr %s847, 8
      %s849 = smul.addr %s848, 4
      %s850 = scalar_lea.vmem %s14, %s849
      %p851 = scmp.lt.s32.totalorder %s34, 1
      %s852 = scalar_select %p851, %s34, 1
      %s853 = scalar_lea.vmem %s15, %s852
      %p854 = scmp.lt.s32.totalorder %s34, 1
      %s855 = scalar_select %p854, %s34, 1
      %s856 = scalar_lea.vmem %s16, %s855
      %p857 = scmp.lt.s32.totalorder %s34, 1
      %s858 = scalar_select %p857, %s34, 1
      %s859 = scalar_lea.vmem %s17, %s858
      %p860 = scmp.lt.s32.totalorder %s33, 1
      %s861 = scalar_select %p860, %s33, 1
      %s862 = smul.addr %s861, 2
      %s863 = smul.addr %s862, 8
      %s864 = scalar_lea.vmem %s18, %s863
      %p866 = scmp.eq.s32.totalorder %s34, 0
      // Predicated region
      $region93: #{bottom_up_top_down_encoder.5} parent=91 // pred_check
        %p867 = pneg %p866
      $region94: #{bottom_up_top_down_encoder.5} parent=91 // pred_check_branch
        %869 = sbr.rel (%p867) target = $region96
      $region95: #{bottom_up_top_down_encoder.5} parent=91 // pred_region
        %v870 = vld [vmem:[%s795] sm:$0xff]
        %v871 = vld [vmem:[%s795 + $0x8] sm:$0xff]
        %vm872 = vcmask 261120
        %873 = vst.msk [vmem:[%s864] sm:$0xff] %vm872, %v870
        %874 = vst.msk [vmem:[%s864 + $0x8] sm:$0xff] %vm872, %v871
      $region96: #{bottom_up_top_down_encoder.5} parent=91 // pred_fallthru
        _
      %v875 = vld [vmem:[%s864] sm:$0xff]
      %v876 = vld [vmem:[%s864 + $0x8] sm:$0xff]
      %v877 = vld [vmem:[%s799] sm:$0x7]
      %v878 = vpack.c.bf16 %v876, %v875
      %v879 = vld [vmem:[%s804] sm:$0xf]
      %v880 = vld [vmem:[%s804 + $0x4] sm:$0xf]
      %v881 = vld [vmem:[%s804 + $0x8] sm:$0xf]
      %v882 = vld [vmem:[%s804 + $0xc] sm:$0xf]
      %v883 = vld [vmem:[%s807] sm:$0x1]
      %v885 = vlaneseq
      %v886 = vshrl.u32 %v885, 7
      %v887 = vsub.s32 0, %v886
      %v888 = vrot.slane %v883, %v887
      %v894 = vunpack.c.l.b16 %v879
      %v895 = vunpack.c.l.b16 %v880
      %v896 = vunpack.c.l.b16 %v881
      %v897 = vunpack.c.l.b16 %v882
      %v898 = vpack.c.b16 %v895, %v894
      %v899 = vpack.c.b16 %v897, %v896
      %vm902 = vcmask 261120
      %v904 = vsel %vm902, %v878, 0
      %906 = vmatprep.subr.bf16.mxu0 0
      %907 = vmatpush1.bf16.msra.mxu0 0
      %908 = vmatprep.subr.bf16.mxu0 0
      %909 = vmatpush1.bf16.msra.mxu0 0
      %910 = vmatprep.subr.bf16.mxu0 0
      %911 = vmatpush1.bf16.msra.mxu0 0
      %912 = vmatprep.subr.bf16.mxu0 0
      %913 = vmatpush1.bf16.msra.mxu0 0
      %914 = vmatprep.subr.bf16.mxu0 0
      %915 = vmatpush1.bf16.msra.mxu0 0
      %916 = vmatprep.subr.bf16.mxu0 0
      %917 = vmatpush1.bf16.msra.mxu0 0
      %918 = vmatprep.subr.bf16.mxu0 0
      %919 = vmatpush1.bf16.msra.mxu0 %v899
      %920 = vmatprep.subr.bf16.mxu0 0
      %921 = vmatpush1.bf16.msra.mxu0 %v898
      %922 = vmatprep.subr.bf16.mxu0 0
      %923 = vmatpush2.bf16.msra.mxu0 0
      %924 = vmatprep.subr.bf16.mxu0 0
      %925 = vmatpush2.bf16.msra.mxu0 0
      %926 = vmatprep.subr.bf16.mxu0 0
      %927 = vmatpush2.bf16.msra.mxu0 0
      %928 = vmatprep.subr.bf16.mxu0 0
      %929 = vmatpush2.bf16.msra.mxu0 0
      %930 = vmatprep.subr.bf16.mxu0 0
      %931 = vmatpush2.bf16.msra.mxu0 0
      %932 = vmatprep.subr.bf16.mxu0 0
      %933 = vmatpush2.bf16.msra.mxu0 0
      %934 = vmatprep.subr.bf16.mxu0 0
      %935 = vmatpush2.bf16.msra.mxu0 0
      %936 = vmatprep.subr.bf16.mxu0 0
      %937 = vmatpush2.bf16.msra.mxu0 0
      %938 = vmatprep.mubr.bf16.mxu0 0
      %939 = vmatmul.mubr.bf16.gmra.mxu0 %v904
      %v940 = vpop.f32.mrf.mxu0
      %v941 = vadd.f32 %v888, %v940
      %v942 = vpop.f32.mrf.mxu0
      %v943 = vpop.f32.mrf.mxu0
      %v944 = vadd.f32 %v888, %v943
      %v945 = vpop.f32.mrf.mxu0
      %946 = vdwg.mxu0
      %v947 = vlaneseq
      %v948 = vshrl.u32 %v947, 7
      %v949 = vadd.s32 %v948, 8
      %v950 = vlaneseq
      %v951 = vand.u32 %v950, 127
      %v952 = vsub.s32 %v948, %v951
      %v953 = vsub.s32 %v949, %v951
      %vm954 = vcmp.lt.s32.totalorder %v952, 0
      %v955 = vsub.s32 0, %v952
      %v956 = vsel %vm954, %v955, %v952
      %vm957 = vcmp.lt.s32.totalorder %v953, 0
      %v958 = vsub.s32 0, %v953
      %v959 = vsel %vm957, %v958, %v953
      %vm960 = vcmp.le.s32.totalorder %v956, 4
      %vm961 = vcmp.le.s32.totalorder %v959, 4
      %v962 = vsel %vm960, 0.0, -1e+09
      %v963 = vsel %vm961, 0.0, -1e+09
      %v964 = vpack.c.bf16 %v944, %v941
      %966 = vrot.lane.b32.xlu0 %v964, 96
      %v967 = vpop.permute.xlu0 %966
      %vm968 = vcmask 64512
      %v970 = vsel %vm968, %v964, 0
      %v973 = vsel %vm968, %v967, 0
      %975 = vmatprep.subr.bf16.mxu0 0
      %976 = vmatpush1.bf16.xpose.msra.mxu0 0
      %977 = vmatprep.subr.bf16.mxu0 0
      %978 = vmatpush1.bf16.xpose.msra.mxu0 0
      %979 = vmatprep.subr.bf16.mxu0 0
      %980 = vmatpush1.bf16.xpose.msra.mxu0 0
      %981 = vmatprep.subr.bf16.mxu0 0
      %982 = vmatpush1.bf16.xpose.msra.mxu0 0
      %983 = vmatprep.subr.bf16.mxu0 0
      %984 = vmatpush1.bf16.xpose.msra.mxu0 0
      %985 = vmatprep.subr.bf16.mxu0 0
      %986 = vmatpush1.bf16.xpose.msra.mxu0 0
      %987 = vmatprep.subr.bf16.mxu0 0
      %988 = vmatpush1.bf16.xpose.msra.mxu0 0
      %989 = vmatprep.subr.bf16.mxu0 0
      %990 = vmatpush1.bf16.xpose.msra.mxu0 %v973
      %991 = vmatprep.subr.bf16.mxu0 0
      %992 = vmatpush2.bf16.xpose.msra.mxu0 0
      %993 = vmatprep.subr.bf16.mxu0 0
      %994 = vmatpush2.bf16.xpose.msra.mxu0 0
      %995 = vmatprep.subr.bf16.mxu0 0
      %996 = vmatpush2.bf16.xpose.msra.mxu0 0
      %997 = vmatprep.subr.bf16.mxu0 0
      %998 = vmatpush2.bf16.xpose.msra.mxu0 0
      %999 = vmatprep.subr.bf16.mxu0 0
      %1000 = vmatpush2.bf16.xpose.msra.mxu0 0
      %1001 = vmatprep.subr.bf16.mxu0 0
      %1002 = vmatpush2.bf16.xpose.msra.mxu0 0
      %1003 = vmatprep.subr.bf16.mxu0 0
      %1004 = vmatpush2.bf16.xpose.msra.mxu0 0
      %1005 = vmatprep.subr.bf16.mxu0 0
      %1006 = vmatpush2.bf16.xpose.msra.mxu0 0
      %1007 = vmatprep.mubr.bf16.mxu0 0
      %1008 = vmatmul.mubr.bf16.gmra.mxu0 %v970
      %v1009 = vpop.f32.mrf.mxu0
      %v1010 = vadd.f32 %v962, %v1009
      %v1011 = vpop.f32.mrf.mxu0
      %v1012 = vpop.f32.mrf.mxu0
      %v1013 = vadd.f32 %v963, %v1012
      %v1014 = vpop.f32.mrf.mxu0
      %1015 = vdwg.mxu0
      %vm1016 = vcmask 130048
      %v1017 = vsel %vm1016, %v1010, -inf
      %1018 = vmax.xlane.f32.xlu0 %v1017
      %v1019 = vpop.xlane.xlu0 %1018
      %v1020 = vsel %vm1016, %v1013, -inf
      %1021 = vmax.xlane.f32.xlu0 %v1020
      %v1022 = vpop.xlane.xlu0 %1021
      %v1023 = vsub.f32 %v1010, %v1019
      %v1024 = vsub.f32 %v1013, %v1022
      %v1025 = vmul.f32 %v1023, 1.442695
      %v1026 = vpow.pop %v1025
      %v1027 = vmul.f32 %v1024, 1.442695
      %v1028 = vpow.pop %v1027
      %v1029 = vsel %vm1016, %v1026, 0.0
      %1030 = vadd.xlane.f32.xlu0 %v1029
      %v1031 = vpop.xlane.xlu0 %1030
      %v1032 = vsel %vm1016, %v1028, 0.0
      %1033 = vadd.xlane.f32.xlu0 %v1032
      %v1034 = vpop.xlane.xlu0 %1033
      %v1035 = vrcp.pop %v1031
      %v1036 = vrcp.pop %v1034
      %v1037 = vmul.f32 %v1026, %v1035
      %v1038 = vmul.f32 %v1028, %v1036
      %v1039 = vpack.c.bf16 %v1038, %v1037
      %1040 = vrot.lane.b32.xlu0 %v964, 64
      %v1041 = vpop.permute.xlu0 %1040
      %v1044 = vsel %vm1016, %v1039, 0
      %1046 = vmatprep.subr.bf16.mxu0 0
      %1047 = vmatpush1.bf16.msra.mxu0 0
      %1048 = vmatprep.subr.bf16.mxu0 0
      %1049 = vmatpush1.bf16.msra.mxu0 0
      %1050 = vmatprep.subr.bf16.mxu0 0
      %1051 = vmatpush1.bf16.msra.mxu0 0
      %1052 = vmatprep.subr.bf16.mxu0 0
      %1053 = vmatpush1.bf16.msra.mxu0 0
      %1054 = vmatprep.subr.bf16.mxu0 0
      %1055 = vmatpush1.bf16.msra.mxu0 0
      %1056 = vmatprep.subr.bf16.mxu0 0
      %1057 = vmatpush1.bf16.msra.mxu0 0
      %1058 = vmatprep.subr.bf16.mxu0 0
      %1059 = vmatpush1.bf16.msra.mxu0 0
      %1060 = vmatprep.subr.bf16.mxu0 0
      %1061 = vmatpush1.bf16.msra.mxu0 %v1041
      %1062 = vmatprep.subr.bf16.mxu0 0
      %1063 = vmatpush2.bf16.msra.mxu0 0
      %1064 = vmatprep.subr.bf16.mxu0 0
      %1065 = vmatpush2.bf16.msra.mxu0 0
      %1066 = vmatprep.subr.bf16.mxu0 0
      %1067 = vmatpush2.bf16.msra.mxu0 0
      %1068 = vmatprep.subr.bf16.mxu0 0
      %1069 = vmatpush2.bf16.msra.mxu0 0
      %1070 = vmatprep.subr.bf16.mxu0 0
      %1071 = vmatpush2.bf16.msra.mxu0 0
      %1072 = vmatprep.subr.bf16.mxu0 0
      %1073 = vmatpush2.bf16.msra.mxu0 0
      %1074 = vmatprep.subr.bf16.mxu0 0
      %1075 = vmatpush2.bf16.msra.mxu0 0
      %1076 = vmatprep.subr.bf16.mxu0 0
      %1077 = vmatpush2.bf16.msra.mxu0 0
      %1078 = vmatprep.mubr.bf16.mxu0 0
      %1079 = vmatmul.mubr.bf16.gmra.mxu0 %v1044
      %v1080 = vpop.f32.mrf.mxu0
      %v1081 = vadd.f32 0.0, %v1080
      %v1082 = vpop.f32.mrf.mxu0
      %v1083 = vpop.f32.mrf.mxu0
      %v1084 = vadd.f32 0.0, %v1083
      %v1085 = vpop.f32.mrf.mxu0
      %1086 = vdwg.mxu0
      %1087 = vrot.lane.b32.xlu0 %v964, 120
      %v1088 = vpop.permute.xlu0 %1087
      %1089 = vrot.lane.b32.xlu0 %v964, 88
      %v1090 = vpop.permute.xlu0 %1089
      %v1092 = vsel %vm968, %v1088, 0
      %v1095 = vsel %vm968, %v1090, 0
      %1097 = vmatprep.subr.bf16.mxu0 0
      %1098 = vmatpush1.bf16.xpose.msra.mxu0 0
      %1099 = vmatprep.subr.bf16.mxu0 0
      %1100 = vmatpush1.bf16.xpose.msra.mxu0 0
      %1101 = vmatprep.subr.bf16.mxu0 0
      %1102 = vmatpush1.bf16.xpose.msra.mxu0 0
      %1103 = vmatprep.subr.bf16.mxu0 0
      %1104 = vmatpush1.bf16.xpose.msra.mxu0 0
      %1105 = vmatprep.subr.bf16.mxu0 0
      %1106 = vmatpush1.bf16.xpose.msra.mxu0 0
      %1107 = vmatprep.subr.bf16.mxu0 0
      %1108 = vmatpush1.bf16.xpose.msra.mxu0 0
      %1109 = vmatprep.subr.bf16.mxu0 0
      %1110 = vmatpush1.bf16.xpose.msra.mxu0 0
      %1111 = vmatprep.subr.bf16.mxu0 0
      %1112 = vmatpush1.bf16.xpose.msra.mxu0 %v1095
      %1113 = vmatprep.subr.bf16.mxu0 0
      %1114 = vmatpush2.bf16.xpose.msra.mxu0 0
      %1115 = vmatprep.subr.bf16.mxu0 0
      %1116 = vmatpush2.bf16.xpose.msra.mxu0 0
      %1117 = vmatprep.subr.bf16.mxu0 0
      %1118 = vmatpush2.bf16.xpose.msra.mxu0 0
      %1119 = vmatprep.subr.bf16.mxu0 0
      %1120 = vmatpush2.bf16.xpose.msra.mxu0 0
      %1121 = vmatprep.subr.bf16.mxu0 0
      %1122 = vmatpush2.bf16.xpose.msra.mxu0 0
      %1123 = vmatprep.subr.bf16.mxu0 0
      %1124 = vmatpush2.bf16.xpose.msra.mxu0 0
      %1125 = vmatprep.subr.bf16.mxu0 0
      %1126 = vmatpush2.bf16.xpose.msra.mxu0 0
      %1127 = vmatprep.subr.bf16.mxu0 0
      %1128 = vmatpush2.bf16.xpose.msra.mxu0 0
      %1129 = vmatprep.mubr.bf16.mxu0 0
      %1130 = vmatmul.mubr.bf16.gmra.mxu0 %v1092
      %v1131 = vpop.f32.mrf.mxu0
      %v1132 = vadd.f32 %v962, %v1131
      %v1133 = vpop.f32.mrf.mxu0
      %v1134 = vpop.f32.mrf.mxu0
      %v1135 = vadd.f32 %v963, %v1134
      %v1136 = vpop.f32.mrf.mxu0
      %1137 = vdwg.mxu0
      %v1138 = vsel %vm1016, %v1132, -inf
      %1139 = vmax.xlane.f32.xlu0 %v1138
      %v1140 = vpop.xlane.xlu0 %1139
      %v1141 = vsel %vm1016, %v1135, -inf
      %1142 = vmax.xlane.f32.xlu0 %v1141
      %v1143 = vpop.xlane.xlu0 %1142
      %v1144 = vsub.f32 %v1132, %v1140
      %v1145 = vsub.f32 %v1135, %v1143
      %v1146 = vmul.f32 %v1144, 1.442695
      %v1147 = vpow.pop %v1146
      %v1148 = vmul.f32 %v1145, 1.442695
      %v1149 = vpow.pop %v1148
      %v1150 = vsel %vm1016, %v1147, 0.0
      %1151 = vadd.xlane.f32.xlu0 %v1150
      %v1152 = vpop.xlane.xlu0 %1151
      %v1153 = vsel %vm1016, %v1149, 0.0
      %1154 = vadd.xlane.f32.xlu0 %v1153
      %v1155 = vpop.xlane.xlu0 %1154
      %v1156 = vrcp.pop %v1152
      %v1157 = vrcp.pop %v1155
      %v1158 = vmul.f32 %v1147, %v1156
      %v1159 = vmul.f32 %v1149, %v1157
      %v1160 = vpack.c.bf16 %v1159, %v1158
      %1161 = vrot.lane.b32.xlu0 %v964, 56
      %v1162 = vpop.permute.xlu0 %1161
      %v1165 = vsel %vm1016, %v1160, 0
      %1167 = vmatprep.subr.bf16.mxu0 0
      %1168 = vmatpush1.bf16.msra.mxu0 0
      %1169 = vmatprep.subr.bf16.mxu0 0
      %1170 = vmatpush1.bf16.msra.mxu0 0
      %1171 = vmatprep.subr.bf16.mxu0 0
      %1172 = vmatpush1.bf16.msra.mxu0 0
      %1173 = vmatprep.subr.bf16.mxu0 0
      %1174 = vmatpush1.bf16.msra.mxu0 0
      %1175 = vmatprep.subr.bf16.mxu0 0
      %1176 = vmatpush1.bf16.msra.mxu0 0
      %1177 = vmatprep.subr.bf16.mxu0 0
      %1178 = vmatpush1.bf16.msra.mxu0 0
      %1179 = vmatprep.subr.bf16.mxu0 0
      %1180 = vmatpush1.bf16.msra.mxu0 0
      %1181 = vmatprep.subr.bf16.mxu0 0
      %1182 = vmatpush1.bf16.msra.mxu0 %v1162
      %1183 = vmatprep.subr.bf16.mxu0 0
      %1184 = vmatpush2.bf16.msra.mxu0 0
      %1185 = vmatprep.subr.bf16.mxu0 0
      %1186 = vmatpush2.bf16.msra.mxu0 0
      %1187 = vmatprep.subr.bf16.mxu0 0
      %1188 = vmatpush2.bf16.msra.mxu0 0
      %1189 = vmatprep.subr.bf16.mxu0 0
      %1190 = vmatpush2.bf16.msra.mxu0 0
      %1191 = vmatprep.subr.bf16.mxu0 0
      %1192 = vmatpush2.bf16.msra.mxu0 0
      %1193 = vmatprep.subr.bf16.mxu0 0
      %1194 = vmatpush2.bf16.msra.mxu0 0
      %1195 = vmatprep.subr.bf16.mxu0 0
      %1196 = vmatpush2.bf16.msra.mxu0 0
      %1197 = vmatprep.subr.bf16.mxu0 0
      %1198 = vmatpush2.bf16.msra.mxu0 0
      %1199 = vmatprep.mubr.bf16.mxu0 0
      %1200 = vmatmul.mubr.bf16.gmra.mxu0 %v1165
      %v1201 = vpop.f32.mrf.mxu0
      %v1202 = vadd.f32 0.0, %v1201
      %v1203 = vpop.f32.mrf.mxu0
      %v1204 = vpop.f32.mrf.mxu0
      %v1205 = vadd.f32 0.0, %v1204
      %v1206 = vpop.f32.mrf.mxu0
      %1207 = vdwg.mxu0
      %1208 = vrot.lane.b32.xlu0 %v964, 112
      %v1209 = vpop.permute.xlu0 %1208
      %1210 = vrot.lane.b32.xlu0 %v964, 80
      %v1211 = vpop.permute.xlu0 %1210
      %v1213 = vsel %vm968, %v1209, 0
      %v1216 = vsel %vm968, %v1211, 0
      %1218 = vmatprep.subr.bf16.mxu0 0
      %1219 = vmatpush1.bf16.xpose.msra.mxu0 0
      %1220 = vmatprep.subr.bf16.mxu0 0
      %1221 = vmatpush1.bf16.xpose.msra.mxu0 0
      %1222 = vmatprep.subr.bf16.mxu0 0
      %1223 = vmatpush1.bf16.xpose.msra.mxu0 0
      %1224 = vmatprep.subr.bf16.mxu0 0
      %1225 = vmatpush1.bf16.xpose.msra.mxu0 0
      %1226 = vmatprep.subr.bf16.mxu0 0
      %1227 = vmatpush1.bf16.xpose.msra.mxu0 0
      %1228 = vmatprep.subr.bf16.mxu0 0
      %1229 = vmatpush1.bf16.xpose.msra.mxu0 0
      %1230 = vmatprep.subr.bf16.mxu0 0
      %1231 = vmatpush1.bf16.xpose.msra.mxu0 0
      %1232 = vmatprep.subr.bf16.mxu0 0
      %1233 = vmatpush1.bf16.xpose.msra.mxu0 %v1216
      %1234 = vmatprep.subr.bf16.mxu0 0
      %1235 = vmatpush2.bf16.xpose.msra.mxu0 0
      %1236 = vmatprep.subr.bf16.mxu0 0
      %1237 = vmatpush2.bf16.xpose.msra.mxu0 0
      %1238 = vmatprep.subr.bf16.mxu0 0
      %1239 = vmatpush2.bf16.xpose.msra.mxu0 0
      %1240 = vmatprep.subr.bf16.mxu0 0
      %1241 = vmatpush2.bf16.xpose.msra.mxu0 0
      %1242 = vmatprep.subr.bf16.mxu0 0
      %1243 = vmatpush2.bf16.xpose.msra.mxu0 0
      %1244 = vmatprep.subr.bf16.mxu0 0
      %1245 = vmatpush2.bf16.xpose.msra.mxu0 0
      %1246 = vmatprep.subr.bf16.mxu0 0
      %1247 = vmatpush2.bf16.xpose.msra.mxu0 0
      %1248 = vmatprep.subr.bf16.mxu0 0
      %1249 = vmatpush2.bf16.xpose.msra.mxu0 0
      %1250 = vmatprep.mubr.bf16.mxu0 0
      %1251 = vmatmul.mubr.bf16.gmra.mxu0 %v1213
      %v1252 = vpop.f32.mrf.mxu0
      %v1253 = vadd.f32 %v962, %v1252
      %v1254 = vpop.f32.mrf.mxu0
      %v1255 = vpop.f32.mrf.mxu0
      %v1256 = vadd.f32 %v963, %v1255
      %v1257 = vpop.f32.mrf.mxu0
      %1258 = vdwg.mxu0
      %v1259 = vsel %vm1016, %v1253, -inf
      %1260 = vmax.xlane.f32.xlu0 %v1259
      %v1261 = vpop.xlane.xlu0 %1260
      %v1262 = vsel %vm1016, %v1256, -inf
      %1263 = vmax.xlane.f32.xlu0 %v1262
      %v1264 = vpop.xlane.xlu0 %1263
      %v1265 = vsub.f32 %v1253, %v1261
      %v1266 = vsub.f32 %v1256, %v1264
      %v1267 = vmul.f32 %v1265, 1.442695
      %v1268 = vpow.pop %v1267
      %v1269 = vmul.f32 %v1266, 1.442695
      %v1270 = vpow.pop %v1269
      %v1271 = vsel %vm1016, %v1268, 0.0
      %1272 = vadd.xlane.f32.xlu0 %v1271
      %v1273 = vpop.xlane.xlu0 %1272
      %v1274 = vsel %vm1016, %v1270, 0.0
      %1275 = vadd.xlane.f32.xlu0 %v1274
      %v1276 = vpop.xlane.xlu0 %1275
      %v1277 = vrcp.pop %v1273
      %v1278 = vrcp.pop %v1276
      %v1279 = vmul.f32 %v1268, %v1277
      %v1280 = vmul.f32 %v1270, %v1278
      %v1281 = vpack.c.bf16 %v1280, %v1279
      %1282 = vrot.lane.b32.xlu0 %v964, 48
      %v1283 = vpop.permute.xlu0 %1282
      %v1286 = vsel %vm1016, %v1281, 0
      %1288 = vmatprep.subr.bf16.mxu0 0
      %1289 = vmatpush1.bf16.msra.mxu0 0
      %1290 = vmatprep.subr.bf16.mxu0 0
      %1291 = vmatpush1.bf16.msra.mxu0 0
      %1292 = vmatprep.subr.bf16.mxu0 0
      %1293 = vmatpush1.bf16.msra.mxu0 0
      %1294 = vmatprep.subr.bf16.mxu0 0
      %1295 = vmatpush1.bf16.msra.mxu0 0
      %1296 = vmatprep.subr.bf16.mxu0 0
      %1297 = vmatpush1.bf16.msra.mxu0 0
      %1298 = vmatprep.subr.bf16.mxu0 0
      %1299 = vmatpush1.bf16.msra.mxu0 0
      %1300 = vmatprep.subr.bf16.mxu0 0
      %1301 = vmatpush1.bf16.msra.mxu0 0
      %1302 = vmatprep.subr.bf16.mxu0 0
      %1303 = vmatpush1.bf16.msra.mxu0 %v1283
      %1304 = vmatprep.subr.bf16.mxu0 0
      %1305 = vmatpush2.bf16.msra.mxu0 0
      %1306 = vmatprep.subr.bf16.mxu0 0
      %1307 = vmatpush2.bf16.msra.mxu0 0
      %1308 = vmatprep.subr.bf16.mxu0 0
      %1309 = vmatpush2.bf16.msra.mxu0 0
      %1310 = vmatprep.subr.bf16.mxu0 0
      %1311 = vmatpush2.bf16.msra.mxu0 0
      %1312 = vmatprep.subr.bf16.mxu0 0
      %1313 = vmatpush2.bf16.msra.mxu0 0
      %1314 = vmatprep.subr.bf16.mxu0 0
      %1315 = vmatpush2.bf16.msra.mxu0 0
      %1316 = vmatprep.subr.bf16.mxu0 0
      %1317 = vmatpush2.bf16.msra.mxu0 0
      %1318 = vmatprep.subr.bf16.mxu0 0
      %1319 = vmatpush2.bf16.msra.mxu0 0
      %1320 = vmatprep.mubr.bf16.mxu0 0
      %1321 = vmatmul.mubr.bf16.gmra.mxu0 %v1286
      %v1322 = vpop.f32.mrf.mxu0
      %v1323 = vadd.f32 0.0, %v1322
      %v1324 = vpop.f32.mrf.mxu0
      %v1325 = vpop.f32.mrf.mxu0
      %v1326 = vadd.f32 0.0, %v1325
      %v1327 = vpop.f32.mrf.mxu0
      %1328 = vdwg.mxu0
      %1329 = vrot.lane.b32.xlu0 %v964, 104
      %v1330 = vpop.permute.xlu0 %1329
      %1331 = vrot.lane.b32.xlu0 %v964, 72
      %v1332 = vpop.permute.xlu0 %1331
      %v1334 = vsel %vm968, %v1330, 0
      %v1337 = vsel %vm968, %v1332, 0
      %1339 = vmatprep.subr.bf16.mxu0 0
      %1340 = vmatpush1.bf16.xpose.msra.mxu0 0
      %1341 = vmatprep.subr.bf16.mxu0 0
      %1342 = vmatpush1.bf16.xpose.msra.mxu0 0
      %1343 = vmatprep.subr.bf16.mxu0 0
      %1344 = vmatpush1.bf16.xpose.msra.mxu0 0
      %1345 = vmatprep.subr.bf16.mxu0 0
      %1346 = vmatpush1.bf16.xpose.msra.mxu0 0
      %1347 = vmatprep.subr.bf16.mxu0 0
      %1348 = vmatpush1.bf16.xpose.msra.mxu0 0
      %1349 = vmatprep.subr.bf16.mxu0 0
      %1350 = vmatpush1.bf16.xpose.msra.mxu0 0
      %1351 = vmatprep.subr.bf16.mxu0 0
      %1352 = vmatpush1.bf16.xpose.msra.mxu0 0
      %1353 = vmatprep.subr.bf16.mxu0 0
      %1354 = vmatpush1.bf16.xpose.msra.mxu0 %v1337
      %1355 = vmatprep.subr.bf16.mxu0 0
      %1356 = vmatpush2.bf16.xpose.msra.mxu0 0
      %1357 = vmatprep.subr.bf16.mxu0 0
      %1358 = vmatpush2.bf16.xpose.msra.mxu0 0
      %1359 = vmatprep.subr.bf16.mxu0 0
      %1360 = vmatpush2.bf16.xpose.msra.mxu0 0
      %1361 = vmatprep.subr.bf16.mxu0 0
      %1362 = vmatpush2.bf16.xpose.msra.mxu0 0
      %1363 = vmatprep.subr.bf16.mxu0 0
      %1364 = vmatpush2.bf16.xpose.msra.mxu0 0
      %1365 = vmatprep.subr.bf16.mxu0 0
      %1366 = vmatpush2.bf16.xpose.msra.mxu0 0
      %1367 = vmatprep.subr.bf16.mxu0 0
      %1368 = vmatpush2.bf16.xpose.msra.mxu0 0
      %1369 = vmatprep.subr.bf16.mxu0 0
      %1370 = vmatpush2.bf16.xpose.msra.mxu0 0
      %1371 = vmatprep.mubr.bf16.mxu0 0
      %1372 = vmatmul.mubr.bf16.gmra.mxu0 %v1334
      %v1373 = vpop.f32.mrf.mxu0
      %v1374 = vadd.f32 %v962, %v1373
      %v1375 = vpop.f32.mrf.mxu0
      %v1376 = vpop.f32.mrf.mxu0
      %v1377 = vadd.f32 %v963, %v1376
      %v1378 = vpop.f32.mrf.mxu0
      %1379 = vdwg.mxu0
      %v1380 = vsel %vm1016, %v1374, -inf
      %1381 = vmax.xlane.f32.xlu0 %v1380
      %v1382 = vpop.xlane.xlu0 %1381
      %v1383 = vsel %vm1016, %v1377, -inf
      %1384 = vmax.xlane.f32.xlu0 %v1383
      %v1385 = vpop.xlane.xlu0 %1384
      %v1386 = vsub.f32 %v1374, %v1382
      %v1387 = vsub.f32 %v1377, %v1385
      %v1388 = vmul.f32 %v1386, 1.442695
      %v1389 = vpow.pop %v1388
      %v1390 = vmul.f32 %v1387, 1.442695
      %v1391 = vpow.pop %v1390
      %v1392 = vsel %vm1016, %v1389, 0.0
      %1393 = vadd.xlane.f32.xlu0 %v1392
      %v1394 = vpop.xlane.xlu0 %1393
      %v1395 = vsel %vm1016, %v1391, 0.0
      %1396 = vadd.xlane.f32.xlu0 %v1395
      %v1397 = vpop.xlane.xlu0 %1396
      %v1398 = vrcp.pop %v1394
      %v1399 = vrcp.pop %v1397
      %v1400 = vmul.f32 %v1389, %v1398
      %v1401 = vmul.f32 %v1391, %v1399
      %v1402 = vpack.c.bf16 %v1401, %v1400
      %1403 = vrot.lane.b32.xlu0 %v964, 40
      %v1404 = vpop.permute.xlu0 %1403
      %v1407 = vsel %vm1016, %v1402, 0
      %1409 = vmatprep.subr.bf16.mxu0 0
      %1410 = vmatpush1.bf16.msra.mxu0 0
      %1411 = vmatprep.subr.bf16.mxu0 0
      %1412 = vmatpush1.bf16.msra.mxu0 0
      %1413 = vmatprep.subr.bf16.mxu0 0
      %1414 = vmatpush1.bf16.msra.mxu0 0
      %1415 = vmatprep.subr.bf16.mxu0 0
      %1416 = vmatpush1.bf16.msra.mxu0 0
      %1417 = vmatprep.subr.bf16.mxu0 0
      %1418 = vmatpush1.bf16.msra.mxu0 0
      %1419 = vmatprep.subr.bf16.mxu0 0
      %1420 = vmatpush1.bf16.msra.mxu0 0
      %1421 = vmatprep.subr.bf16.mxu0 0
      %1422 = vmatpush1.bf16.msra.mxu0 0
      %1423 = vmatprep.subr.bf16.mxu0 0
      %1424 = vmatpush1.bf16.msra.mxu0 %v1404
      %1425 = vmatprep.subr.bf16.mxu0 0
      %1426 = vmatpush2.bf16.msra.mxu0 0
      %1427 = vmatprep.subr.bf16.mxu0 0
      %1428 = vmatpush2.bf16.msra.mxu0 0
      %1429 = vmatprep.subr.bf16.mxu0 0
      %1430 = vmatpush2.bf16.msra.mxu0 0
      %1431 = vmatprep.subr.bf16.mxu0 0
      %1432 = vmatpush2.bf16.msra.mxu0 0
      %1433 = vmatprep.subr.bf16.mxu0 0
      %1434 = vmatpush2.bf16.msra.mxu0 0
      %1435 = vmatprep.subr.bf16.mxu0 0
      %1436 = vmatpush2.bf16.msra.mxu0 0
      %1437 = vmatprep.subr.bf16.mxu0 0
      %1438 = vmatpush2.bf16.msra.mxu0 0
      %1439 = vmatprep.subr.bf16.mxu0 0
      %1440 = vmatpush2.bf16.msra.mxu0 0
      %1441 = vmatprep.mubr.bf16.mxu0 0
      %1442 = vmatmul.mubr.bf16.gmra.mxu0 %v1407
      %v1443 = vpop.f32.mrf.mxu0
      %v1444 = vadd.f32 0.0, %v1443
      %v1445 = vpop.f32.mrf.mxu0
      %v1446 = vpop.f32.mrf.mxu0
      %v1447 = vadd.f32 0.0, %v1446
      %v1448 = vpop.f32.mrf.mxu0
      %1449 = vdwg.mxu0
      %1452 = vrot.lane.b32.xlu0 %v1202, 8
      %v1453 = vpop.permute.xlu0 %1452
      %1454 = vrot.lane.b32.xlu0 %v1205, 8
      %v1455 = vpop.permute.xlu0 %1454
      %1460 = vrot.lane.b32.xlu0 %v1323, 16
      %v1461 = vpop.permute.xlu0 %1460
      %1462 = vrot.lane.b32.xlu0 %v1326, 16
      %v1463 = vpop.permute.xlu0 %1462
      %1468 = vrot.lane.b32.xlu0 %v1444, 24
      %v1469 = vpop.permute.xlu0 %1468
      %1470 = vrot.lane.b32.xlu0 %v1447, 24
      %v1471 = vpop.permute.xlu0 %1470
      %v1474 = vsel %vm968, %v1081, %v1453
      %v1475 = vsel %vm968, %v1084, %v1455
      %v1476 = vsel %vm1016, %v1474, %v1461
      %v1477 = vsel %vm1016, %v1475, %v1463
      %vm1478 = vcmask 195584
      %v1479 = vsel %vm1478, %v1476, %v1469
      %v1480 = vsel %vm1478, %v1477, %v1471
      %v1481 = vpack.c.bf16 %v1480, %v1479
      %v1482 = vld [vmem:[%s812] sm:$0xf]
      %v1483 = vld [vmem:[%s812 + $0x4] sm:$0xf]
      %v1484 = vld [vmem:[%s812 + $0x8] sm:$0xf]
      %v1485 = vld [vmem:[%s812 + $0xc] sm:$0xf]
      %v1486 = vld [vmem:[%s815] sm:$0x1]
      %v1488 = vlaneseq
      %v1489 = vshrl.u32 %v1488, 7
      %v1490 = vsub.s32 0, %v1489
      %v1491 = vrot.slane %v1486, %v1490
      %v1497 = vunpack.c.l.b16 %v1482
      %v1498 = vunpack.c.l.b16 %v1483
      %v1499 = vunpack.c.l.b16 %v1484
      %v1500 = vunpack.c.l.b16 %v1485
      %v1501 = vpack.c.b16 %v1498, %v1497
      %v1502 = vpack.c.b16 %v1500, %v1499
      %v1506 = vsel %vm902, %v1481, 0
      %1508 = vmatprep.subr.bf16.mxu0 0
      %1509 = vmatpush1.bf16.msra.mxu0 0
      %1510 = vmatprep.subr.bf16.mxu0 0
      %1511 = vmatpush1.bf16.msra.mxu0 0
      %1512 = vmatprep.subr.bf16.mxu0 0
      %1513 = vmatpush1.bf16.msra.mxu0 0
      %1514 = vmatprep.subr.bf16.mxu0 0
      %1515 = vmatpush1.bf16.msra.mxu0 0
      %1516 = vmatprep.subr.bf16.mxu0 0
      %1517 = vmatpush1.bf16.msra.mxu0 0
      %1518 = vmatprep.subr.bf16.mxu0 0
      %1519 = vmatpush1.bf16.msra.mxu0 0
      %1520 = vmatprep.subr.bf16.mxu0 0
      %1521 = vmatpush1.bf16.msra.mxu0 %v1502
      %1522 = vmatprep.subr.bf16.mxu0 0
      %1523 = vmatpush1.bf16.msra.mxu0 %v1501
      %1524 = vmatprep.subr.bf16.mxu0 0
      %1525 = vmatpush2.bf16.msra.mxu0 0
      %1526 = vmatprep.subr.bf16.mxu0 0
      %1527 = vmatpush2.bf16.msra.mxu0 0
      %1528 = vmatprep.subr.bf16.mxu0 0
      %1529 = vmatpush2.bf16.msra.mxu0 0
      %1530 = vmatprep.subr.bf16.mxu0 0
      %1531 = vmatpush2.bf16.msra.mxu0 0
      %1532 = vmatprep.subr.bf16.mxu0 0
      %1533 = vmatpush2.bf16.msra.mxu0 0
      %1534 = vmatprep.subr.bf16.mxu0 0
      %1535 = vmatpush2.bf16.msra.mxu0 0
      %1536 = vmatprep.subr.bf16.mxu0 0
      %1537 = vmatpush2.bf16.msra.mxu0 0
      %1538 = vmatprep.subr.bf16.mxu0 0
      %1539 = vmatpush2.bf16.msra.mxu0 0
      %1540 = vmatprep.mubr.bf16.mxu0 0
      %1541 = vmatmul.mubr.bf16.gmra.mxu0 %v1506
      %v1542 = vpop.f32.mrf.mxu0
      %v1543 = vadd.f32 %v1491, %v1542
      %v1544 = vpop.f32.mrf.mxu0
      %v1545 = vpop.f32.mrf.mxu0
      %v1546 = vadd.f32 %v1491, %v1545
      %v1547 = vpop.f32.mrf.mxu0
      %1548 = vdwg.mxu0
      %v1549 = vpack.c.bf16 %v877, %v877
      %v1550 = vld [vmem:[%s820] sm:$0xf]
      %v1551 = vld [vmem:[%s820 + $0x4] sm:$0xf]
      %v1552 = vld [vmem:[%s820 + $0x8] sm:$0xf]
      %v1553 = vld [vmem:[%s820 + $0xc] sm:$0xf]
      %v1554 = vld [vmem:[%s823] sm:$0x1]
      %v1556 = vlaneseq
      %v1557 = vshrl.u32 %v1556, 7
      %v1558 = vsub.s32 0, %v1557
      %v1559 = vrot.slane %v1554, %v1558
      %v1565 = vunpack.c.l.b16 %v1550
      %v1566 = vunpack.c.l.b16 %v1551
      %v1567 = vunpack.c.l.b16 %v1552
      %v1568 = vunpack.c.l.b16 %v1553
      %v1569 = vpack.c.b16 %v1566, %v1565
      %v1570 = vpack.c.b16 %v1568, %v1567
      %v1574 = vsel %vm902, %v1549, 0
      %1576 = vmatprep.subr.bf16.mxu0 0
      %1577 = vmatpush1.bf16.msra.mxu0 0
      %1578 = vmatprep.subr.bf16.mxu0 0
      %1579 = vmatpush1.bf16.msra.mxu0 0
      %1580 = vmatprep.subr.bf16.mxu0 0
      %1581 = vmatpush1.bf16.msra.mxu0 0
      %1582 = vmatprep.subr.bf16.mxu0 0
      %1583 = vmatpush1.bf16.msra.mxu0 0
      %1584 = vmatprep.subr.bf16.mxu0 0
      %1585 = vmatpush1.bf16.msra.mxu0 0
      %1586 = vmatprep.subr.bf16.mxu0 0
      %1587 = vmatpush1.bf16.msra.mxu0 0
      %1588 = vmatprep.subr.bf16.mxu0 0
      %1589 = vmatpush1.bf16.msra.mxu0 %v1570
      %1590 = vmatprep.subr.bf16.mxu0 0
      %1591 = vmatpush1.bf16.msra.mxu0 %v1569
      %1592 = vmatprep.subr.bf16.mxu0 0
      %1593 = vmatpush2.bf16.msra.mxu0 0
      %1594 = vmatprep.subr.bf16.mxu0 0
      %1595 = vmatpush2.bf16.msra.mxu0 0
      %1596 = vmatprep.subr.bf16.mxu0 0
      %1597 = vmatpush2.bf16.msra.mxu0 0
      %1598 = vmatprep.subr.bf16.mxu0 0
      %1599 = vmatpush2.bf16.msra.mxu0 0
      %1600 = vmatprep.subr.bf16.mxu0 0
      %1601 = vmatpush2.bf16.msra.mxu0 0
      %1602 = vmatprep.subr.bf16.mxu0 0
      %1603 = vmatpush2.bf16.msra.mxu0 0
      %1604 = vmatprep.subr.bf16.mxu0 0
      %1605 = vmatpush2.bf16.msra.mxu0 0
      %1606 = vmatprep.subr.bf16.mxu0 0
      %1607 = vmatpush2.bf16.msra.mxu0 0
      %1608 = vmatprep.mubr.bf16.mxu0 0
      %1609 = vmatmul.mubr.bf16.gmra.mxu0 %v1574
      %v1610 = vpop.f32.mrf.mxu0
      %v1611 = vadd.f32 %v1559, %v1610
      %v1612 = vpop.f32.mrf.mxu0
      %v1613 = vpop.f32.mrf.mxu0
      %v1614 = vpop.f32.mrf.mxu0
      %1615 = vdwg.mxu0
      %v1616 = vpack.c.bf16 %v1546, %v1543
      %v1617 = vpack.c.bf16 %v1611, %v1611
      %v1619 = vsel %vm968, %v1616, 0
      %v1622 = vsel %vm968, %v1617, 0
      %1624 = vmatprep.subr.bf16.mxu0 0
      %1625 = vmatpush1.bf16.xpose.msra.mxu0 0
      %1626 = vmatprep.subr.bf16.mxu0 0
      %1627 = vmatpush1.bf16.xpose.msra.mxu0 0
      %1628 = vmatprep.subr.bf16.mxu0 0
      %1629 = vmatpush1.bf16.xpose.msra.mxu0 0
      %1630 = vmatprep.subr.bf16.mxu0 0
      %1631 = vmatpush1.bf16.xpose.msra.mxu0 0
      %1632 = vmatprep.subr.bf16.mxu0 0
      %1633 = vmatpush1.bf16.xpose.msra.mxu0 0
      %1634 = vmatprep.subr.bf16.mxu0 0
      %1635 = vmatpush1.bf16.xpose.msra.mxu0 0
      %1636 = vmatprep.subr.bf16.mxu0 0
      %1637 = vmatpush1.bf16.xpose.msra.mxu0 0
      %1638 = vmatprep.subr.bf16.mxu0 0
      %1639 = vmatpush1.bf16.xpose.msra.mxu0 %v1622
      %1640 = vmatprep.subr.bf16.mxu0 0
      %1641 = vmatpush2.bf16.xpose.msra.mxu0 0
      %1642 = vmatprep.subr.bf16.mxu0 0
      %1643 = vmatpush2.bf16.xpose.msra.mxu0 0
      %1644 = vmatprep.subr.bf16.mxu0 0
      %1645 = vmatpush2.bf16.xpose.msra.mxu0 0
      %1646 = vmatprep.subr.bf16.mxu0 0
      %1647 = vmatpush2.bf16.xpose.msra.mxu0 0
      %1648 = vmatprep.subr.bf16.mxu0 0
      %1649 = vmatpush2.bf16.xpose.msra.mxu0 0
      %1650 = vmatprep.subr.bf16.mxu0 0
      %1651 = vmatpush2.bf16.xpose.msra.mxu0 0
      %1652 = vmatprep.subr.bf16.mxu0 0
      %1653 = vmatpush2.bf16.xpose.msra.mxu0 0
      %1654 = vmatprep.subr.bf16.mxu0 0
      %1655 = vmatpush2.bf16.xpose.msra.mxu0 0
      %1656 = vmatprep.mubr.bf16.mxu0 0
      %1657 = vmatmul.mubr.bf16.gmra.mxu0 %v1619
      %v1658 = vpop.f32.mrf.mxu0
      %v1659 = vadd.f32 0.0, %v1658
      %v1660 = vpop.f32.mrf.mxu0
      %v1661 = vpop.f32.mrf.mxu0
      %v1662 = vadd.f32 0.0, %v1661
      %v1663 = vpop.f32.mrf.mxu0
      %1664 = vdwg.mxu0
      %vm1665 = vcmask 23552
      %v1666 = vsel %vm1665, %v1659, -inf
      %1667 = vmax.xlane.f32.xlu0 %v1666
      %v1668 = vpop.xlane.xlu0 %1667
      %v1669 = vsel %vm1665, %v1662, -inf
      %1670 = vmax.xlane.f32.xlu0 %v1669
      %v1671 = vpop.xlane.xlu0 %1670
      %v1672 = vsub.f32 %v1659, %v1668
      %v1673 = vsub.f32 %v1662, %v1671
      %v1674 = vmul.f32 %v1672, 1.442695
      %v1675 = vpow.pop %v1674
      %v1676 = vmul.f32 %v1673, 1.442695
      %v1677 = vpow.pop %v1676
      %v1678 = vsel %vm1665, %v1675, 0.0
      %1679 = vadd.xlane.f32.xlu0 %v1678
      %v1680 = vpop.xlane.xlu0 %1679
      %v1681 = vsel %vm1665, %v1677, 0.0
      %1682 = vadd.xlane.f32.xlu0 %v1681
      %v1683 = vpop.xlane.xlu0 %1682
      %v1684 = vrcp.pop %v1680
      %v1685 = vrcp.pop %v1683
      %v1686 = vmul.f32 %v1675, %v1684
      %v1687 = vmul.f32 %v1677, %v1685
      %v1688 = vpack.c.bf16 %v1687, %v1686
      %1690 = vrot.lane.b32.xlu0 %v1617, 96
      %v1691 = vpop.permute.xlu0 %1690
      %v1693 = vsel %vm1665, %v1688, 0
      %vm1695 = vcmask 1040384
      %vm1696 = vcmask 1041408
      %v1697 = vsel %vm1695, 4294967295, 65535
      %v1698 = vsel %vm1696, %v1697, 0
      %v1700 = vand.u32 %v1691, %v1698
      %1702 = vmatprep.subr.bf16.mxu0 0
      %1703 = vmatpush1.bf16.msra.mxu0 0
      %1704 = vmatprep.subr.bf16.mxu0 0
      %1705 = vmatpush1.bf16.msra.mxu0 0
      %1706 = vmatprep.subr.bf16.mxu0 0
      %1707 = vmatpush1.bf16.msra.mxu0 0
      %1708 = vmatprep.subr.bf16.mxu0 0
      %1709 = vmatpush1.bf16.msra.mxu0 0
      %1710 = vmatprep.subr.bf16.mxu0 0
      %1711 = vmatpush1.bf16.msra.mxu0 0
      %1712 = vmatprep.subr.bf16.mxu0 0
      %1713 = vmatpush1.bf16.msra.mxu0 0
      %1714 = vmatprep.subr.bf16.mxu0 0
      %1715 = vmatpush1.bf16.msra.mxu0 0
      %1716 = vmatprep.subr.bf16.mxu0 0
      %1717 = vmatpush1.bf16.msra.mxu0 %v1700
      %1718 = vmatprep.subr.bf16.mxu0 0
      %1719 = vmatpush2.bf16.msra.mxu0 0
      %1720 = vmatprep.subr.bf16.mxu0 0
      %1721 = vmatpush2.bf16.msra.mxu0 0
      %1722 = vmatprep.subr.bf16.mxu0 0
      %1723 = vmatpush2.bf16.msra.mxu0 0
      %1724 = vmatprep.subr.bf16.mxu0 0
      %1725 = vmatpush2.bf16.msra.mxu0 0
      %1726 = vmatprep.subr.bf16.mxu0 0
      %1727 = vmatpush2.bf16.msra.mxu0 0
      %1728 = vmatprep.subr.bf16.mxu0 0
      %1729 = vmatpush2.bf16.msra.mxu0 0
      %1730 = vmatprep.subr.bf16.mxu0 0
      %1731 = vmatpush2.bf16.msra.mxu0 0
      %1732 = vmatprep.subr.bf16.mxu0 0
      %1733 = vmatpush2.bf16.msra.mxu0 0
      %1734 = vmatprep.mubr.bf16.mxu0 0
      %1735 = vmatmul.mubr.bf16.gmra.mxu0 %v1693
      %v1736 = vpop.f32.mrf.mxu0
      %v1737 = vadd.f32 0.0, %v1736
      %v1738 = vpop.f32.mrf.mxu0
      %v1739 = vpop.f32.mrf.mxu0
      %v1740 = vadd.f32 0.0, %v1739
      %v1741 = vpop.f32.mrf.mxu0
      %1742 = vdwg.mxu0
      %1744 = vrot.lane.b32.xlu0 %v1616, 120
      %v1745 = vpop.permute.xlu0 %1744
      %1746 = vrot.lane.b32.xlu0 %v1617, 120
      %v1747 = vpop.permute.xlu0 %1746
      %v1749 = vsel %vm968, %v1745, 0
      %v1752 = vsel %vm968, %v1747, 0
      %1754 = vmatprep.subr.bf16.mxu0 0
      %1755 = vmatpush1.bf16.xpose.msra.mxu0 0
      %1756 = vmatprep.subr.bf16.mxu0 0
      %1757 = vmatpush1.bf16.xpose.msra.mxu0 0
      %1758 = vmatprep.subr.bf16.mxu0 0
      %1759 = vmatpush1.bf16.xpose.msra.mxu0 0
      %1760 = vmatprep.subr.bf16.mxu0 0
      %1761 = vmatpush1.bf16.xpose.msra.mxu0 0
      %1762 = vmatprep.subr.bf16.mxu0 0
      %1763 = vmatpush1.bf16.xpose.msra.mxu0 0
      %1764 = vmatprep.subr.bf16.mxu0 0
      %1765 = vmatpush1.bf16.xpose.msra.mxu0 0
      %1766 = vmatprep.subr.bf16.mxu0 0
      %1767 = vmatpush1.bf16.xpose.msra.mxu0 0
      %1768 = vmatprep.subr.bf16.mxu0 0
      %1769 = vmatpush1.bf16.xpose.msra.mxu0 %v1752
      %1770 = vmatprep.subr.bf16.mxu0 0
      %1771 = vmatpush2.bf16.xpose.msra.mxu0 0
      %1772 = vmatprep.subr.bf16.mxu0 0
      %1773 = vmatpush2.bf16.xpose.msra.mxu0 0
      %1774 = vmatprep.subr.bf16.mxu0 0
      %1775 = vmatpush2.bf16.xpose.msra.mxu0 0
      %1776 = vmatprep.subr.bf16.mxu0 0
      %1777 = vmatpush2.bf16.xpose.msra.mxu0 0
      %1778 = vmatprep.subr.bf16.mxu0 0
      %1779 = vmatpush2.bf16.xpose.msra.mxu0 0
      %1780 = vmatprep.subr.bf16.mxu0 0
      %1781 = vmatpush2.bf16.xpose.msra.mxu0 0
      %1782 = vmatprep.subr.bf16.mxu0 0
      %1783 = vmatpush2.bf16.xpose.msra.mxu0 0
      %1784 = vmatprep.subr.bf16.mxu0 0
      %1785 = vmatpush2.bf16.xpose.msra.mxu0 0
      %1786 = vmatprep.mubr.bf16.mxu0 0
      %1787 = vmatmul.mubr.bf16.gmra.mxu0 %v1749
      %v1788 = vpop.f32.mrf.mxu0
      %v1789 = vadd.f32 0.0, %v1788
      %v1790 = vpop.f32.mrf.mxu0
      %v1791 = vpop.f32.mrf.mxu0
      %v1792 = vadd.f32 0.0, %v1791
      %v1793 = vpop.f32.mrf.mxu0
      %1794 = vdwg.mxu0
      %v1795 = vsel %vm1665, %v1789, -inf
      %1796 = vmax.xlane.f32.xlu0 %v1795
      %v1797 = vpop.xlane.xlu0 %1796
      %v1798 = vsel %vm1665, %v1792, -inf
      %1799 = vmax.xlane.f32.xlu0 %v1798
      %v1800 = vpop.xlane.xlu0 %1799
      %v1801 = vsub.f32 %v1789, %v1797
      %v1802 = vsub.f32 %v1792, %v1800
      %v1803 = vmul.f32 %v1801, 1.442695
      %v1804 = vpow.pop %v1803
      %v1805 = vmul.f32 %v1802, 1.442695
      %v1806 = vpow.pop %v1805
      %v1807 = vsel %vm1665, %v1804, 0.0
      %1808 = vadd.xlane.f32.xlu0 %v1807
      %v1809 = vpop.xlane.xlu0 %1808
      %v1810 = vsel %vm1665, %v1806, 0.0
      %1811 = vadd.xlane.f32.xlu0 %v1810
      %v1812 = vpop.xlane.xlu0 %1811
      %v1813 = vrcp.pop %v1809
      %v1814 = vrcp.pop %v1812
      %v1815 = vmul.f32 %v1804, %v1813
      %v1816 = vmul.f32 %v1806, %v1814
      %v1817 = vpack.c.bf16 %v1816, %v1815
      %1818 = vrot.lane.b32.xlu0 %v1617, 88
      %v1819 = vpop.permute.xlu0 %1818
      %v1821 = vsel %vm1665, %v1817, 0
      %v1824 = vand.u32 %v1819, %v1698
      %1826 = vmatprep.subr.bf16.mxu0 0
      %1827 = vmatpush1.bf16.msra.mxu0 0
      %1828 = vmatprep.subr.bf16.mxu0 0
      %1829 = vmatpush1.bf16.msra.mxu0 0
      %1830 = vmatprep.subr.bf16.mxu0 0
      %1831 = vmatpush1.bf16.msra.mxu0 0
      %1832 = vmatprep.subr.bf16.mxu0 0
      %1833 = vmatpush1.bf16.msra.mxu0 0
      %1834 = vmatprep.subr.bf16.mxu0 0
      %1835 = vmatpush1.bf16.msra.mxu0 0
      %1836 = vmatprep.subr.bf16.mxu0 0
      %1837 = vmatpush1.bf16.msra.mxu0 0
      %1838 = vmatprep.subr.bf16.mxu0 0
      %1839 = vmatpush1.bf16.msra.mxu0 0
      %1840 = vmatprep.subr.bf16.mxu0 0
      %1841 = vmatpush1.bf16.msra.mxu0 %v1824
      %1842 = vmatprep.subr.bf16.mxu0 0
      %1843 = vmatpush2.bf16.msra.mxu0 0
      %1844 = vmatprep.subr.bf16.mxu0 0
      %1845 = vmatpush2.bf16.msra.mxu0 0
      %1846 = vmatprep.subr.bf16.mxu0 0
      %1847 = vmatpush2.bf16.msra.mxu0 0
      %1848 = vmatprep.subr.bf16.mxu0 0
      %1849 = vmatpush2.bf16.msra.mxu0 0
      %1850 = vmatprep.subr.bf16.mxu0 0
      %1851 = vmatpush2.bf16.msra.mxu0 0
      %1852 = vmatprep.subr.bf16.mxu0 0
      %1853 = vmatpush2.bf16.msra.mxu0 0
      %1854 = vmatprep.subr.bf16.mxu0 0
      %1855 = vmatpush2.bf16.msra.mxu0 0
      %1856 = vmatprep.subr.bf16.mxu0 0
      %1857 = vmatpush2.bf16.msra.mxu0 0
      %1858 = vmatprep.mubr.bf16.mxu0 0
      %1859 = vmatmul.mubr.bf16.gmra.mxu0 %v1821
      %v1860 = vpop.f32.mrf.mxu0
      %v1861 = vadd.f32 0.0, %v1860
      %v1862 = vpop.f32.mrf.mxu0
      %v1863 = vpop.f32.mrf.mxu0
      %v1864 = vadd.f32 0.0, %v1863
      %v1865 = vpop.f32.mrf.mxu0
      %1866 = vdwg.mxu0
      %1867 = vrot.lane.b32.xlu0 %v1616, 112
      %v1868 = vpop.permute.xlu0 %1867
      %1869 = vrot.lane.b32.xlu0 %v1617, 112
      %v1870 = vpop.permute.xlu0 %1869
      %v1872 = vsel %vm968, %v1868, 0
      %v1875 = vsel %vm968, %v1870, 0
      %1877 = vmatprep.subr.bf16.mxu0 0
      %1878 = vmatpush1.bf16.xpose.msra.mxu0 0
      %1879 = vmatprep.subr.bf16.mxu0 0
      %1880 = vmatpush1.bf16.xpose.msra.mxu0 0
      %1881 = vmatprep.subr.bf16.mxu0 0
      %1882 = vmatpush1.bf16.xpose.msra.mxu0 0
      %1883 = vmatprep.subr.bf16.mxu0 0
      %1884 = vmatpush1.bf16.xpose.msra.mxu0 0
      %1885 = vmatprep.subr.bf16.mxu0 0
      %1886 = vmatpush1.bf16.xpose.msra.mxu0 0
      %1887 = vmatprep.subr.bf16.mxu0 0
      %1888 = vmatpush1.bf16.xpose.msra.mxu0 0
      %1889 = vmatprep.subr.bf16.mxu0 0
      %1890 = vmatpush1.bf16.xpose.msra.mxu0 0
      %1891 = vmatprep.subr.bf16.mxu0 0
      %1892 = vmatpush1.bf16.xpose.msra.mxu0 %v1875
      %1893 = vmatprep.subr.bf16.mxu0 0
      %1894 = vmatpush2.bf16.xpose.msra.mxu0 0
      %1895 = vmatprep.subr.bf16.mxu0 0
      %1896 = vmatpush2.bf16.xpose.msra.mxu0 0
      %1897 = vmatprep.subr.bf16.mxu0 0
      %1898 = vmatpush2.bf16.xpose.msra.mxu0 0
      %1899 = vmatprep.subr.bf16.mxu0 0
      %1900 = vmatpush2.bf16.xpose.msra.mxu0 0
      %1901 = vmatprep.subr.bf16.mxu0 0
      %1902 = vmatpush2.bf16.xpose.msra.mxu0 0
      %1903 = vmatprep.subr.bf16.mxu0 0
      %1904 = vmatpush2.bf16.xpose.msra.mxu0 0
      %1905 = vmatprep.subr.bf16.mxu0 0
      %1906 = vmatpush2.bf16.xpose.msra.mxu0 0
      %1907 = vmatprep.subr.bf16.mxu0 0
      %1908 = vmatpush2.bf16.xpose.msra.mxu0 0
      %1909 = vmatprep.mubr.bf16.mxu0 0
      %1910 = vmatmul.mubr.bf16.gmra.mxu0 %v1872
      %v1911 = vpop.f32.mrf.mxu0
      %v1912 = vadd.f32 0.0, %v1911
      %v1913 = vpop.f32.mrf.mxu0
      %v1914 = vpop.f32.mrf.mxu0
      %v1915 = vadd.f32 0.0, %v1914
      %v1916 = vpop.f32.mrf.mxu0
      %1917 = vdwg.mxu0
      %v1918 = vsel %vm1665, %v1912, -inf
      %1919 = vmax.xlane.f32.xlu0 %v1918
      %v1920 = vpop.xlane.xlu0 %1919
      %v1921 = vsel %vm1665, %v1915, -inf
      %1922 = vmax.xlane.f32.xlu0 %v1921
      %v1923 = vpop.xlane.xlu0 %1922
      %v1924 = vsub.f32 %v1912, %v1920
      %v1925 = vsub.f32 %v1915, %v1923
      %v1926 = vmul.f32 %v1924, 1.442695
      %v1927 = vpow.pop %v1926
      %v1928 = vmul.f32 %v1925, 1.442695
      %v1929 = vpow.pop %v1928
      %v1930 = vsel %vm1665, %v1927, 0.0
      %1931 = vadd.xlane.f32.xlu0 %v1930
      %v1932 = vpop.xlane.xlu0 %1931
      %v1933 = vsel %vm1665, %v1929, 0.0
      %1934 = vadd.xlane.f32.xlu0 %v1933
      %v1935 = vpop.xlane.xlu0 %1934
      %v1936 = vrcp.pop %v1932
      %v1937 = vrcp.pop %v1935
      %v1938 = vmul.f32 %v1927, %v1936
      %v1939 = vmul.f32 %v1929, %v1937
      %v1940 = vpack.c.bf16 %v1939, %v1938
      %1941 = vrot.lane.b32.xlu0 %v1617, 80
      %v1942 = vpop.permute.xlu0 %1941
      %v1944 = vsel %vm1665, %v1940, 0
      %v1947 = vand.u32 %v1942, %v1698
      %1949 = vmatprep.subr.bf16.mxu0 0
      %1950 = vmatpush1.bf16.msra.mxu0 0
      %1951 = vmatprep.subr.bf16.mxu0 0
      %1952 = vmatpush1.bf16.msra.mxu0 0
      %1953 = vmatprep.subr.bf16.mxu0 0
      %1954 = vmatpush1.bf16.msra.mxu0 0
      %1955 = vmatprep.subr.bf16.mxu0 0
      %1956 = vmatpush1.bf16.msra.mxu0 0
      %1957 = vmatprep.subr.bf16.mxu0 0
      %1958 = vmatpush1.bf16.msra.mxu0 0
      %1959 = vmatprep.subr.bf16.mxu0 0
      %1960 = vmatpush1.bf16.msra.mxu0 0
      %1961 = vmatprep.subr.bf16.mxu0 0
      %1962 = vmatpush1.bf16.msra.mxu0 0
      %1963 = vmatprep.subr.bf16.mxu0 0
      %1964 = vmatpush1.bf16.msra.mxu0 %v1947
      %1965 = vmatprep.subr.bf16.mxu0 0
      %1966 = vmatpush2.bf16.msra.mxu0 0
      %1967 = vmatprep.subr.bf16.mxu0 0
      %1968 = vmatpush2.bf16.msra.mxu0 0
      %1969 = vmatprep.subr.bf16.mxu0 0
      %1970 = vmatpush2.bf16.msra.mxu0 0
      %1971 = vmatprep.subr.bf16.mxu0 0
      %1972 = vmatpush2.bf16.msra.mxu0 0
      %1973 = vmatprep.subr.bf16.mxu0 0
      %1974 = vmatpush2.bf16.msra.mxu0 0
      %1975 = vmatprep.subr.bf16.mxu0 0
      %1976 = vmatpush2.bf16.msra.mxu0 0
      %1977 = vmatprep.subr.bf16.mxu0 0
      %1978 = vmatpush2.bf16.msra.mxu0 0
      %1979 = vmatprep.subr.bf16.mxu0 0
      %1980 = vmatpush2.bf16.msra.mxu0 0
      %1981 = vmatprep.mubr.bf16.mxu0 0
      %1982 = vmatmul.mubr.bf16.gmra.mxu0 %v1944
      %v1983 = vpop.f32.mrf.mxu0
      %v1984 = vadd.f32 0.0, %v1983
      %v1985 = vpop.f32.mrf.mxu0
      %v1986 = vpop.f32.mrf.mxu0
      %v1987 = vadd.f32 0.0, %v1986
      %v1988 = vpop.f32.mrf.mxu0
      %1989 = vdwg.mxu0
      %1990 = vrot.lane.b32.xlu0 %v1616, 104
      %v1991 = vpop.permute.xlu0 %1990
      %1992 = vrot.lane.b32.xlu0 %v1617, 104
      %v1993 = vpop.permute.xlu0 %1992
      %v1995 = vsel %vm968, %v1991, 0
      %v1998 = vsel %vm968, %v1993, 0
      %2000 = vmatprep.subr.bf16.mxu0 0
      %2001 = vmatpush1.bf16.xpose.msra.mxu0 0
      %2002 = vmatprep.subr.bf16.mxu0 0
      %2003 = vmatpush1.bf16.xpose.msra.mxu0 0
      %2004 = vmatprep.subr.bf16.mxu0 0
      %2005 = vmatpush1.bf16.xpose.msra.mxu0 0
      %2006 = vmatprep.subr.bf16.mxu0 0
      %2007 = vmatpush1.bf16.xpose.msra.mxu0 0
      %2008 = vmatprep.subr.bf16.mxu0 0
      %2009 = vmatpush1.bf16.xpose.msra.mxu0 0
      %2010 = vmatprep.subr.bf16.mxu0 0
      %2011 = vmatpush1.bf16.xpose.msra.mxu0 0
      %2012 = vmatprep.subr.bf16.mxu0 0
      %2013 = vmatpush1.bf16.xpose.msra.mxu0 0
      %2014 = vmatprep.subr.bf16.mxu0 0
      %2015 = vmatpush1.bf16.xpose.msra.mxu0 %v1998
      %2016 = vmatprep.subr.bf16.mxu0 0
      %2017 = vmatpush2.bf16.xpose.msra.mxu0 0
      %2018 = vmatprep.subr.bf16.mxu0 0
      %2019 = vmatpush2.bf16.xpose.msra.mxu0 0
      %2020 = vmatprep.subr.bf16.mxu0 0
      %2021 = vmatpush2.bf16.xpose.msra.mxu0 0
      %2022 = vmatprep.subr.bf16.mxu0 0
      %2023 = vmatpush2.bf16.xpose.msra.mxu0 0
      %2024 = vmatprep.subr.bf16.mxu0 0
      %2025 = vmatpush2.bf16.xpose.msra.mxu0 0
      %2026 = vmatprep.subr.bf16.mxu0 0
      %2027 = vmatpush2.bf16.xpose.msra.mxu0 0
      %2028 = vmatprep.subr.bf16.mxu0 0
      %2029 = vmatpush2.bf16.xpose.msra.mxu0 0
      %2030 = vmatprep.subr.bf16.mxu0 0
      %2031 = vmatpush2.bf16.xpose.msra.mxu0 0
      %2032 = vmatprep.mubr.bf16.mxu0 0
      %2033 = vmatmul.mubr.bf16.gmra.mxu0 %v1995
      %v2034 = vpop.f32.mrf.mxu0
      %v2035 = vadd.f32 0.0, %v2034
      %v2036 = vpop.f32.mrf.mxu0
      %v2037 = vpop.f32.mrf.mxu0
      %v2038 = vadd.f32 0.0, %v2037
      %v2039 = vpop.f32.mrf.mxu0
      %2040 = vdwg.mxu0
      %v2041 = vsel %vm1665, %v2035, -inf
      %2042 = vmax.xlane.f32.xlu0 %v2041
      %v2043 = vpop.xlane.xlu0 %2042
      %v2044 = vsel %vm1665, %v2038, -inf
      %2045 = vmax.xlane.f32.xlu0 %v2044
      %v2046 = vpop.xlane.xlu0 %2045
      %v2047 = vsub.f32 %v2035, %v2043
      %v2048 = vsub.f32 %v2038, %v2046
      %v2049 = vmul.f32 %v2047, 1.442695
      %v2050 = vpow.pop %v2049
      %v2051 = vmul.f32 %v2048, 1.442695
      %v2052 = vpow.pop %v2051
      %v2053 = vsel %vm1665, %v2050, 0.0
      %2054 = vadd.xlane.f32.xlu0 %v2053
      %v2055 = vpop.xlane.xlu0 %2054
      %v2056 = vsel %vm1665, %v2052, 0.0
      %2057 = vadd.xlane.f32.xlu0 %v2056
      %v2058 = vpop.xlane.xlu0 %2057
      %v2059 = vrcp.pop %v2055
      %v2060 = vrcp.pop %v2058
      %v2061 = vmul.f32 %v2050, %v2059
      %v2062 = vmul.f32 %v2052, %v2060
      %v2063 = vpack.c.bf16 %v2062, %v2061
      %2064 = vrot.lane.b32.xlu0 %v1617, 72
      %v2065 = vpop.permute.xlu0 %2064
      %v2067 = vsel %vm1665, %v2063, 0
      %v2070 = vand.u32 %v2065, %v1698
      %2072 = vmatprep.subr.bf16.mxu0 0
      %2073 = vmatpush1.bf16.msra.mxu0 0
      %2074 = vmatprep.subr.bf16.mxu0 0
      %2075 = vmatpush1.bf16.msra.mxu0 0
      %2076 = vmatprep.subr.bf16.mxu0 0
      %2077 = vmatpush1.bf16.msra.mxu0 0
      %2078 = vmatprep.subr.bf16.mxu0 0
      %2079 = vmatpush1.bf16.msra.mxu0 0
      %2080 = vmatprep.subr.bf16.mxu0 0
      %2081 = vmatpush1.bf16.msra.mxu0 0
      %2082 = vmatprep.subr.bf16.mxu0 0
      %2083 = vmatpush1.bf16.msra.mxu0 0
      %2084 = vmatprep.subr.bf16.mxu0 0
      %2085 = vmatpush1.bf16.msra.mxu0 0
      %2086 = vmatprep.subr.bf16.mxu0 0
      %2087 = vmatpush1.bf16.msra.mxu0 %v2070
      %2088 = vmatprep.subr.bf16.mxu0 0
      %2089 = vmatpush2.bf16.msra.mxu0 0
      %2090 = vmatprep.subr.bf16.mxu0 0
      %2091 = vmatpush2.bf16.msra.mxu0 0
      %2092 = vmatprep.subr.bf16.mxu0 0
      %2093 = vmatpush2.bf16.msra.mxu0 0
      %2094 = vmatprep.subr.bf16.mxu0 0
      %2095 = vmatpush2.bf16.msra.mxu0 0
      %2096 = vmatprep.subr.bf16.mxu0 0
      %2097 = vmatpush2.bf16.msra.mxu0 0
      %2098 = vmatprep.subr.bf16.mxu0 0
      %2099 = vmatpush2.bf16.msra.mxu0 0
      %2100 = vmatprep.subr.bf16.mxu0 0
      %2101 = vmatpush2.bf16.msra.mxu0 0
      %2102 = vmatprep.subr.bf16.mxu0 0
      %2103 = vmatpush2.bf16.msra.mxu0 0
      %2104 = vmatprep.mubr.bf16.mxu0 0
      %2105 = vmatmul.mubr.bf16.gmra.mxu0 %v2067
      %v2106 = vpop.f32.mrf.mxu0
      %v2107 = vadd.f32 0.0, %v2106
      %v2108 = vpop.f32.mrf.mxu0
      %v2109 = vpop.f32.mrf.mxu0
      %v2110 = vadd.f32 0.0, %v2109
      %v2111 = vpop.f32.mrf.mxu0
      %2112 = vdwg.mxu0
      %2115 = vrot.lane.b32.xlu0 %v1861, 8
      %v2116 = vpop.permute.xlu0 %2115
      %2117 = vrot.lane.b32.xlu0 %v1864, 8
      %v2118 = vpop.permute.xlu0 %2117
      %2123 = vrot.lane.b32.xlu0 %v1984, 16
      %v2124 = vpop.permute.xlu0 %2123
      %2125 = vrot.lane.b32.xlu0 %v1987, 16
      %v2126 = vpop.permute.xlu0 %2125
      %2131 = vrot.lane.b32.xlu0 %v2107, 24
      %v2132 = vpop.permute.xlu0 %2131
      %2133 = vrot.lane.b32.xlu0 %v2110, 24
      %v2134 = vpop.permute.xlu0 %2133
      %v2137 = vsel %vm968, %v1737, %v2116
      %v2138 = vsel %vm968, %v1740, %v2118
      %v2139 = vsel %vm1016, %v2137, %v2124
      %v2140 = vsel %vm1016, %v2138, %v2126
      %v2141 = vsel %vm1478, %v2139, %v2132
      %v2142 = vsel %vm1478, %v2140, %v2134
      %v2143 = vpack.c.bf16 %v2142, %v2141
      %v2144 = vld [vmem:[%s828] sm:$0xf]
      %v2145 = vld [vmem:[%s828 + $0x4] sm:$0xf]
      %v2146 = vld [vmem:[%s828 + $0x8] sm:$0xf]
      %v2147 = vld [vmem:[%s828 + $0xc] sm:$0xf]
      %v2148 = vld [vmem:[%s831] sm:$0x1]
      %v2150 = vlaneseq
      %v2151 = vshrl.u32 %v2150, 7
      %v2152 = vsub.s32 0, %v2151
      %v2153 = vrot.slane %v2148, %v2152
      %v2159 = vunpack.c.l.b16 %v2144
      %v2160 = vunpack.c.l.b16 %v2145
      %v2161 = vunpack.c.l.b16 %v2146
      %v2162 = vunpack.c.l.b16 %v2147
      %v2163 = vpack.c.b16 %v2160, %v2159
      %v2164 = vpack.c.b16 %v2162, %v2161
      %v2168 = vsel %vm902, %v2143, 0
      %2170 = vmatprep.subr.bf16.mxu0 0
      %2171 = vmatpush1.bf16.msra.mxu0 0
      %2172 = vmatprep.subr.bf16.mxu0 0
      %2173 = vmatpush1.bf16.msra.mxu0 0
      %2174 = vmatprep.subr.bf16.mxu0 0
      %2175 = vmatpush1.bf16.msra.mxu0 0
      %2176 = vmatprep.subr.bf16.mxu0 0
      %2177 = vmatpush1.bf16.msra.mxu0 0
      %2178 = vmatprep.subr.bf16.mxu0 0
      %2179 = vmatpush1.bf16.msra.mxu0 0
      %2180 = vmatprep.subr.bf16.mxu0 0
      %2181 = vmatpush1.bf16.msra.mxu0 0
      %2182 = vmatprep.subr.bf16.mxu0 0
      %2183 = vmatpush1.bf16.msra.mxu0 %v2164
      %2184 = vmatprep.subr.bf16.mxu0 0
      %2185 = vmatpush1.bf16.msra.mxu0 %v2163
      %2186 = vmatprep.subr.bf16.mxu0 0
      %2187 = vmatpush2.bf16.msra.mxu0 0
      %2188 = vmatprep.subr.bf16.mxu0 0
      %2189 = vmatpush2.bf16.msra.mxu0 0
      %2190 = vmatprep.subr.bf16.mxu0 0
      %2191 = vmatpush2.bf16.msra.mxu0 0
      %2192 = vmatprep.subr.bf16.mxu0 0
      %2193 = vmatpush2.bf16.msra.mxu0 0
      %2194 = vmatprep.subr.bf16.mxu0 0
      %2195 = vmatpush2.bf16.msra.mxu0 0
      %2196 = vmatprep.subr.bf16.mxu0 0
      %2197 = vmatpush2.bf16.msra.mxu0 0
      %2198 = vmatprep.subr.bf16.mxu0 0
      %2199 = vmatpush2.bf16.msra.mxu0 0
      %2200 = vmatprep.subr.bf16.mxu0 0
      %2201 = vmatpush2.bf16.msra.mxu0 0
      %2202 = vmatprep.mubr.bf16.mxu0 0
      %2203 = vmatmul.mubr.bf16.gmra.mxu0 %v2168
      %v2204 = vpop.f32.mrf.mxu0
      %v2205 = vadd.f32 %v2153, %v2204
      %v2206 = vpop.f32.mrf.mxu0
      %v2207 = vpop.f32.mrf.mxu0
      %v2208 = vadd.f32 %v2153, %v2207
      %v2209 = vpop.f32.mrf.mxu0
      %2210 = vdwg.mxu0
      %v2211 = vld [vmem:[%s834] sm:$0x1]
      %v2212 = vld [vmem:[%s837] sm:$0x1]
      %v2213 = vsel %vm902, %v2205, 0.0
      %2214 = vadd.xlane.f32.xlu0 %v2213
      %v2215 = vpop.xlane.xlu0 %2214
      %v2216 = vsel %vm902, %v2208, 0.0
      %2217 = vadd.xlane.f32.xlu0 %v2216
      %v2218 = vpop.xlane.xlu0 %2217
      %v2219 = vrcp.pop 32.0
      %v2220 = vmul.f32 %v2215, %v2219
      %v2221 = vmul.f32 %v2218, %v2219
      %v2222 = vsub.f32 %v2205, %v2220
      %v2223 = vsub.f32 %v2208, %v2221
      %v2224 = vmul.f32 %v2222, %v2222
      %v2225 = vmul.f32 %v2223, %v2223
      %v2226 = vsel %vm902, %v2224, 0.0
      %2227 = vadd.xlane.f32.xlu0 %v2226
      %v2228 = vpop.xlane.xlu0 %2227
      %v2229 = vsel %vm902, %v2225, 0.0
      %2230 = vadd.xlane.f32.xlu0 %v2229
      %v2231 = vpop.xlane.xlu0 %2230
      %v2232 = vmul.f32 %v2228, %v2219
      %v2233 = vmul.f32 %v2231, %v2219
      %v2234 = vadd.f32 %v2232, 1e-05
      %v2235 = vadd.f32 %v2233, 1e-05
      %v2236 = vrsqrt.pop %v2234
      %v2237 = vrsqrt.pop %v2235
      %v2238 = vmul.f32 %v2222, %v2236
      %v2239 = vmul.f32 %v2223, %v2237
      %v2241 = vlaneseq
      %v2242 = vshrl.u32 %v2241, 7
      %v2243 = vsub.s32 0, %v2242
      %v2244 = vrot.slane %v2211, %v2243
      %v2246 = vmul.f32 %v2238, %v2244
      %v2247 = vmul.f32 %v2239, %v2244
      %v2249 = vlaneseq
      %v2250 = vshrl.u32 %v2249, 7
      %v2251 = vsub.s32 0, %v2250
      %v2252 = vrot.slane %v2212, %v2251
      %v2254 = vadd.f32 %v2246, %v2252
      %v2255 = vadd.f32 %v2247, %v2252
      %v2256 = vadd.f32 %v1479, %v2254
      %v2257 = vadd.f32 %v1480, %v2255
      %v2258 = vpack.c.bf16 %v2257, %v2256
      %v2259 = vld [vmem:[%s842] sm:$0xf]
      %v2260 = vld [vmem:[%s842 + $0x4] sm:$0xf]
      %v2261 = vld [vmem:[%s842 + $0x8] sm:$0xf]
      %v2262 = vld [vmem:[%s842 + $0xc] sm:$0xf]
      %v2263 = vld [vmem:[%s845] sm:$0x1]
      %v2265 = vlaneseq
      %v2266 = vshrl.u32 %v2265, 7
      %v2267 = vsub.s32 0, %v2266
      %v2268 = vrot.slane %v2263, %v2267
      %v2274 = vunpack.c.l.b16 %v2259
      %v2275 = vunpack.c.l.b16 %v2260
      %v2276 = vunpack.c.l.b16 %v2261
      %v2277 = vunpack.c.l.b16 %v2262
      %v2278 = vpack.c.b16 %v2275, %v2274
      %v2279 = vpack.c.b16 %v2277, %v2276
      %v2283 = vsel %vm902, %v2258, 0
      %2285 = vmatprep.subr.bf16.mxu0 0
      %2286 = vmatpush1.bf16.msra.mxu0 0
      %2287 = vmatprep.subr.bf16.mxu0 0
      %2288 = vmatpush1.bf16.msra.mxu0 0
      %2289 = vmatprep.subr.bf16.mxu0 0
      %2290 = vmatpush1.bf16.msra.mxu0 0
      %2291 = vmatprep.subr.bf16.mxu0 0
      %2292 = vmatpush1.bf16.msra.mxu0 0
      %2293 = vmatprep.subr.bf16.mxu0 0
      %2294 = vmatpush1.bf16.msra.mxu0 0
      %2295 = vmatprep.subr.bf16.mxu0 0
      %2296 = vmatpush1.bf16.msra.mxu0 0
      %2297 = vmatprep.subr.bf16.mxu0 0
      %2298 = vmatpush1.bf16.msra.mxu0 %v2279
      %2299 = vmatprep.subr.bf16.mxu0 0
      %2300 = vmatpush1.bf16.msra.mxu0 %v2278
      %2301 = vmatprep.subr.bf16.mxu0 0
      %2302 = vmatpush2.bf16.msra.mxu0 0
      %2303 = vmatprep.subr.bf16.mxu0 0
      %2304 = vmatpush2.bf16.msra.mxu0 0
      %2305 = vmatprep.subr.bf16.mxu0 0
      %2306 = vmatpush2.bf16.msra.mxu0 0
      %2307 = vmatprep.subr.bf16.mxu0 0
      %2308 = vmatpush2.bf16.msra.mxu0 0
      %2309 = vmatprep.subr.bf16.mxu0 0
      %2310 = vmatpush2.bf16.msra.mxu0 0
      %2311 = vmatprep.subr.bf16.mxu0 0
      %2312 = vmatpush2.bf16.msra.mxu0 0
      %2313 = vmatprep.subr.bf16.mxu0 0
      %2314 = vmatpush2.bf16.msra.mxu0 0
      %2315 = vmatprep.subr.bf16.mxu0 0
      %2316 = vmatpush2.bf16.msra.mxu0 0
      %2317 = vmatprep.mubr.bf16.mxu0 0
      %2318 = vmatmul.mubr.bf16.gmra.mxu0 %v2283
      %v2319 = vpop.f32.mrf.mxu0
      %v2320 = vadd.f32 %v2268, %v2319
      %v2321 = vpop.f32.mrf.mxu0
      %v2322 = vpop.f32.mrf.mxu0
      %v2323 = vadd.f32 %v2268, %v2322
      %v2324 = vpop.f32.mrf.mxu0
      %2325 = vdwg.mxu0
      %v2326 = vmax.f32 %v2320, 0.0
      %v2327 = vmax.f32 %v2323, 0.0
      %v2328 = vpack.c.bf16 %v2327, %v2326
      %v2329 = vld [vmem:[%s850] sm:$0xf]
      %v2330 = vld [vmem:[%s850 + $0x4] sm:$0xf]
      %v2331 = vld [vmem:[%s850 + $0x8] sm:$0xf]
      %v2332 = vld [vmem:[%s850 + $0xc] sm:$0xf]
      %v2333 = vld [vmem:[%s850 + $0x10] sm:$0xf]
      %v2334 = vld [vmem:[%s850 + $0x14] sm:$0xf]
      %v2335 = vld [vmem:[%s850 + $0x18] sm:$0xf]
      %v2336 = vld [vmem:[%s850 + $0x1c] sm:$0xf]
      %v2337 = vld [vmem:[%s853] sm:$0x1]
      %v2339 = vlaneseq
      %v2340 = vshrl.u32 %v2339, 7
      %v2341 = vsub.s32 0, %v2340
      %v2342 = vrot.slane %v2337, %v2341
      %v2352 = vunpack.c.l.b16 %v2329
      %v2353 = vunpack.c.l.b16 %v2330
      %v2354 = vunpack.c.l.b16 %v2331
      %v2355 = vunpack.c.l.b16 %v2332
      %v2356 = vunpack.c.l.b16 %v2333
      %v2357 = vunpack.c.l.b16 %v2334
      %v2358 = vunpack.c.l.b16 %v2335
      %v2359 = vunpack.c.l.b16 %v2336
      %v2360 = vpack.c.b16 %v2353, %v2352
      %v2361 = vpack.c.b16 %v2355, %v2354
      %v2362 = vpack.c.b16 %v2357, %v2356
      %v2363 = vpack.c.b16 %v2359, %v2358
      %vm2368 = vcmask 523264
      %v2370 = vsel %vm2368, %v2328, 0
      %2372 = vmatprep.subr.bf16.mxu0 0
      %2373 = vmatpush1.bf16.msra.mxu0 0
      %2374 = vmatprep.subr.bf16.mxu0 0
      %2375 = vmatpush1.bf16.msra.mxu0 0
      %2376 = vmatprep.subr.bf16.mxu0 0
      %2377 = vmatpush1.bf16.msra.mxu0 0
      %2378 = vmatprep.subr.bf16.mxu0 0
      %2379 = vmatpush1.bf16.msra.mxu0 0
      %2380 = vmatprep.subr.bf16.mxu0 0
      %2381 = vmatpush1.bf16.msra.mxu0 %v2363
      %2382 = vmatprep.subr.bf16.mxu0 0
      %2383 = vmatpush1.bf16.msra.mxu0 %v2362
      %2384 = vmatprep.subr.bf16.mxu0 0
      %2385 = vmatpush1.bf16.msra.mxu0 %v2361
      %2386 = vmatprep.subr.bf16.mxu0 0
      %2387 = vmatpush1.bf16.msra.mxu0 %v2360
      %2388 = vmatprep.subr.bf16.mxu0 0
      %2389 = vmatpush2.bf16.msra.mxu0 0
      %2390 = vmatprep.subr.bf16.mxu0 0
      %2391 = vmatpush2.bf16.msra.mxu0 0
      %2392 = vmatprep.subr.bf16.mxu0 0
      %2393 = vmatpush2.bf16.msra.mxu0 0
      %2394 = vmatprep.subr.bf16.mxu0 0
      %2395 = vmatpush2.bf16.msra.mxu0 0
      %2396 = vmatprep.subr.bf16.mxu0 0
      %2397 = vmatpush2.bf16.msra.mxu0 0
      %2398 = vmatprep.subr.bf16.mxu0 0
      %2399 = vmatpush2.bf16.msra.mxu0 0
      %2400 = vmatprep.subr.bf16.mxu0 0
      %2401 = vmatpush2.bf16.msra.mxu0 0
      %2402 = vmatprep.subr.bf16.mxu0 0
      %2403 = vmatpush2.bf16.msra.mxu0 0
      %2404 = vmatprep.mubr.bf16.mxu0 0
      %2405 = vmatmul.mubr.bf16.gmra.mxu0 %v2370
      %v2406 = vpop.f32.mrf.mxu0
      %v2407 = vadd.f32 %v2342, %v2406
      %v2408 = vpop.f32.mrf.mxu0
      %v2409 = vpop.f32.mrf.mxu0
      %v2410 = vadd.f32 %v2342, %v2409
      %v2411 = vpop.f32.mrf.mxu0
      %2412 = vdwg.mxu0
      %v2413 = vld [vmem:[%s856] sm:$0x1]
      %v2414 = vld [vmem:[%s859] sm:$0x1]
      %v2415 = vsel %vm902, %v2407, 0.0
      %2416 = vadd.xlane.f32.xlu0 %v2415
      %v2417 = vpop.xlane.xlu0 %2416
      %v2418 = vsel %vm902, %v2410, 0.0
      %2419 = vadd.xlane.f32.xlu0 %v2418
      %v2420 = vpop.xlane.xlu0 %2419
      %v2421 = vmul.f32 %v2417, %v2219
      %v2422 = vmul.f32 %v2420, %v2219
      %v2423 = vsub.f32 %v2407, %v2421
      %v2424 = vsub.f32 %v2410, %v2422
      %v2425 = vmul.f32 %v2423, %v2423
      %v2426 = vmul.f32 %v2424, %v2424
      %v2427 = vsel %vm902, %v2425, 0.0
      %2428 = vadd.xlane.f32.xlu0 %v2427
      %v2429 = vpop.xlane.xlu0 %2428
      %v2430 = vsel %vm902, %v2426, 0.0
      %2431 = vadd.xlane.f32.xlu0 %v2430
      %v2432 = vpop.xlane.xlu0 %2431
      %v2433 = vmul.f32 %v2429, %v2219
      %v2434 = vmul.f32 %v2432, %v2219
      %v2435 = vadd.f32 %v2433, 1e-05
      %v2436 = vadd.f32 %v2434, 1e-05
      %v2437 = vrsqrt.pop %v2435
      %v2438 = vrsqrt.pop %v2436
      %v2439 = vmul.f32 %v2423, %v2437
      %v2440 = vmul.f32 %v2424, %v2438
      %v2442 = vlaneseq
      %v2443 = vshrl.u32 %v2442, 7
      %v2444 = vsub.s32 0, %v2443
      %v2445 = vrot.slane %v2413, %v2444
      %v2447 = vmul.f32 %v2439, %v2445
      %v2448 = vmul.f32 %v2440, %v2445
      %v2450 = vlaneseq
      %v2451 = vshrl.u32 %v2450, 7
      %v2452 = vsub.s32 0, %v2451
      %v2453 = vrot.slane %v2414, %v2452
      %v2455 = vadd.f32 %v2447, %v2453
      %v2456 = vadd.f32 %v2448, %v2453
      %2457 = vst.msk [vmem:[%s864] sm:$0xff] %vm902, %v2455
      %2458 = vst.msk [vmem:[%s864 + $0x8] sm:$0xff] %vm902, %v2456
      %p2459 = scmp.lt.s32.totalorder %s33, 1
      %s2460 = scalar_select %p2459, %s33, 1
      %s2461 = smul.addr %s2460, 2
      %s2462 = smul.addr %s2461, 8
      %s2463 = scalar_lea.vmem %s18, %s2462
      // Predicated region
      $region97: #{bottom_up_top_down_encoder.5} parent=91 // pred_check
        %p2464 = pneg %p527
      $region98: #{bottom_up_top_down_encoder.5} parent=91 // pred_check_branch
        %2466 = sbr.rel (%p2464) target = $region100
      $region99: #{bottom_up_top_down_encoder.5} parent=91 // pred_region
        _
      $region100: #{bottom_up_top_down_encoder.5} parent=91 // pred_fallthru
        _
    $region92: #{bottom_up_top_down_encoder.5} parent=5 // pred_fallthru
      _
    %p2467 = scmp.le.s32.totalorder 2, %s24
    // Predicated region
    $region101: #{bottom_up_top_down_encoder.5} parent=5 // pred_check
      %p2468 = pneg %p2467
    $region102: #{bottom_up_top_down_encoder.5} parent=5 // pred_check_branch
      %2470 = sbr.rel (%p2468) target = $region104
    $region103: #{bottom_up_top_down_encoder.5} parent=5 // pred_region
      %s2471 = ssub.s32 %s24, 2
      // Predicated region
      $region105: #{bottom_up_top_down_encoder.5} parent=103 // pred_check
        %p2472 = pneg %p533
      $region106: #{bottom_up_top_down_encoder.5} parent=103 // pred_check_branch
        %2474 = sbr.rel (%p2472) target = $region108
      $region107: #{bottom_up_top_down_encoder.5} parent=103 // pred_region
        %p2475 = scmp.lt.s32.totalorder %s35, 1
        %s2476 = scalar_select %p2475, %s35, 1
        %s2477 = smul.addr %s2476, 2
        %s2478 = smul.addr %s2477, 8
        %s2479 = scalar_lea.vmem %s18, %s2478
      $region108: #{bottom_up_top_down_encoder.5} parent=103 // pred_fallthru
        _
    $region104: #{bottom_up_top_down_encoder.5} parent=5 // pred_fallthru
      _
  $region6: #{bottom_up_top_down_encoder.5} parent=0 // loop_footer
    %s28 = sadd.s32 1, %s24
  $region7: #{bottom_up_top_down_encoder.5} parent=0 // loop_footer_branch
    %23 = sbr.rel target = $region3
  $region8: #{bottom_up_top_down_encoder.5} parent=0 // loop_exit
    _

</llo_original>
